<compile_context>
chip_gen: v7x
topology: tpu7x:2x2x1
jax: 0.10.0
libtpu: 0.0.40
codegen_flags: <defaults>
</compile_context>

<pallas_src>
import jax
import jax.numpy as jnp
from jax.experimental import pallas as pl
from jax.experimental.pallas import tpu as pltpu


# ----------------------------------------------------------------------------
# Kernel A: conv-as-matmul (lane-dense) + bias + ReLU + 2x2 max-pool.
# All 4 pool offsets are consumed inside one grid step.
# ----------------------------------------------------------------------------
def _conv_relu_pool_kernel(p_ref, w_ref, b_ref, o_ref):
    # p_ref: (4, 9, TR) im2col patches, one (9, TR) slab per pool offset
    # w_ref: (20, 9)    conv weight (out-channel x tap)
    # b_ref: (20, 1)    conv bias
    # o_ref: (20, TR)   pooled output, lane-dense (TR = tile of R = N*169)
    w = w_ref[...]
    b = b_ref[...]
    acc = None
    for k in range(4):  # static unroll: all pool offsets in a single step
        z = jnp.dot(w, p_ref[k], preferred_element_type=jnp.float32)
        z = jnp.maximum(z + b, 0.0)              # ReLU commutes with max-pool
        acc = z if acc is None else jnp.maximum(acc, z)
    o_ref[...] = acc


def conv_relu_pool(patches, w_conv, b_conv, *, row_tile=2048):
    # patches: (4, 9, R), w_conv: (20, 9), b_conv: (20, 1)  ->  (20, R)
    _, K, R = patches.shape
    C = w_conv.shape[0]
    tr = min(row_tile, R)
    rp = ((R + tr - 1) // tr) * tr
    if rp != R:
        patches = jnp.pad(patches, ((0, 0), (0, 0), (0, rp - R)))
    out = pl.pallas_call(
        _conv_relu_pool_kernel,
        out_shape=jax.ShapeDtypeStruct((C, rp), jnp.float32),
        grid=(rp // tr,),
        in_specs=[
            pl.BlockSpec((4, K, tr), lambda r: (0, 0, r)),
            pl.BlockSpec((C, K), lambda r: (0, 0)),      # weights stay resident
            pl.BlockSpec((C, 1), lambda r: (0, 0)),
        ],
        out_specs=pl.BlockSpec((C, tr), lambda r: (0, r)),
        compiler_params=pltpu.CompilerParams(
            dimension_semantics=("parallel",)),
    )(patches, w_conv, b_conv)
    return out[:, :R] if rp != R else out


# ----------------------------------------------------------------------------
# Kernel B: FC1 + ReLU + FC2 + Softmax (dim=1), fused, batch-tiled.
# Consumes the conv output directly in channel-major (20, N, 169) layout;
# the PyTorch flatten order lives in the FC1 weight layout (20, 169, H).
# ----------------------------------------------------------------------------
def _mlp_softmax_kernel(xc_ref, w1_ref, b1_ref, w2_ref, b2_ref, o_ref):
    # xc_ref: (20, TB, 169) pooled activations for a batch tile
    # w1_ref: (20, 169, H)  FC1 weight, reordered in glue
    # b1_ref: (1, H); w2_ref: (H, O); b2_ref: (1, O); o_ref: (TB, O)
    n_ch, tb, _ = xc_ref.shape
    hidden = w1_ref.shape[2]
    h = jnp.zeros((tb, hidden), jnp.float32)
    for c in range(n_ch):  # static unroll: per-channel partial FC1 matmuls
        h = h + jnp.dot(xc_ref[c], w1_ref[c],
                        preferred_element_type=jnp.float32)
    h = jnp.maximum(h + b1_ref[...], 0.0)
    y = jnp.dot(h, w2_ref[...], preferred_element_type=jnp.float32) + b2_ref[...]
    y = y - jnp.max(y, axis=1, keepdims=True)
    e = jnp.exp(y)
    o_ref[...] = e * pl.reciprocal(jnp.sum(e, axis=1, keepdims=True),
                                   approx=True)


def mlp_softmax(xc, w1r, b1, w2, b2, *, batch_tile=128):
    # xc: (20, N, 169) -> (N, O)
    C, N, P = xc.shape
    H = w1r.shape[2]
    O = w2.shape[1]
    tb = min(batch_tile, N)
    npad = ((N + tb - 1) // tb) * tb
    if npad != N:
        xc = jnp.pad(xc, ((0, 0), (0, npad - N), (0, 0)))
    out = pl.pallas_call(
        _mlp_softmax_kernel,
        out_shape=jax.ShapeDtypeStruct((npad, O), jnp.float32),
        grid=(npad // tb,),
        in_specs=[
            pl.BlockSpec((C, tb, P), lambda i: (0, i, 0)),
            pl.BlockSpec((C, P, H), lambda i: (0, 0, 0)),  # resident weights
            pl.BlockSpec((1, H), lambda i: (0, 0)),
            pl.BlockSpec((H, O), lambda i: (0, 0)),
            pl.BlockSpec((1, O), lambda i: (0, 0)),
        ],
        out_specs=pl.BlockSpec((tb, O), lambda i: (i, 0)),
        compiler_params=pltpu.CompilerParams(
            dimension_semantics=("parallel",)),
    )(xc, w1r, b1, w2, b2)
    return out[:N] if npad != N else out


# ----------------------------------------------------------------------------
# Glue: im2col fused with the 2x2/stride-2 pooling grid (data movement only).
# Lane-dense layout: (4 offsets, 9 taps, R = N*169), column = n*169 + i*13 + j.
# ----------------------------------------------------------------------------
def make_pool_patches(x):
    # x: (N, 28, 28) -> (4, 9, N*169)
    # offset (a,b) selects conv position (2i+a, 2j+b) within each pool window.
    N = x.shape[0]
    offsets = []
    for a in range(2):
        for b in range(2):
            taps = []
            for dy in range(3):
                for dx in range(3):
                    sub = x[:, a + dy:a + dy + 26:2, b + dx:b + dx + 26:2]
                    taps.append(sub.reshape(N * 13 * 13))
            offsets.append(jnp.stack(taps, axis=0))     # (9, N*169)
    return jnp.stack(offsets, axis=0)                   # (4, 9, N*169)


@jax.jit
def my_cnn_forward(x_nchw, params):
    # x_nchw: (N, 1, 28, 28) float32
    N = x_nchw.shape[0]
    x = x_nchw[:, 0]                                     # (N, 28, 28)

    patches = make_pool_patches(x)                       # (4, 9, N*169)
    pooled = conv_relu_pool(patches, params["w_conv"], params["b_conv"])
    # pooled: (20, N*169); free (bitcast) reshape to channel-major 3D layout.
    xc = pooled.reshape(20, N, 13 * 13)                  # (20, N, 169)

    return mlp_softmax(xc, params["w1r"], params["b1"],
                       params["w2"], params["b2"])


def init_params(key, hidden_size, output_size):
    k = jax.random.split(key, 6)
    conv_w = jax.random.normal(k[0], (20, 1, 3, 3), jnp.float32) * 0.1
    conv_b = jax.random.normal(k[1], (20,), jnp.float32) * 0.1
    fc1_w = jax.random.normal(k[2], (hidden_size, 3380), jnp.float32) * 0.02
    fc1_b = jax.random.normal(k[3], (hidden_size,), jnp.float32) * 0.02
    fc2_w = jax.random.normal(k[4], (output_size, hidden_size), jnp.float32) * 0.1
    fc2_b = jax.random.normal(k[5], (output_size,), jnp.float32) * 0.1
    return {
        # conv weight as (out_channel, tap) with tap = dy*3 + dx
        "w_conv": conv_w.reshape(20, 9),
        "b_conv": conv_b.reshape(20, 1),
        # FC1 weight absorbs the PyTorch NCHW flatten order:
        #   w1r[c, pos, h] = fc1_w[h, c*169 + pos]
        "w1r": fc1_w.reshape(hidden_size, 20, 13 * 13).transpose(1, 2, 0),
        "b1": fc1_b.reshape(1, hidden_size),
        # Linear: y = x @ W.T + b  ->  pass transposed weights
        "w2": fc2_w.T,                                   # (hidden, output)
        "b2": fc2_b.reshape(1, output_size),
    }


if __name__ == "__main__":
    hidden_size, output_size = 32, 10
    N = 2  # batch

    key = jax.random.PRNGKey(0)
    k_x, k_p = jax.random.split(key)
    # fc1 expects 3380 = 20*13*13 features => input spatial must be 28x28
    x = jax.random.normal(k_x, (N, 1, 28, 28), jnp.float32)
    params = init_params(k_p, hidden_size, output_size)

    out = jax.block_until_ready(my_cnn_forward(x, params))

    assert out.shape == (N, output_size)
    assert bool(jnp.all(jnp.isfinite(out)))
    print("KERNEL_OK")
</pallas_src>

<mosaic_0001>
module attributes {stable_mosaic.version = 11 : i64} {
  func.func @_conv_relu_pool_kernel(%arg0: i32, %arg1: memref<4x9x338xf32, #tpu.memory_space<vmem>>, %arg2: memref<20x9xf32, #tpu.memory_space<vmem>>, %arg3: memref<20x1xf32, #tpu.memory_space<vmem>>, %arg4: memref<20x338xf32, #tpu.memory_space<vmem>>) attributes {dimension_semantics = [#tpu.dimension_semantics<parallel>], iteration_bounds = array<i64: 1>, scalar_prefetch = 0 : i64, scratch_operands = 0 : i64, tpu.core_type = #tpu.core_type<tc>, window_params = [{transform_indices = @transform_0, window_bounds = array<i64: 4, 9, 338>}, {pipeline_mode = #tpu.pipeline_mode<synchronous>, transform_indices = @transform_1, window_bounds = array<i64: 20, 9>}, {pipeline_mode = #tpu.pipeline_mode<synchronous>, transform_indices = @transform_2, window_bounds = array<i64: 20, 1>}, {transform_indices = @transform_3, window_bounds = array<i64: 20, 338>}]} {
    %c0 = arith.constant 0 : index
    %c0_0 = arith.constant 0 : index
    %0 = vector.load %arg2[%c0, %c0_0] : memref<20x9xf32, #tpu.memory_space<vmem>>, vector<20x9xf32>
    %c0_1 = arith.constant 0 : index
    %c0_2 = arith.constant 0 : index
    %1 = vector.load %arg3[%c0_1, %c0_2] : memref<20x1xf32, #tpu.memory_space<vmem>>, vector<20x1xf32>
    %c0_3 = arith.constant 0 : index
    %c0_4 = arith.constant 0 : index
    %c0_5 = arith.constant 0 : index
    %2 = vector.load %arg1[%c0_3, %c0_4, %c0_5] : memref<4x9x338xf32, #tpu.memory_space<vmem>>, vector<1x9x338xf32>
    %3 = vector.shape_cast %2 : vector<1x9x338xf32> to vector<9x338xf32>
    %cst = arith.constant dense<0.000000e+00> : vector<20x338xf32>
    %4 = tpu.matmul %0, %3, %cst {dimension_numbers = #tpu.dot_dimension_numbers<[1], [0], [0], [1], [0, 0, 1, 1], [], []>} : vector<20x9xf32>, vector<9x338xf32>, vector<20x338xf32> -> vector<20x338xf32>
    %5 = vector.broadcast %1 : vector<20x1xf32> to vector<20x338xf32>
    %6 = arith.addf %4, %5 : vector<20x338xf32>
    %cst_6 = arith.constant 0.000000e+00 : f32
    %7 = vector.broadcast %cst_6 : f32 to vector<20x338xf32>
    %8 = arith.maximumf %6, %7 : vector<20x338xf32>
    %c1 = arith.constant 1 : index
    %c0_7 = arith.constant 0 : index
    %c0_8 = arith.constant 0 : index
    %9 = vector.load %arg1[%c1, %c0_7, %c0_8] : memref<4x9x338xf32, #tpu.memory_space<vmem>>, vector<1x9x338xf32>
    %10 = vector.shape_cast %9 : vector<1x9x338xf32> to vector<9x338xf32>
    %cst_9 = arith.constant dense<0.000000e+00> : vector<20x338xf32>
    %11 = tpu.matmul %0, %10, %cst_9 {dimension_numbers = #tpu.dot_dimension_numbers<[1], [0], [0], [1], [0, 0, 1, 1], [], []>} : vector<20x9xf32>, vector<9x338xf32>, vector<20x338xf32> -> vector<20x338xf32>
    %12 = vector.broadcast %1 : vector<20x1xf32> to vector<20x338xf32>
    %13 = arith.addf %11, %12 : vector<20x338xf32>
    %cst_10 = arith.constant 0.000000e+00 : f32
    %14 = vector.broadcast %cst_10 : f32 to vector<20x338xf32>
    %15 = arith.maximumf %13, %14 : vector<20x338xf32>
    %16 = arith.maximumf %8, %15 : vector<20x338xf32>
    %c2 = arith.constant 2 : index
    %c0_11 = arith.constant 0 : index
    %c0_12 = arith.constant 0 : index
    %17 = vector.load %arg1[%c2, %c0_11, %c0_12] : memref<4x9x338xf32, #tpu.memory_space<vmem>>, vector<1x9x338xf32>
    %18 = vector.shape_cast %17 : vector<1x9x338xf32> to vector<9x338xf32>
    %cst_13 = arith.constant dense<0.000000e+00> : vector<20x338xf32>
    %19 = tpu.matmul %0, %18, %cst_13 {dimension_numbers = #tpu.dot_dimension_numbers<[1], [0], [0], [1], [0, 0, 1, 1], [], []>} : vector<20x9xf32>, vector<9x338xf32>, vector<20x338xf32> -> vector<20x338xf32>
    %20 = vector.broadcast %1 : vector<20x1xf32> to vector<20x338xf32>
    %21 = arith.addf %19, %20 : vector<20x338xf32>
    %cst_14 = arith.constant 0.000000e+00 : f32
    %22 = vector.broadcast %cst_14 : f32 to vector<20x338xf32>
    %23 = arith.maximumf %21, %22 : vector<20x338xf32>
    %24 = arith.maximumf %16, %23 : vector<20x338xf32>
    %c3 = arith.constant 3 : index
    %c0_15 = arith.constant 0 : index
    %c0_16 = arith.constant 0 : index
    %25 = vector.load %arg1[%c3, %c0_15, %c0_16] : memref<4x9x338xf32, #tpu.memory_space<vmem>>, vector<1x9x338xf32>
    %26 = vector.shape_cast %25 : vector<1x9x338xf32> to vector<9x338xf32>
    %cst_17 = arith.constant dense<0.000000e+00> : vector<20x338xf32>
    %27 = tpu.matmul %0, %26, %cst_17 {dimension_numbers = #tpu.dot_dimension_numbers<[1], [0], [0], [1], [0, 0, 1, 1], [], []>} : vector<20x9xf32>, vector<9x338xf32>, vector<20x338xf32> -> vector<20x338xf32>
    %28 = vector.broadcast %1 : vector<20x1xf32> to vector<20x338xf32>
    %29 = arith.addf %27, %28 : vector<20x338xf32>
    %cst_18 = arith.constant 0.000000e+00 : f32
    %30 = vector.broadcast %cst_18 : f32 to vector<20x338xf32>
    %31 = arith.maximumf %29, %30 : vector<20x338xf32>
    %32 = arith.maximumf %24, %31 : vector<20x338xf32>
    %c0_19 = arith.constant 0 : index
    %c0_20 = arith.constant 0 : index
    %33 = vector.load %arg4[%c0_19, %c0_20] : memref<20x338xf32, #tpu.memory_space<vmem>>, vector<20x338xf32>
    tpu.vector_store %arg4[%c0_19, %c0_20], %32 {strides = array<i32>} : memref<20x338xf32, #tpu.memory_space<vmem>>, vector<20x338xf32>,
    return
  }
  func.func @transform_0(%arg0: i32) -> (i32, i32, i32) {
    %c0_i32 = arith.constant 0 : i32
    %c0_i32_0 = arith.constant 0 : i32
    %c0_i32_1 = arith.constant 0 : i32
    return %c0_i32, %c0_i32_0, %arg0 : i32, i32, i32
  }
  func.func @transform_1(%arg0: i32) -> (i32, i32) {
    %c0_i32 = arith.constant 0 : i32
    %c0_i32_0 = arith.constant 0 : i32
    %c0_i32_1 = arith.constant 0 : i32
    return %c0_i32, %c0_i32_0 : i32, i32
  }
  func.func @transform_2(%arg0: i32) -> (i32, i32) {
    %c0_i32 = arith.constant 0 : i32
    %c0_i32_0 = arith.constant 0 : i32
    %c0_i32_1 = arith.constant 0 : i32
    return %c0_i32, %c0_i32_0 : i32, i32
  }
  func.func @transform_3(%arg0: i32) -> (i32, i32) {
    %c0_i32 = arith.constant 0 : i32
    %c0_i32_0 = arith.constant 0 : i32
    return %c0_i32, %arg0 : i32, i32
  }
}

module attributes {stable_mosaic.version = 11 : i64} {
  func.func @_mlp_softmax_kernel(%arg0: i32, %arg1: memref<20x2x169xf32, #tpu.memory_space<vmem>>, %arg2: memref<20x169x32xf32, #tpu.memory_space<vmem>>, %arg3: memref<1x32xf32, #tpu.memory_space<vmem>>, %arg4: memref<32x10xf32, #tpu.memory_space<vmem>>, %arg5: memref<1x10xf32, #tpu.memory_space<vmem>>, %arg6: memref<2x10xf32, #tpu.memory_space<vmem>>) attributes {dimension_semantics = [#tpu.dimension_semantics<parallel>], iteration_bounds = array<i64: 1>, scalar_prefetch = 0 : i64, scratch_operands = 0 : i64, tpu.core_type = #tpu.core_type<tc>, window_params = [{transform_indices = @transform_0, window_bounds = array<i64: 20, 2, 169>}, {pipeline_mode = #tpu.pipeline_mode<synchronous>, transform_indices = @transform_1, window_bounds = array<i64: 20, 169, 32>}, {pipeline_mode = #tpu.pipeline_mode<synchronous>, transform_indices = @transform_2, window_bounds = array<i64: 1, 32>}, {pipeline_mode = #tpu.pipeline_mode<synchronous>, transform_indices = @transform_3, window_bounds = array<i64: 32, 10>}, {pipeline_mode = #tpu.pipeline_mode<synchronous>, transform_indices = @transform_4, window_bounds = array<i64: 1, 10>}, {transform_indices = @transform_5, window_bounds = array<i64: 2, 10>}]} {
    %cst = arith.constant 0.000000e+00 : f32
    %0 = vector.broadcast %cst : f32 to vector<2x32xf32>
    %c0 = arith.constant 0 : index
    %c0_0 = arith.constant 0 : index
    %c0_1 = arith.constant 0 : index
    %1 = vector.load %arg1[%c0, %c0_0, %c0_1] : memref<20x2x169xf32, #tpu.memory_space<vmem>>, vector<1x2x169xf32>
    %2 = vector.shape_cast %1 : vector<1x2x169xf32> to vector<2x169xf32>
    %c0_2 = arith.constant 0 : index
    %c0_3 = arith.constant 0 : index
    %c0_4 = arith.constant 0 : index
    %3 = vector.load %arg2[%c0_2, %c0_3, %c0_4] : memref<20x169x32xf32, #tpu.memory_space<vmem>>, vector<1x169x32xf32>
    %4 = vector.shape_cast %3 : vector<1x169x32xf32> to vector<169x32xf32>
    %cst_5 = arith.constant dense<0.000000e+00> : vector<2x32xf32>
    %5 = tpu.matmul %2, %4, %cst_5 {dimension_numbers = #tpu.dot_dimension_numbers<[1], [0], [0], [1], [0, 0, 1, 1], [], []>} : vector<2x169xf32>, vector<169x32xf32>, vector<2x32xf32> -> vector<2x32xf32>
    %6 = arith.addf %0, %5 : vector<2x32xf32>
    %c1 = arith.constant 1 : index
    %c0_6 = arith.constant 0 : index
    %c0_7 = arith.constant 0 : index
    %7 = vector.load %arg1[%c1, %c0_6, %c0_7] : memref<20x2x169xf32, #tpu.memory_space<vmem>>, vector<1x2x169xf32>
    %8 = vector.shape_cast %7 : vector<1x2x169xf32> to vector<2x169xf32>
    %c1_8 = arith.constant 1 : index
    %c0_9 = arith.constant 0 : index
    %c0_10 = arith.constant 0 : index
    %9 = vector.load %arg2[%c1_8, %c0_9, %c0_10] : memref<20x169x32xf32, #tpu.memory_space<vmem>>, vector<1x169x32xf32>
    %10 = vector.shape_cast %9 : vector<1x169x32xf32> to vector<169x32xf32>
    %cst_11 = arith.constant dense<0.000000e+00> : vector<2x32xf32>
    %11 = tpu.matmul %8, %10, %cst_11 {dimension_numbers = #tpu.dot_dimension_numbers<[1], [0], [0], [1], [0, 0, 1, 1], [], []>} : vector<2x169xf32>, vector<169x32xf32>, vector<2x32xf32> -> vector<2x32xf32>
    %12 = arith.addf %6, %11 : vector<2x32xf32>
    %c2 = arith.constant 2 : index
    %c0_12 = arith.constant 0 : index
    %c0_13 = arith.constant 0 : index
    %13 = vector.load %arg1[%c2, %c0_12, %c0_13] : memref<20x2x169xf32, #tpu.memory_space<vmem>>, vector<1x2x169xf32>
    %14 = vector.shape_cast %13 : vector<1x2x169xf32> to vector<2x169xf32>
    %c2_14 = arith.constant 2 : index
    %c0_15 = arith.constant 0 : index
    %c0_16 = arith.constant 0 : index
    %15 = vector.load %arg2[%c2_14, %c0_15, %c0_16] : memref<20x169x32xf32, #tpu.memory_space<vmem>>, vector<1x169x32xf32>
    %16 = vector.shape_cast %15 : vector<1x169x32xf32> to vector<169x32xf32>
    %cst_17 = arith.constant dense<0.000000e+00> : vector<2x32xf32>
    %17 = tpu.matmul %14, %16, %cst_17 {dimension_numbers = #tpu.dot_dimension_numbers<[1], [0], [0], [1], [0, 0, 1, 1], [], []>} : vector<2x169xf32>, vector<169x32xf32>, vector<2x32xf32> -> vector<2x32xf32>
    %18 = arith.addf %12, %17 : vector<2x32xf32>
    %c3 = arith.constant 3 : index
    %c0_18 = arith.constant 0 : index
    %c0_19 = arith.constant 0 : index
    %19 = vector.load %arg1[%c3, %c0_18, %c0_19] : memref<20x2x169xf32, #tpu.memory_space<vmem>>, vector<1x2x169xf32>
    %20 = vector.shape_cast %19 : vector<1x2x169xf32> to vector<2x169xf32>
    %c3_20 = arith.constant 3 : index
    %c0_21 = arith.constant 0 : index
    %c0_22 = arith.constant 0 : index
    %21 = vector.load %arg2[%c3_20, %c0_21, %c0_22] : memref<20x169x32xf32, #tpu.memory_space<vmem>>, vector<1x169x32xf32>
    %22 = vector.shape_cast %21 : vector<1x169x32xf32> to vector<169x32xf32>
    %cst_23 = arith.constant dense<0.000000e+00> : vector<2x32xf32>
    %23 = tpu.matmul %20, %22, %cst_23 {dimension_numbers = #tpu.dot_dimension_numbers<[1], [0], [0], [1], [0, 0, 1, 1], [], []>} : vector<2x169xf32>, vector<169x32xf32>, vector<2x32xf32> -> vector<2x32xf32>
    %24 = arith.addf %18, %23 : vector<2x32xf32>
    %c4 = arith.constant 4 : index
    %c0_24 = arith.constant 0 : index
    %c0_25 = arith.constant 0 : index
    %25 = vector.load %arg1[%c4, %c0_24, %c0_25] : memref<20x2x169xf32, #tpu.memory_space<vmem>>, vector<1x2x169xf32>
    %26 = vector.shape_cast %25 : vector<1x2x169xf32> to vector<2x169xf32>
    %c4_26 = arith.constant 4 : index
    %c0_27 = arith.constant 0 : index
    %c0_28 = arith.constant 0 : index
    %27 = vector.load %arg2[%c4_26, %c0_27, %c0_28] : memref<20x169x32xf32, #tpu.memory_space<vmem>>, vector<1x169x32xf32>
    %28 = vector.shape_cast %27 : vector<1x169x32xf32> to vector<169x32xf32>
    %cst_29 = arith.constant dense<0.000000e+00> : vector<2x32xf32>
    %29 = tpu.matmul %26, %28, %cst_29 {dimension_numbers = #tpu.dot_dimension_numbers<[1], [0], [0], [1], [0, 0, 1, 1], [], []>} : vector<2x169xf32>, vector<169x32xf32>, vector<2x32xf32> -> vector<2x32xf32>
    %30 = arith.addf %24, %29 : vector<2x32xf32>
    %c5 = arith.constant 5 : index
    %c0_30 = arith.constant 0 : index
    %c0_31 = arith.constant 0 : index
    %31 = vector.load %arg1[%c5, %c0_30, %c0_31] : memref<20x2x169xf32, #tpu.memory_space<vmem>>, vector<1x2x169xf32>
    %32 = vector.shape_cast %31 : vector<1x2x169xf32> to vector<2x169xf32>
    %c5_32 = arith.constant 5 : index
    %c0_33 = arith.constant 0 : index
    %c0_34 = arith.constant 0 : index
    %33 = vector.load %arg2[%c5_32, %c0_33, %c0_34] : memref<20x169x32xf32, #tpu.memory_space<vmem>>, vector<1x169x32xf32>
    %34 = vector.shape_cast %33 : vector<1x169x32xf32> to vector<169x32xf32>
    %cst_35 = arith.constant dense<0.000000e+00> : vector<2x32xf32>
    %35 = tpu.matmul %32, %34, %cst_35 {dimension_numbers = #tpu.dot_dimension_numbers<[1], [0], [0], [1], [0, 0, 1, 1], [], []>} : vector<2x169xf32>, vector<169x32xf32>, vector<2x32xf32> -> vector<2x32xf32>
    %36 = arith.addf %30, %35 : vector<2x32xf32>
    %c6 = arith.constant 6 : index
    %c0_36 = arith.constant 0 : index
    %c0_37 = arith.constant 0 : index
    %37 = vector.load %arg1[%c6, %c0_36, %c0_37] : memref<20x2x169xf32, #tpu.memory_space<vmem>>, vector<1x2x169xf32>
    %38 = vector.shape_cast %37 : vector<1x2x169xf32> to vector<2x169xf32>
    %c6_38 = arith.constant 6 : index
    %c0_39 = arith.constant 0 : index
    %c0_40 = arith.constant 0 : index
    %39 = vector.load %arg2[%c6_38, %c0_39, %c0_40] : memref<20x169x32xf32, #tpu.memory_space<vmem>>, vector<1x169x32xf32>
    %40 = vector.shape_cast %39 : vector<1x169x32xf32> to vector<169x32xf32>
    %cst_41 = arith.constant dense<0.000000e+00> : vector<2x32xf32>
    %41 = tpu.matmul %38, %40, %cst_41 {dimension_numbers = #tpu.dot_dimension_numbers<[1], [0], [0], [1], [0, 0, 1, 1], [], []>} : vector<2x169xf32>, vector<169x32xf32>, vector<2x32xf32> -> vector<2x32xf32>
    %42 = arith.addf %36, %41 : vector<2x32xf32>
    %c7 = arith.constant 7 : index
    %c0_42 = arith.constant 0 : index
    %c0_43 = arith.constant 0 : index
    %43 = vector.load %arg1[%c7, %c0_42, %c0_43] : memref<20x2x169xf32, #tpu.memory_space<vmem>>, vector<1x2x169xf32>
    %44 = vector.shape_cast %43 : vector<1x2x169xf32> to vector<2x169xf32>
    %c7_44 = arith.constant 7 : index
    %c0_45 = arith.constant 0 : index
    %c0_46 = arith.constant 0 : index
    %45 = vector.load %arg2[%c7_44, %c0_45, %c0_46] : memref<20x169x32xf32, #tpu.memory_space<vmem>>, vector<1x169x32xf32>
    %46 = vector.shape_cast %45 : vector<1x169x32xf32> to vector<169x32xf32>
    %cst_47 = arith.constant dense<0.000000e+00> : vector<2x32xf32>
    %47 = tpu.matmul %44, %46, %cst_47 {dimension_numbers = #tpu.dot_dimension_numbers<[1], [0], [0], [1], [0, 0, 1, 1], [], []>} : vector<2x169xf32>, vector<169x32xf32>, vector<2x32xf32> -> vector<2x32xf32>
    %48 = arith.addf %42, %47 : vector<2x32xf32>
    %c8 = arith.constant 8 : index
    %c0_48 = arith.constant 0 : index
    %c0_49 = arith.constant 0 : index
    %49 = vector.load %arg1[%c8, %c0_48, %c0_49] : memref<20x2x169xf32, #tpu.memory_space<vmem>>, vector<1x2x169xf32>
    %50 = vector.shape_cast %49 : vector<1x2x169xf32> to vector<2x169xf32>
    %c8_50 = arith.constant 8 : index
    %c0_51 = arith.constant 0 : index
    %c0_52 = arith.constant 0 : index
    %51 = vector.load %arg2[%c8_50, %c0_51, %c0_52] : memref<20x169x32xf32, #tpu.memory_space<vmem>>, vector<1x169x32xf32>
    %52 = vector.shape_cast %51 : vector<1x169x32xf32> to vector<169x32xf32>
    %cst_53 = arith.constant dense<0.000000e+00> : vector<2x32xf32>
    %53 = tpu.matmul %50, %52, %cst_53 {dimension_numbers = #tpu.dot_dimension_numbers<[1], [0], [0], [1], [0, 0, 1, 1], [], []>} : vector<2x169xf32>, vector<169x32xf32>, vector<2x32xf32> -> vector<2x32xf32>
    %54 = arith.addf %48, %53 : vector<2x32xf32>
    %c9 = arith.constant 9 : index
    %c0_54 = arith.constant 0 : index
    %c0_55 = arith.constant 0 : index
    %55 = vector.load %arg1[%c9, %c0_54, %c0_55] : memref<20x2x169xf32, #tpu.memory_space<vmem>>, vector<1x2x169xf32>
    %56 = vector.shape_cast %55 : vector<1x2x169xf32> to vector<2x169xf32>
    %c9_56 = arith.constant 9 : index
    %c0_57 = arith.constant 0 : index
    %c0_58 = arith.constant 0 : index
    %57 = vector.load %arg2[%c9_56, %c0_57, %c0_58] : memref<20x169x32xf32, #tpu.memory_space<vmem>>, vector<1x169x32xf32>
    %58 = vector.shape_cast %57 : vector<1x169x32xf32> to vector<169x32xf32>
    %cst_59 = arith.constant dense<0.000000e+00> : vector<2x32xf32>
    %59 = tpu.matmul %56, %58, %cst_59 {dimension_numbers = #tpu.dot_dimension_numbers<[1], [0], [0], [1], [0, 0, 1, 1], [], []>} : vector<2x169xf32>, vector<169x32xf32>, vector<2x32xf32> -> vector<2x32xf32>
    %60 = arith.addf %54, %59 : vector<2x32xf32>
    %c10 = arith.constant 10 : index
    %c0_60 = arith.constant 0 : index
    %c0_61 = arith.constant 0 : index
    %61 = vector.load %arg1[%c10, %c0_60, %c0_61] : memref<20x2x169xf32, #tpu.memory_space<vmem>>, vector<1x2x169xf32>
    %62 = vector.shape_cast %61 : vector<1x2x169xf32> to vector<2x169xf32>
    %c10_62 = arith.constant 10 : index
    %c0_63 = arith.constant 0 : index
    %c0_64 = arith.constant 0 : index
    %63 = vector.load %arg2[%c10_62, %c0_63, %c0_64] : memref<20x169x32xf32, #tpu.memory_space<vmem>>, vector<1x169x32xf32>
    %64 = vector.shape_cast %63 : vector<1x169x32xf32> to vector<169x32xf32>
    %cst_65 = arith.constant dense<0.000000e+00> : vector<2x32xf32>
    %65 = tpu.matmul %62, %64, %cst_65 {dimension_numbers = #tpu.dot_dimension_numbers<[1], [0], [0], [1], [0, 0, 1, 1], [], []>} : vector<2x169xf32>, vector<169x32xf32>, vector<2x32xf32> -> vector<2x32xf32>
    %66 = arith.addf %60, %65 : vector<2x32xf32>
    %c11 = arith.constant 11 : index
    %c0_66 = arith.constant 0 : index
    %c0_67 = arith.constant 0 : index
    %67 = vector.load %arg1[%c11, %c0_66, %c0_67] : memref<20x2x169xf32, #tpu.memory_space<vmem>>, vector<1x2x169xf32>
    %68 = vector.shape_cast %67 : vector<1x2x169xf32> to vector<2x169xf32>
    %c11_68 = arith.constant 11 : index
    %c0_69 = arith.constant 0 : index
    %c0_70 = arith.constant 0 : index
    %69 = vector.load %arg2[%c11_68, %c0_69, %c0_70] : memref<20x169x32xf32, #tpu.memory_space<vmem>>, vector<1x169x32xf32>
    %70 = vector.shape_cast %69 : vector<1x169x32xf32> to vector<169x32xf32>
    %cst_71 = arith.constant dense<0.000000e+00> : vector<2x32xf32>
    %71 = tpu.matmul %68, %70, %cst_71 {dimension_numbers = #tpu.dot_dimension_numbers<[1], [0], [0], [1], [0, 0, 1, 1], [], []>} : vector<2x169xf32>, vector<169x32xf32>, vector<2x32xf32> -> vector<2x32xf32>
    %72 = arith.addf %66, %71 : vector<2x32xf32>
    %c12 = arith.constant 12 : index
    %c0_72 = arith.constant 0 : index
    %c0_73 = arith.constant 0 : index
    %73 = vector.load %arg1[%c12, %c0_72, %c0_73] : memref<20x2x169xf32, #tpu.memory_space<vmem>>, vector<1x2x169xf32>
    %74 = vector.shape_cast %73 : vector<1x2x169xf32> to vector<2x169xf32>
    %c12_74 = arith.constant 12 : index
    %c0_75 = arith.constant 0 : index
    %c0_76 = arith.constant 0 : index
    %75 = vector.load %arg2[%c12_74, %c0_75, %c0_76] : memref<20x169x32xf32, #tpu.memory_space<vmem>>, vector<1x169x32xf32>
    %76 = vector.shape_cast %75 : vector<1x169x32xf32> to vector<169x32xf32>
    %cst_77 = arith.constant dense<0.000000e+00> : vector<2x32xf32>
    %77 = tpu.matmul %74, %76, %cst_77 {dimension_numbers = #tpu.dot_dimension_numbers<[1], [0], [0], [1], [0, 0, 1, 1], [], []>} : vector<2x169xf32>, vector<169x32xf32>, vector<2x32xf32> -> vector<2x32xf32>
    %78 = arith.addf %72, %77 : vector<2x32xf32>
    %c13 = arith.constant 13 : index
    %c0_78 = arith.constant 0 : index
    %c0_79 = arith.constant 0 : index
    %79 = vector.load %arg1[%c13, %c0_78, %c0_79] : memref<20x2x169xf32, #tpu.memory_space<vmem>>, vector<1x2x169xf32>
    %80 = vector.shape_cast %79 : vector<1x2x169xf32> to vector<2x169xf32>
    %c13_80 = arith.constant 13 : index
    %c0_81 = arith.constant 0 : index
    %c0_82 = arith.constant 0 : index
    %81 = vector.load %arg2[%c13_80, %c0_81, %c0_82] : memref<20x169x32xf32, #tpu.memory_space<vmem>>, vector<1x169x32xf32>
    %82 = vector.shape_cast %81 : vector<1x169x32xf32> to vector<169x32xf32>
    %cst_83 = arith.constant dense<0.000000e+00> : vector<2x32xf32>
    %83 = tpu.matmul %80, %82, %cst_83 {dimension_numbers = #tpu.dot_dimension_numbers<[1], [0], [0], [1], [0, 0, 1, 1], [], []>} : vector<2x169xf32>, vector<169x32xf32>, vector<2x32xf32> -> vector<2x32xf32>
    %84 = arith.addf %78, %83 : vector<2x32xf32>
    %c14 = arith.constant 14 : index
    %c0_84 = arith.constant 0 : index
    %c0_85 = arith.constant 0 : index
    %85 = vector.load %arg1[%c14, %c0_84, %c0_85] : memref<20x2x169xf32, #tpu.memory_space<vmem>>, vector<1x2x169xf32>
    %86 = vector.shape_cast %85 : vector<1x2x169xf32> to vector<2x169xf32>
    %c14_86 = arith.constant 14 : index
    %c0_87 = arith.constant 0 : index
    %c0_88 = arith.constant 0 : index
    %87 = vector.load %arg2[%c14_86, %c0_87, %c0_88] : memref<20x169x32xf32, #tpu.memory_space<vmem>>, vector<1x169x32xf32>
    %88 = vector.shape_cast %87 : vector<1x169x32xf32> to vector<169x32xf32>
    %cst_89 = arith.constant dense<0.000000e+00> : vector<2x32xf32>
    %89 = tpu.matmul %86, %88, %cst_89 {dimension_numbers = #tpu.dot_dimension_numbers<[1], [0], [0], [1], [0, 0, 1, 1], [], []>} : vector<2x169xf32>, vector<169x32xf32>, vector<2x32xf32> -> vector<2x32xf32>
    %90 = arith.addf %84, %89 : vector<2x32xf32>
    %c15 = arith.constant 15 : index
    %c0_90 = arith.constant 0 : index
    %c0_91 = arith.constant 0 : index
    %91 = vector.load %arg1[%c15, %c0_90, %c0_91] : memref<20x2x169xf32, #tpu.memory_space<vmem>>, vector<1x2x169xf32>
    %92 = vector.shape_cast %91 : vector<1x2x169xf32> to vector<2x169xf32>
    %c15_92 = arith.constant 15 : index
    %c0_93 = arith.constant 0 : index
    %c0_94 = arith.constant 0 : index
    %93 = vector.load %arg2[%c15_92, %c0_93, %c0_94] : memref<20x169x32xf32, #tpu.memory_space<vmem>>, vector<1x169x32xf32>
    %94 = vector.shape_cast %93 : vector<1x169x32xf32> to vector<169x32xf32>
    %cst_95 = arith.constant dense<0.000000e+00> : vector<2x32xf32>
    %95 = tpu.matmul %92, %94, %cst_95 {dimension_numbers = #tpu.dot_dimension_numbers<[1], [0], [0], [1], [0, 0, 1, 1], [], []>} : vector<2x169xf32>, vector<169x32xf32>, vector<2x32xf32> -> vector<2x32xf32>
    %96 = arith.addf %90, %95 : vector<2x32xf32>
    %c16 = arith.constant 16 : index
    %c0_96 = arith.constant 0 : index
    %c0_97 = arith.constant 0 : index
    %97 = vector.load %arg1[%c16, %c0_96, %c0_97] : memref<20x2x169xf32, #tpu.memory_space<vmem>>, vector<1x2x169xf32>
    %98 = vector.shape_cast %97 : vector<1x2x169xf32> to vector<2x169xf32>
    %c16_98 = arith.constant 16 : index
    %c0_99 = arith.constant 0 : index
    %c0_100 = arith.constant 0 : index
    %99 = vector.load %arg2[%c16_98, %c0_99, %c0_100] : memref<20x169x32xf32, #tpu.memory_space<vmem>>, vector<1x169x32xf32>
    %100 = vector.shape_cast %99 : vector<1x169x32xf32> to vector<169x32xf32>
    %cst_101 = arith.constant dense<0.000000e+00> : vector<2x32xf32>
    %101 = tpu.matmul %98, %100, %cst_101 {dimension_numbers = #tpu.dot_dimension_numbers<[1], [0], [0], [1], [0, 0, 1, 1], [], []>} : vector<2x169xf32>, vector<169x32xf32>, vector<2x32xf32> -> vector<2x32xf32>
    %102 = arith.addf %96, %101 : vector<2x32xf32>
    %c17 = arith.constant 17 : index
    %c0_102 = arith.constant 0 : index
    %c0_103 = arith.constant 0 : index
    %103 = vector.load %arg1[%c17, %c0_102, %c0_103] : memref<20x2x169xf32, #tpu.memory_space<vmem>>, vector<1x2x169xf32>
    %104 = vector.shape_cast %103 : vector<1x2x169xf32> to vector<2x169xf32>
    %c17_104 = arith.constant 17 : index
    %c0_105 = arith.constant 0 : index
    %c0_106 = arith.constant 0 : index
    %105 = vector.load %arg2[%c17_104, %c0_105, %c0_106] : memref<20x169x32xf32, #tpu.memory_space<vmem>>, vector<1x169x32xf32>
    %106 = vector.shape_cast %105 : vector<1x169x32xf32> to vector<169x32xf32>
    %cst_107 = arith.constant dense<0.000000e+00> : vector<2x32xf32>
    %107 = tpu.matmul %104, %106, %cst_107 {dimension_numbers = #tpu.dot_dimension_numbers<[1], [0], [0], [1], [0, 0, 1, 1], [], []>} : vector<2x169xf32>, vector<169x32xf32>, vector<2x32xf32> -> vector<2x32xf32>
    %108 = arith.addf %102, %107 : vector<2x32xf32>
    %c18 = arith.constant 18 : index
    %c0_108 = arith.constant 0 : index
    %c0_109 = arith.constant 0 : index
    %109 = vector.load %arg1[%c18, %c0_108, %c0_109] : memref<20x2x169xf32, #tpu.memory_space<vmem>>, vector<1x2x169xf32>
    %110 = vector.shape_cast %109 : vector<1x2x169xf32> to vector<2x169xf32>
    %c18_110 = arith.constant 18 : index
    %c0_111 = arith.constant 0 : index
    %c0_112 = arith.constant 0 : index
    %111 = vector.load %arg2[%c18_110, %c0_111, %c0_112] : memref<20x169x32xf32, #tpu.memory_space<vmem>>, vector<1x169x32xf32>
    %112 = vector.shape_cast %111 : vector<1x169x32xf32> to vector<169x32xf32>
    %cst_113 = arith.constant dense<0.000000e+00> : vector<2x32xf32>
    %113 = tpu.matmul %110, %112, %cst_113 {dimension_numbers = #tpu.dot_dimension_numbers<[1], [0], [0], [1], [0, 0, 1, 1], [], []>} : vector<2x169xf32>, vector<169x32xf32>, vector<2x32xf32> -> vector<2x32xf32>
    %114 = arith.addf %108, %113 : vector<2x32xf32>
    %c19 = arith.constant 19 : index
    %c0_114 = arith.constant 0 : index
    %c0_115 = arith.constant 0 : index
    %115 = vector.load %arg1[%c19, %c0_114, %c0_115] : memref<20x2x169xf32, #tpu.memory_space<vmem>>, vector<1x2x169xf32>
    %116 = vector.shape_cast %115 : vector<1x2x169xf32> to vector<2x169xf32>
    %c19_116 = arith.constant 19 : index
    %c0_117 = arith.constant 0 : index
    %c0_118 = arith.constant 0 : index
    %117 = vector.load %arg2[%c19_116, %c0_117, %c0_118] : memref<20x169x32xf32, #tpu.memory_space<vmem>>, vector<1x169x32xf32>
    %118 = vector.shape_cast %117 : vector<1x169x32xf32> to vector<169x32xf32>
    %cst_119 = arith.constant dense<0.000000e+00> : vector<2x32xf32>
    %119 = tpu.matmul %116, %118, %cst_119 {dimension_numbers = #tpu.dot_dimension_numbers<[1], [0], [0], [1], [0, 0, 1, 1], [], []>} : vector<2x169xf32>, vector<169x32xf32>, vector<2x32xf32> -> vector<2x32xf32>
    %120 = arith.addf %114, %119 : vector<2x32xf32>
    %c0_120 = arith.constant 0 : index
    %c0_121 = arith.constant 0 : index
    %121 = vector.load %arg3[%c0_120, %c0_121] : memref<1x32xf32, #tpu.memory_space<vmem>>, vector<1x32xf32>
    %122 = vector.broadcast %121 : vector<1x32xf32> to vector<2x32xf32>
    %123 = arith.addf %120, %122 : vector<2x32xf32>
    %cst_122 = arith.constant 0.000000e+00 : f32
    %124 = vector.broadcast %cst_122 : f32 to vector<2x32xf32>
    %125 = arith.maximumf %123, %124 : vector<2x32xf32>
    %c0_123 = arith.constant 0 : index
    %c0_124 = arith.constant 0 : index
    %126 = vector.load %arg4[%c0_123, %c0_124] : memref<32x10xf32, #tpu.memory_space<vmem>>, vector<32x10xf32>
    %cst_125 = arith.constant dense<0.000000e+00> : vector<2x10xf32>
    %127 = tpu.matmul %125, %126, %cst_125 {dimension_numbers = #tpu.dot_dimension_numbers<[1], [0], [0], [1], [0, 0, 1, 1], [], []>} : vector<2x32xf32>, vector<32x10xf32>, vector<2x10xf32> -> vector<2x10xf32>
    %c0_126 = arith.constant 0 : index
    %c0_127 = arith.constant 0 : index
    %128 = vector.load %arg5[%c0_126, %c0_127] : memref<1x10xf32, #tpu.memory_space<vmem>>, vector<1x10xf32>
    %129 = vector.broadcast %128 : vector<1x10xf32> to vector<2x10xf32>
    %130 = arith.addf %127, %129 : vector<2x10xf32>
    %cst_128 = arith.constant dense<0xFF800000> : vector<2xf32>
    %131 = vector.multi_reduction <maximumf>, %130, %cst_128 [1] : vector<2x10xf32> to vector<2xf32>
    %132 = vector.shape_cast %131 : vector<2xf32> to vector<2x1xf32>
    %133 = vector.broadcast %132 : vector<2x1xf32> to vector<2x10xf32>
    %134 = arith.subf %130, %133 : vector<2x10xf32>
    %135 = math.exp %134 : vector<2x10xf32>
    %cst_129 = arith.constant dense<0.000000e+00> : vector<2xf32>
    %136 = vector.multi_reduction <add>, %135, %cst_129 [1] : vector<2x10xf32> to vector<2xf32>
    %137 = vector.shape_cast %136 : vector<2xf32> to vector<2x1xf32>
    %138 = tpu.reciprocal %137 {approx = true} : vector<2x1xf32> -> vector<2x1xf32>
    %139 = vector.broadcast %138 : vector<2x1xf32> to vector<2x10xf32>
    %140 = arith.mulf %135, %139 : vector<2x10xf32>
    %c0_130 = arith.constant 0 : index
    %c0_131 = arith.constant 0 : index
    %141 = vector.load %arg6[%c0_130, %c0_131] : memref<2x10xf32, #tpu.memory_space<vmem>>, vector<2x10xf32>
    tpu.vector_store %arg6[%c0_130, %c0_131], %140 {strides = array<i32>} : memref<2x10xf32, #tpu.memory_space<vmem>>, vector<2x10xf32>,
    return
  }
  func.func @transform_0(%arg0: i32) -> (i32, i32, i32) {
    %c0_i32 = arith.constant 0 : i32
    %c0_i32_0 = arith.constant 0 : i32
    %c0_i32_1 = arith.constant 0 : i32
    return %c0_i32, %arg0, %c0_i32_0 : i32, i32, i32
  }
  func.func @transform_1(%arg0: i32) -> (i32, i32, i32) {
    %c0_i32 = arith.constant 0 : i32
    %c0_i32_0 = arith.constant 0 : i32
    %c0_i32_1 = arith.constant 0 : i32
    %c0_i32_2 = arith.constant 0 : i32
    return %c0_i32, %c0_i32_0, %c0_i32_1 : i32, i32, i32
  }
  func.func @transform_2(%arg0: i32) -> (i32, i32) {
    %c0_i32 = arith.constant 0 : i32
    %c0_i32_0 = arith.constant 0 : i32
    %c0_i32_1 = arith.constant 0 : i32
    return %c0_i32, %c0_i32_0 : i32, i32
  }
  func.func @transform_3(%arg0: i32) -> (i32, i32) {
    %c0_i32 = arith.constant 0 : i32
    %c0_i32_0 = arith.constant 0 : i32
    %c0_i32_1 = arith.constant 0 : i32
    return %c0_i32, %c0_i32_0 : i32, i32
  }
  func.func @transform_4(%arg0: i32) -> (i32, i32) {
    %c0_i32 = arith.constant 0 : i32
    %c0_i32_0 = arith.constant 0 : i32
    %c0_i32_1 = arith.constant 0 : i32
    return %c0_i32, %c0_i32_0 : i32, i32
  }
  func.func @transform_5(%arg0: i32) -> (i32, i32) {
    %c0_i32 = arith.constant 0 : i32
    %c0_i32_0 = arith.constant 0 : i32
    return %arg0, %c0_i32 : i32, i32
  }
}

</mosaic_0001>

<llo_original>
// kernel: my_cnn_forward.2
$region0: #{my_cnn_forward.2}
  #allocation0 [shape = 'u32[]', space=smem, size = 0x4, offset = 0x4, fixed_abs, tag = 'smem constant byte address 0x4 - core index']
  #allocation1 [shape = 'u32[144,128]{1,0:T(1,128)}', space=vmem, size = 0x12000, scoped, tag = 'internal scratch']
  %s0 = inlined_call_operand.vmem [shape: f32[4,9,338], index: 0, kind: input, shape index: {}]
  %s1 = inlined_call_operand.vmem [shape: f32[20,9], index: 1, kind: input, shape index: {}]
  %s2 = inlined_call_operand.vmem [shape: f32[20,1], index: 2, kind: input, shape index: {}]
  %s3 = inlined_call_operand.vmem [shape: f32[20,338], index: 3, kind: output, shape index: {}]
  %s4 = sld [smem:[#allocation0]]
  $region22: #{my_cnn_forward.2} parent=0
    _
  %s6 = ssub.s32 1, %s4
  %s7 = scalar_select 0, %s6, %s4
  // Predicated region
  $region2: #{my_cnn_forward.2} parent=0 // pred_check
    _
  $region3: #{my_cnn_forward.2} parent=0 // pred_check_branch
    %9 = sbr.rel (0) target = $region5
  $region4: #{my_cnn_forward.2} parent=0 // pred_region
    _
  $region5: #{my_cnn_forward.2} parent=0 // pred_fallthru
    _
  // Predicated region
  $region6: #{my_cnn_forward.2} parent=0 // pred_check
    _
  $region7: #{my_cnn_forward.2} parent=0 // pred_check_branch
    %11 = sbr.rel (0) target = $region9
  $region8: #{my_cnn_forward.2} parent=0 // pred_region
    _
  $region9: #{my_cnn_forward.2} parent=0 // pred_fallthru
    _
  // Predicated region
  $region10: #{my_cnn_forward.2} parent=0 // pred_check
    _
  $region11: #{my_cnn_forward.2} parent=0 // pred_check_branch
    %13 = sbr.rel (0) target = $region13
  $region12: #{my_cnn_forward.2} parent=0 // pred_region
    _
  $region13: #{my_cnn_forward.2} parent=0 // pred_fallthru
    _
  %v14 = vld [vmem:[%s1] sm:$0xff]
  %v15 = vld [vmem:[%s1 + $0x8] sm:$0xff]
  %v16 = vld [vmem:[%s1 + $0x10] sm:$0xf]
  %v17 = vld [vmem:[%s2] sm:$0xff]
  %v18 = vld [vmem:[%s2 + $0x8] sm:$0xff]
  %v19 = vld [vmem:[%s2 + $0x10] sm:$0xf]
  %v20 = vld [vmem:[%s0] sm:$0xff]
  %v21 = vld [vmem:[%s0 + $0x8] sm:$0xff]
  %v22 = vld [vmem:[%s0 + $0x10] sm:$0xff]
  %v23 = vld [vmem:[%s0 + $0x18] sm:$0x1]
  %v24 = vld [vmem:[%s0 + $0x20] sm:$0x1]
  %v25 = vld [vmem:[%s0 + $0x28] sm:$0x1]
  %27 = vset.pattern.permute.xlu0 0
  %28 = vperm.xlu0 %27, %v17
  %v29 = vpop.permute.xlu0 %28
  %32 = vset.pattern.permute.xlu0 0
  %33 = vperm.xlu0 %32, %v18
  %v34 = vpop.permute.xlu0 %33
  %37 = vset.pattern.permute.xlu0 0
  %38 = vperm.xlu0 %37, %v19
  %v39 = vpop.permute.xlu0 %38
  %vm41 = vcmask 72704
  %v43 = vsel %vm41, %v14, 0
  %v46 = vsel %vm41, %v15, 0
  %v49 = vsel %vm41, %v16, 0
  %vm51 = vcmask 1040384
  %v53 = vsel %vm51, %v23, 0
  %v56 = vsel %vm51, %v24, 0
  %v59 = vsel %vm51, %v25, 0
  %61 = vmatprep.subr.mxu0 %v21
  %62 = vmatpush1.msra.mxu0 %v20
  %63 = vmatprep.subr.mxu0 %v56
  %64 = vmatpush1.msra.mxu0 %v53
  %65 = vmatprep.subr.mxu0 0.0
  %66 = vmatpush1.msra.mxu0 0.0
  %67 = vmatprep.subr.mxu0 0.0
  %68 = vmatpush1.msra.mxu0 0.0
  %69 = vmatprep.subr.mxu0 0.0
  %70 = vmatpush1.msra.mxu0 0.0
  %71 = vmatprep.subr.mxu0 0.0
  %72 = vmatpush1.msra.mxu0 0.0
  %73 = vmatprep.subr.mxu0 0.0
  %74 = vmatpush1.msra.mxu0 0.0
  %75 = vmatprep.subr.mxu0 0.0
  %76 = vmatpush1.msra.mxu0 0.0
  %77 = vmatprep.subr.mxu0 0.0
  %78 = vmatpush1.msra.mxu0 0.0
  %79 = vmatprep.subr.mxu0 0.0
  %80 = vmatpush1.msra.mxu0 0.0
  %81 = vmatprep.subr.mxu0 0.0
  %82 = vmatpush1.msra.mxu0 0.0
  %83 = vmatprep.subr.mxu0 0.0
  %84 = vmatpush1.msra.mxu0 0.0
  %85 = vmatprep.subr.mxu0 0.0
  %86 = vmatpush1.msra.mxu0 0.0
  %87 = vmatprep.subr.mxu0 0.0
  %88 = vmatpush1.msra.mxu0 0.0
  %89 = vmatprep.subr.mxu0 0.0
  %90 = vmatpush1.msra.mxu0 0.0
  %91 = vmatprep.subr.mxu0 0.0
  %92 = vmatpush1.msra.mxu0 0.0
  %93 = vmatprep.subr.mxu0 0.0
  %94 = vmatpush1.msra.mxu0 0.0
  %95 = vmatprep.subr.mxu0 0.0
  %96 = vmatpush1.msra.mxu0 0.0
  %97 = vmatprep.subr.mxu0 0.0
  %98 = vmatpush1.msra.mxu0 0.0
  %99 = vmatprep.subr.mxu0 0.0
  %100 = vmatpush1.msra.mxu0 0.0
  %101 = vmatprep.subr.mxu0 0.0
  %102 = vmatpush1.msra.mxu0 0.0
  %103 = vmatprep.subr.mxu0 0.0
  %104 = vmatpush1.msra.mxu0 0.0
  %105 = vmatprep.subr.mxu0 0.0
  %106 = vmatpush1.msra.mxu0 0.0
  %107 = vmatprep.subr.mxu0 0.0
  %108 = vmatpush1.msra.mxu0 0.0
  %109 = vmatprep.subr.mxu0 0.0
  %110 = vmatpush1.msra.mxu0 0.0
  %111 = vmatprep.subr.mxu0 0.0
  %112 = vmatpush1.msra.mxu0 0.0
  %113 = vmatprep.subr.mxu0 0.0
  %114 = vmatpush1.msra.mxu0 0.0
  %115 = vmatprep.subr.mxu0 0.0
  %116 = vmatpush1.msra.mxu0 0.0
  %117 = vmatprep.subr.mxu0 0.0
  %118 = vmatpush1.msra.mxu0 0.0
  %119 = vmatprep.subr.mxu0 0.0
  %120 = vmatpush1.msra.mxu0 0.0
  %121 = vmatprep.subr.mxu0 0.0
  %122 = vmatpush1.msra.mxu0 0.0
  %123 = vmatprep.subr.mxu0 0.0
  %124 = vmatpush1.msra.mxu0 0.0
  %125 = vmatprep.mubr.f32.mxu0 0.0
  %126 = vmatmul.mubr.f32.gmra.mrb[0].mxu0 %v43
  %v127 = vpop.f32.mrb[0].mxu0
  %v128 = vadd.f32 %v29, %v127
  %v129 = vpop.f32.mrb[0].mxu0
  %v130 = vadd.f32 %v29, %v129
  %131 = vmatprep.mubr.f32.mxu0 0.0
  %132 = vmatmul.mubr.f32.gmra.mrb[0].mxu0 %v46
  %v133 = vpop.f32.mrb[0].mxu0
  %v134 = vadd.f32 %v34, %v133
  %v135 = vpop.f32.mrb[0].mxu0
  %v136 = vadd.f32 %v34, %v135
  %137 = vmatprep.mubr.f32.mxu0 0.0
  %138 = vmatmul.mubr.f32.gmra.mrb[0].mxu0 %v49
  %v139 = vpop.f32.mrb[0].mxu0
  %v140 = vadd.f32 %v39, %v139
  %v141 = vpop.f32.mrb[0].mxu0
  %v142 = vadd.f32 %v39, %v141
  %143 = vdwg.mxu0
  %144 = vmatprep.subr.mxu0 0.0
  %145 = vmatpush1.msra.mxu0 %v22
  %146 = vmatprep.subr.mxu0 0.0
  %147 = vmatpush1.msra.mxu0 %v59
  %148 = vmatprep.subr.mxu0 0.0
  %149 = vmatpush1.msra.mxu0 0.0
  %150 = vmatprep.subr.mxu0 0.0
  %151 = vmatpush1.msra.mxu0 0.0
  %152 = vmatprep.subr.mxu0 0.0
  %153 = vmatpush1.msra.mxu0 0.0
  %154 = vmatprep.subr.mxu0 0.0
  %155 = vmatpush1.msra.mxu0 0.0
  %156 = vmatprep.subr.mxu0 0.0
  %157 = vmatpush1.msra.mxu0 0.0
  %158 = vmatprep.subr.mxu0 0.0
  %159 = vmatpush1.msra.mxu0 0.0
  %160 = vmatprep.subr.mxu0 0.0
  %161 = vmatpush1.msra.mxu0 0.0
  %162 = vmatprep.subr.mxu0 0.0
  %163 = vmatpush1.msra.mxu0 0.0
  %164 = vmatprep.subr.mxu0 0.0
  %165 = vmatpush1.msra.mxu0 0.0
  %166 = vmatprep.subr.mxu0 0.0
  %167 = vmatpush1.msra.mxu0 0.0
  %168 = vmatprep.subr.mxu0 0.0
  %169 = vmatpush1.msra.mxu0 0.0
  %170 = vmatprep.subr.mxu0 0.0
  %171 = vmatpush1.msra.mxu0 0.0
  %172 = vmatprep.subr.mxu0 0.0
  %173 = vmatpush1.msra.mxu0 0.0
  %174 = vmatprep.subr.mxu0 0.0
  %175 = vmatpush1.msra.mxu0 0.0
  %176 = vmatprep.subr.mxu0 0.0
  %177 = vmatpush1.msra.mxu0 0.0
  %178 = vmatprep.subr.mxu0 0.0
  %179 = vmatpush1.msra.mxu0 0.0
  %180 = vmatprep.subr.mxu0 0.0
  %181 = vmatpush1.msra.mxu0 0.0
  %182 = vmatprep.subr.mxu0 0.0
  %183 = vmatpush1.msra.mxu0 0.0
  %184 = vmatprep.subr.mxu0 0.0
  %185 = vmatpush1.msra.mxu0 0.0
  %186 = vmatprep.subr.mxu0 0.0
  %187 = vmatpush1.msra.mxu0 0.0
  %188 = vmatprep.subr.mxu0 0.0
  %189 = vmatpush1.msra.mxu0 0.0
  %190 = vmatprep.subr.mxu0 0.0
  %191 = vmatpush1.msra.mxu0 0.0
  %192 = vmatprep.subr.mxu0 0.0
  %193 = vmatpush1.msra.mxu0 0.0
  %194 = vmatprep.subr.mxu0 0.0
  %195 = vmatpush1.msra.mxu0 0.0
  %196 = vmatprep.subr.mxu0 0.0
  %197 = vmatpush1.msra.mxu0 0.0
  %198 = vmatprep.subr.mxu0 0.0
  %199 = vmatpush1.msra.mxu0 0.0
  %200 = vmatprep.subr.mxu0 0.0
  %201 = vmatpush1.msra.mxu0 0.0
  %202 = vmatprep.subr.mxu0 0.0
  %203 = vmatpush1.msra.mxu0 0.0
  %204 = vmatprep.subr.mxu0 0.0
  %205 = vmatpush1.msra.mxu0 0.0
  %206 = vmatprep.subr.mxu0 0.0
  %207 = vmatpush1.msra.mxu0 0.0
  %208 = vmatprep.mubr.f32.mxu0 0.0
  %209 = vmatmul.mubr.f32.gmra.mrb[0].mxu0 %v43
  %v210 = vpop.f32.mrb[0].mxu0
  %v211 = vadd.f32 %v29, %v210
  %v212 = vpop.f32.mrb[0].mxu0
  %213 = vmatprep.mubr.f32.mxu0 0.0
  %214 = vmatmul.mubr.f32.gmra.mrb[0].mxu0 %v46
  %v215 = vpop.f32.mrb[0].mxu0
  %v216 = vadd.f32 %v34, %v215
  %v217 = vpop.f32.mrb[0].mxu0
  %218 = vmatprep.mubr.f32.mxu0 0.0
  %219 = vmatmul.mubr.f32.gmra.mrb[0].mxu0 %v49
  %v220 = vpop.f32.mrb[0].mxu0
  %v221 = vadd.f32 %v39, %v220
  %v222 = vpop.f32.mrb[0].mxu0
  %223 = vdwg.mxu0
  %v224 = vmax.f32 %v128, 0.0
  %v225 = vmax.f32 %v130, 0.0
  %v226 = vmax.f32 %v211, 0.0
  %v227 = vmax.f32 %v134, 0.0
  %v228 = vmax.f32 %v136, 0.0
  %v229 = vmax.f32 %v216, 0.0
  %v230 = vmax.f32 %v140, 0.0
  %v231 = vmax.f32 %v142, 0.0
  %v232 = vmax.f32 %v221, 0.0
  %s233 = scalar_lea.vmem %s0, 48
  %v234 = vld [vmem:[%s233] sm:$0xff]
  %v235 = vld [vmem:[%s233 + $0x8] sm:$0xff]
  %v236 = vld [vmem:[%s233 + $0x10] sm:$0xff]
  %v237 = vld [vmem:[%s233 + $0x18] sm:$0x1]
  %v238 = vld [vmem:[%s233 + $0x20] sm:$0x1]
  %v239 = vld [vmem:[%s233 + $0x28] sm:$0x1]
  %v241 = vsel %vm51, %v237, 0
  %v244 = vsel %vm51, %v238, 0
  %v247 = vsel %vm51, %v239, 0
  %249 = vmatprep.subr.mxu0 %v235
  %250 = vmatpush1.msra.mxu0 %v234
  %251 = vmatprep.subr.mxu0 %v244
  %252 = vmatpush1.msra.mxu0 %v241
  %253 = vmatprep.subr.mxu0 0.0
  %254 = vmatpush1.msra.mxu0 0.0
  %255 = vmatprep.subr.mxu0 0.0
  %256 = vmatpush1.msra.mxu0 0.0
  %257 = vmatprep.subr.mxu0 0.0
  %258 = vmatpush1.msra.mxu0 0.0
  %259 = vmatprep.subr.mxu0 0.0
  %260 = vmatpush1.msra.mxu0 0.0
  %261 = vmatprep.subr.mxu0 0.0
  %262 = vmatpush1.msra.mxu0 0.0
  %263 = vmatprep.subr.mxu0 0.0
  %264 = vmatpush1.msra.mxu0 0.0
  %265 = vmatprep.subr.mxu0 0.0
  %266 = vmatpush1.msra.mxu0 0.0
  %267 = vmatprep.subr.mxu0 0.0
  %268 = vmatpush1.msra.mxu0 0.0
  %269 = vmatprep.subr.mxu0 0.0
  %270 = vmatpush1.msra.mxu0 0.0
  %271 = vmatprep.subr.mxu0 0.0
  %272 = vmatpush1.msra.mxu0 0.0
  %273 = vmatprep.subr.mxu0 0.0
  %274 = vmatpush1.msra.mxu0 0.0
  %275 = vmatprep.subr.mxu0 0.0
  %276 = vmatpush1.msra.mxu0 0.0
  %277 = vmatprep.subr.mxu0 0.0
  %278 = vmatpush1.msra.mxu0 0.0
  %279 = vmatprep.subr.mxu0 0.0
  %280 = vmatpush1.msra.mxu0 0.0
  %281 = vmatprep.subr.mxu0 0.0
  %282 = vmatpush1.msra.mxu0 0.0
  %283 = vmatprep.subr.mxu0 0.0
  %284 = vmatpush1.msra.mxu0 0.0
  %285 = vmatprep.subr.mxu0 0.0
  %286 = vmatpush1.msra.mxu0 0.0
  %287 = vmatprep.subr.mxu0 0.0
  %288 = vmatpush1.msra.mxu0 0.0
  %289 = vmatprep.subr.mxu0 0.0
  %290 = vmatpush1.msra.mxu0 0.0
  %291 = vmatprep.subr.mxu0 0.0
  %292 = vmatpush1.msra.mxu0 0.0
  %293 = vmatprep.subr.mxu0 0.0
  %294 = vmatpush1.msra.mxu0 0.0
  %295 = vmatprep.subr.mxu0 0.0
  %296 = vmatpush1.msra.mxu0 0.0
  %297 = vmatprep.subr.mxu0 0.0
  %298 = vmatpush1.msra.mxu0 0.0
  %299 = vmatprep.subr.mxu0 0.0
  %300 = vmatpush1.msra.mxu0 0.0
  %301 = vmatprep.subr.mxu0 0.0
  %302 = vmatpush1.msra.mxu0 0.0
  %303 = vmatprep.subr.mxu0 0.0
  %304 = vmatpush1.msra.mxu0 0.0
  %305 = vmatprep.subr.mxu0 0.0
  %306 = vmatpush1.msra.mxu0 0.0
  %307 = vmatprep.subr.mxu0 0.0
  %308 = vmatpush1.msra.mxu0 0.0
  %309 = vmatprep.subr.mxu0 0.0
  %310 = vmatpush1.msra.mxu0 0.0
  %311 = vmatprep.subr.mxu0 0.0
  %312 = vmatpush1.msra.mxu0 0.0
  %313 = vmatprep.mubr.f32.mxu0 0.0
  %314 = vmatmul.mubr.f32.gmra.mrb[0].mxu0 %v43
  %v315 = vpop.f32.mrb[0].mxu0
  %v316 = vadd.f32 %v29, %v315
  %v317 = vpop.f32.mrb[0].mxu0
  %v318 = vadd.f32 %v29, %v317
  %319 = vmatprep.mubr.f32.mxu0 0.0
  %320 = vmatmul.mubr.f32.gmra.mrb[0].mxu0 %v46
  %v321 = vpop.f32.mrb[0].mxu0
  %v322 = vadd.f32 %v34, %v321
  %v323 = vpop.f32.mrb[0].mxu0
  %v324 = vadd.f32 %v34, %v323
  %325 = vmatprep.mubr.f32.mxu0 0.0
  %326 = vmatmul.mubr.f32.gmra.mrb[0].mxu0 %v49
  %v327 = vpop.f32.mrb[0].mxu0
  %v328 = vadd.f32 %v39, %v327
  %v329 = vpop.f32.mrb[0].mxu0
  %v330 = vadd.f32 %v39, %v329
  %331 = vdwg.mxu0
  %332 = vmatprep.subr.mxu0 0.0
  %333 = vmatpush1.msra.mxu0 %v236
  %334 = vmatprep.subr.mxu0 0.0
  %335 = vmatpush1.msra.mxu0 %v247
  %336 = vmatprep.subr.mxu0 0.0
  %337 = vmatpush1.msra.mxu0 0.0
  %338 = vmatprep.subr.mxu0 0.0
  %339 = vmatpush1.msra.mxu0 0.0
  %340 = vmatprep.subr.mxu0 0.0
  %341 = vmatpush1.msra.mxu0 0.0
  %342 = vmatprep.subr.mxu0 0.0
  %343 = vmatpush1.msra.mxu0 0.0
  %344 = vmatprep.subr.mxu0 0.0
  %345 = vmatpush1.msra.mxu0 0.0
  %346 = vmatprep.subr.mxu0 0.0
  %347 = vmatpush1.msra.mxu0 0.0
  %348 = vmatprep.subr.mxu0 0.0
  %349 = vmatpush1.msra.mxu0 0.0
  %350 = vmatprep.subr.mxu0 0.0
  %351 = vmatpush1.msra.mxu0 0.0
  %352 = vmatprep.subr.mxu0 0.0
  %353 = vmatpush1.msra.mxu0 0.0
  %354 = vmatprep.subr.mxu0 0.0
  %355 = vmatpush1.msra.mxu0 0.0
  %356 = vmatprep.subr.mxu0 0.0
  %357 = vmatpush1.msra.mxu0 0.0
  %358 = vmatprep.subr.mxu0 0.0
  %359 = vmatpush1.msra.mxu0 0.0
  %360 = vmatprep.subr.mxu0 0.0
  %361 = vmatpush1.msra.mxu0 0.0
  %362 = vmatprep.subr.mxu0 0.0
  %363 = vmatpush1.msra.mxu0 0.0
  %364 = vmatprep.subr.mxu0 0.0
  %365 = vmatpush1.msra.mxu0 0.0
  %366 = vmatprep.subr.mxu0 0.0
  %367 = vmatpush1.msra.mxu0 0.0
  %368 = vmatprep.subr.mxu0 0.0
  %369 = vmatpush1.msra.mxu0 0.0
  %370 = vmatprep.subr.mxu0 0.0
  %371 = vmatpush1.msra.mxu0 0.0
  %372 = vmatprep.subr.mxu0 0.0
  %373 = vmatpush1.msra.mxu0 0.0
  %374 = vmatprep.subr.mxu0 0.0
  %375 = vmatpush1.msra.mxu0 0.0
  %376 = vmatprep.subr.mxu0 0.0
  %377 = vmatpush1.msra.mxu0 0.0
  %378 = vmatprep.subr.mxu0 0.0
  %379 = vmatpush1.msra.mxu0 0.0
  %380 = vmatprep.subr.mxu0 0.0
  %381 = vmatpush1.msra.mxu0 0.0
  %382 = vmatprep.subr.mxu0 0.0
  %383 = vmatpush1.msra.mxu0 0.0
  %384 = vmatprep.subr.mxu0 0.0
  %385 = vmatpush1.msra.mxu0 0.0
  %386 = vmatprep.subr.mxu0 0.0
  %387 = vmatpush1.msra.mxu0 0.0
  %388 = vmatprep.subr.mxu0 0.0
  %389 = vmatpush1.msra.mxu0 0.0
  %390 = vmatprep.subr.mxu0 0.0
  %391 = vmatpush1.msra.mxu0 0.0
  %392 = vmatprep.subr.mxu0 0.0
  %393 = vmatpush1.msra.mxu0 0.0
  %394 = vmatprep.subr.mxu0 0.0
  %395 = vmatpush1.msra.mxu0 0.0
  %396 = vmatprep.mubr.f32.mxu0 0.0
  %397 = vmatmul.mubr.f32.gmra.mrb[0].mxu0 %v43
  %v398 = vpop.f32.mrb[0].mxu0
  %v399 = vadd.f32 %v29, %v398
  %v400 = vpop.f32.mrb[0].mxu0
  %401 = vmatprep.mubr.f32.mxu0 0.0
  %402 = vmatmul.mubr.f32.gmra.mrb[0].mxu0 %v46
  %v403 = vpop.f32.mrb[0].mxu0
  %v404 = vadd.f32 %v34, %v403
  %v405 = vpop.f32.mrb[0].mxu0
  %406 = vmatprep.mubr.f32.mxu0 0.0
  %407 = vmatmul.mubr.f32.gmra.mrb[0].mxu0 %v49
  %v408 = vpop.f32.mrb[0].mxu0
  %v409 = vadd.f32 %v39, %v408
  %v410 = vpop.f32.mrb[0].mxu0
  %411 = vdwg.mxu0
  %v412 = vmax.f32 %v316, 0.0
  %v413 = vmax.f32 %v318, 0.0
  %v414 = vmax.f32 %v399, 0.0
  %v415 = vmax.f32 %v322, 0.0
  %v416 = vmax.f32 %v324, 0.0
  %v417 = vmax.f32 %v404, 0.0
  %v418 = vmax.f32 %v328, 0.0
  %v419 = vmax.f32 %v330, 0.0
  %v420 = vmax.f32 %v409, 0.0
  %v421 = vmax.f32 %v224, %v412
  %v422 = vmax.f32 %v225, %v413
  %v423 = vmax.f32 %v226, %v414
  %v424 = vmax.f32 %v227, %v415
  %v425 = vmax.f32 %v228, %v416
  %v426 = vmax.f32 %v229, %v417
  %v427 = vmax.f32 %v230, %v418
  %v428 = vmax.f32 %v231, %v419
  %v429 = vmax.f32 %v232, %v420
  %s430 = scalar_lea.vmem %s0, 96
  %v431 = vld [vmem:[%s430] sm:$0xff]
  %v432 = vld [vmem:[%s430 + $0x8] sm:$0xff]
  %v433 = vld [vmem:[%s430 + $0x10] sm:$0xff]
  %v434 = vld [vmem:[%s430 + $0x18] sm:$0x1]
  %v435 = vld [vmem:[%s430 + $0x20] sm:$0x1]
  %v436 = vld [vmem:[%s430 + $0x28] sm:$0x1]
  %v438 = vsel %vm51, %v434, 0
  %v441 = vsel %vm51, %v435, 0
  %v444 = vsel %vm51, %v436, 0
  %446 = vmatprep.subr.mxu0 %v432
  %447 = vmatpush1.msra.mxu0 %v431
  %448 = vmatprep.subr.mxu0 %v441
  %449 = vmatpush1.msra.mxu0 %v438
  %450 = vmatprep.subr.mxu0 0.0
  %451 = vmatpush1.msra.mxu0 0.0
  %452 = vmatprep.subr.mxu0 0.0
  %453 = vmatpush1.msra.mxu0 0.0
  %454 = vmatprep.subr.mxu0 0.0
  %455 = vmatpush1.msra.mxu0 0.0
  %456 = vmatprep.subr.mxu0 0.0
  %457 = vmatpush1.msra.mxu0 0.0
  %458 = vmatprep.subr.mxu0 0.0
  %459 = vmatpush1.msra.mxu0 0.0
  %460 = vmatprep.subr.mxu0 0.0
  %461 = vmatpush1.msra.mxu0 0.0
  %462 = vmatprep.subr.mxu0 0.0
  %463 = vmatpush1.msra.mxu0 0.0
  %464 = vmatprep.subr.mxu0 0.0
  %465 = vmatpush1.msra.mxu0 0.0
  %466 = vmatprep.subr.mxu0 0.0
  %467 = vmatpush1.msra.mxu0 0.0
  %468 = vmatprep.subr.mxu0 0.0
  %469 = vmatpush1.msra.mxu0 0.0
  %470 = vmatprep.subr.mxu0 0.0
  %471 = vmatpush1.msra.mxu0 0.0
  %472 = vmatprep.subr.mxu0 0.0
  %473 = vmatpush1.msra.mxu0 0.0
  %474 = vmatprep.subr.mxu0 0.0
  %475 = vmatpush1.msra.mxu0 0.0
  %476 = vmatprep.subr.mxu0 0.0
  %477 = vmatpush1.msra.mxu0 0.0
  %478 = vmatprep.subr.mxu0 0.0
  %479 = vmatpush1.msra.mxu0 0.0
  %480 = vmatprep.subr.mxu0 0.0
  %481 = vmatpush1.msra.mxu0 0.0
  %482 = vmatprep.subr.mxu0 0.0
  %483 = vmatpush1.msra.mxu0 0.0
  %484 = vmatprep.subr.mxu0 0.0
  %485 = vmatpush1.msra.mxu0 0.0
  %486 = vmatprep.subr.mxu0 0.0
  %487 = vmatpush1.msra.mxu0 0.0
  %488 = vmatprep.subr.mxu0 0.0
  %489 = vmatpush1.msra.mxu0 0.0
  %490 = vmatprep.subr.mxu0 0.0
  %491 = vmatpush1.msra.mxu0 0.0
  %492 = vmatprep.subr.mxu0 0.0
  %493 = vmatpush1.msra.mxu0 0.0
  %494 = vmatprep.subr.mxu0 0.0
  %495 = vmatpush1.msra.mxu0 0.0
  %496 = vmatprep.subr.mxu0 0.0
  %497 = vmatpush1.msra.mxu0 0.0
  %498 = vmatprep.subr.mxu0 0.0
  %499 = vmatpush1.msra.mxu0 0.0
  %500 = vmatprep.subr.mxu0 0.0
  %501 = vmatpush1.msra.mxu0 0.0
  %502 = vmatprep.subr.mxu0 0.0
  %503 = vmatpush1.msra.mxu0 0.0
  %504 = vmatprep.subr.mxu0 0.0
  %505 = vmatpush1.msra.mxu0 0.0
  %506 = vmatprep.subr.mxu0 0.0
  %507 = vmatpush1.msra.mxu0 0.0
  %508 = vmatprep.subr.mxu0 0.0
  %509 = vmatpush1.msra.mxu0 0.0
  %510 = vmatprep.mubr.f32.mxu0 0.0
  %511 = vmatmul.mubr.f32.gmra.mrb[0].mxu0 %v43
  %v512 = vpop.f32.mrb[0].mxu0
  %v513 = vadd.f32 %v29, %v512
  %v514 = vpop.f32.mrb[0].mxu0
  %v515 = vadd.f32 %v29, %v514
  %516 = vmatprep.mubr.f32.mxu0 0.0
  %517 = vmatmul.mubr.f32.gmra.mrb[0].mxu0 %v46
  %v518 = vpop.f32.mrb[0].mxu0
  %v519 = vadd.f32 %v34, %v518
  %v520 = vpop.f32.mrb[0].mxu0
  %v521 = vadd.f32 %v34, %v520
  %522 = vmatprep.mubr.f32.mxu0 0.0
  %523 = vmatmul.mubr.f32.gmra.mrb[0].mxu0 %v49
  %v524 = vpop.f32.mrb[0].mxu0
  %v525 = vadd.f32 %v39, %v524
  %v526 = vpop.f32.mrb[0].mxu0
  %v527 = vadd.f32 %v39, %v526
  %528 = vdwg.mxu0
  %529 = vmatprep.subr.mxu0 0.0
  %530 = vmatpush1.msra.mxu0 %v433
  %531 = vmatprep.subr.mxu0 0.0
  %532 = vmatpush1.msra.mxu0 %v444
  %533 = vmatprep.subr.mxu0 0.0
  %534 = vmatpush1.msra.mxu0 0.0
  %535 = vmatprep.subr.mxu0 0.0
  %536 = vmatpush1.msra.mxu0 0.0
  %537 = vmatprep.subr.mxu0 0.0
  %538 = vmatpush1.msra.mxu0 0.0
  %539 = vmatprep.subr.mxu0 0.0
  %540 = vmatpush1.msra.mxu0 0.0
  %541 = vmatprep.subr.mxu0 0.0
  %542 = vmatpush1.msra.mxu0 0.0
  %543 = vmatprep.subr.mxu0 0.0
  %544 = vmatpush1.msra.mxu0 0.0
  %545 = vmatprep.subr.mxu0 0.0
  %546 = vmatpush1.msra.mxu0 0.0
  %547 = vmatprep.subr.mxu0 0.0
  %548 = vmatpush1.msra.mxu0 0.0
  %549 = vmatprep.subr.mxu0 0.0
  %550 = vmatpush1.msra.mxu0 0.0
  %551 = vmatprep.subr.mxu0 0.0
  %552 = vmatpush1.msra.mxu0 0.0
  %553 = vmatprep.subr.mxu0 0.0
  %554 = vmatpush1.msra.mxu0 0.0
  %555 = vmatprep.subr.mxu0 0.0
  %556 = vmatpush1.msra.mxu0 0.0
  %557 = vmatprep.subr.mxu0 0.0
  %558 = vmatpush1.msra.mxu0 0.0
  %559 = vmatprep.subr.mxu0 0.0
  %560 = vmatpush1.msra.mxu0 0.0
  %561 = vmatprep.subr.mxu0 0.0
  %562 = vmatpush1.msra.mxu0 0.0
  %563 = vmatprep.subr.mxu0 0.0
  %564 = vmatpush1.msra.mxu0 0.0
  %565 = vmatprep.subr.mxu0 0.0
  %566 = vmatpush1.msra.mxu0 0.0
  %567 = vmatprep.subr.mxu0 0.0
  %568 = vmatpush1.msra.mxu0 0.0
  %569 = vmatprep.subr.mxu0 0.0
  %570 = vmatpush1.msra.mxu0 0.0
  %571 = vmatprep.subr.mxu0 0.0
  %572 = vmatpush1.msra.mxu0 0.0
  %573 = vmatprep.subr.mxu0 0.0
  %574 = vmatpush1.msra.mxu0 0.0
  %575 = vmatprep.subr.mxu0 0.0
  %576 = vmatpush1.msra.mxu0 0.0
  %577 = vmatprep.subr.mxu0 0.0
  %578 = vmatpush1.msra.mxu0 0.0
  %579 = vmatprep.subr.mxu0 0.0
  %580 = vmatpush1.msra.mxu0 0.0
  %581 = vmatprep.subr.mxu0 0.0
  %582 = vmatpush1.msra.mxu0 0.0
  %583 = vmatprep.subr.mxu0 0.0
  %584 = vmatpush1.msra.mxu0 0.0
  %585 = vmatprep.subr.mxu0 0.0
  %586 = vmatpush1.msra.mxu0 0.0
  %587 = vmatprep.subr.mxu0 0.0
  %588 = vmatpush1.msra.mxu0 0.0
  %589 = vmatprep.subr.mxu0 0.0
  %590 = vmatpush1.msra.mxu0 0.0
  %591 = vmatprep.subr.mxu0 0.0
  %592 = vmatpush1.msra.mxu0 0.0
  %593 = vmatprep.mubr.f32.mxu0 0.0
  %594 = vmatmul.mubr.f32.gmra.mrb[0].mxu0 %v43
  %v595 = vpop.f32.mrb[0].mxu0
  %v596 = vadd.f32 %v29, %v595
  %v597 = vpop.f32.mrb[0].mxu0
  %598 = vmatprep.mubr.f32.mxu0 0.0
  %599 = vmatmul.mubr.f32.gmra.mrb[0].mxu0 %v46
  %v600 = vpop.f32.mrb[0].mxu0
  %v601 = vadd.f32 %v34, %v600
  %v602 = vpop.f32.mrb[0].mxu0
  %603 = vmatprep.mubr.f32.mxu0 0.0
  %604 = vmatmul.mubr.f32.gmra.mrb[0].mxu0 %v49
  %v605 = vpop.f32.mrb[0].mxu0
  %v606 = vadd.f32 %v39, %v605
  %v607 = vpop.f32.mrb[0].mxu0
  %608 = vdwg.mxu0
  %v609 = vmax.f32 %v513, 0.0
  %v610 = vmax.f32 %v515, 0.0
  %v611 = vmax.f32 %v596, 0.0
  %v612 = vmax.f32 %v519, 0.0
  %v613 = vmax.f32 %v521, 0.0
  %v614 = vmax.f32 %v601, 0.0
  %v615 = vmax.f32 %v525, 0.0
  %v616 = vmax.f32 %v527, 0.0
  %v617 = vmax.f32 %v606, 0.0
  %v618 = vmax.f32 %v421, %v609
  %v619 = vmax.f32 %v422, %v610
  %v620 = vmax.f32 %v423, %v611
  %v621 = vmax.f32 %v424, %v612
  %v622 = vmax.f32 %v425, %v613
  %v623 = vmax.f32 %v426, %v614
  %v624 = vmax.f32 %v427, %v615
  %v625 = vmax.f32 %v428, %v616
  %v626 = vmax.f32 %v429, %v617
  %s627 = scalar_lea.vmem %s0, 144
  %v628 = vld [vmem:[%s627] sm:$0xff]
  %v629 = vld [vmem:[%s627 + $0x8] sm:$0xff]
  %v630 = vld [vmem:[%s627 + $0x10] sm:$0xff]
  %v631 = vld [vmem:[%s627 + $0x18] sm:$0x1]
  %v632 = vld [vmem:[%s627 + $0x20] sm:$0x1]
  %v633 = vld [vmem:[%s627 + $0x28] sm:$0x1]
  %v635 = vsel %vm51, %v631, 0
  %v638 = vsel %vm51, %v632, 0
  %v641 = vsel %vm51, %v633, 0
  %643 = vmatprep.subr.mxu0 %v629
  %644 = vmatpush1.msra.mxu0 %v628
  %645 = vmatprep.subr.mxu0 %v638
  %646 = vmatpush1.msra.mxu0 %v635
  %647 = vmatprep.subr.mxu0 0.0
  %648 = vmatpush1.msra.mxu0 0.0
  %649 = vmatprep.subr.mxu0 0.0
  %650 = vmatpush1.msra.mxu0 0.0
  %651 = vmatprep.subr.mxu0 0.0
  %652 = vmatpush1.msra.mxu0 0.0
  %653 = vmatprep.subr.mxu0 0.0
  %654 = vmatpush1.msra.mxu0 0.0
  %655 = vmatprep.subr.mxu0 0.0
  %656 = vmatpush1.msra.mxu0 0.0
  %657 = vmatprep.subr.mxu0 0.0
  %658 = vmatpush1.msra.mxu0 0.0
  %659 = vmatprep.subr.mxu0 0.0
  %660 = vmatpush1.msra.mxu0 0.0
  %661 = vmatprep.subr.mxu0 0.0
  %662 = vmatpush1.msra.mxu0 0.0
  %663 = vmatprep.subr.mxu0 0.0
  %664 = vmatpush1.msra.mxu0 0.0
  %665 = vmatprep.subr.mxu0 0.0
  %666 = vmatpush1.msra.mxu0 0.0
  %667 = vmatprep.subr.mxu0 0.0
  %668 = vmatpush1.msra.mxu0 0.0
  %669 = vmatprep.subr.mxu0 0.0
  %670 = vmatpush1.msra.mxu0 0.0
  %671 = vmatprep.subr.mxu0 0.0
  %672 = vmatpush1.msra.mxu0 0.0
  %673 = vmatprep.subr.mxu0 0.0
  %674 = vmatpush1.msra.mxu0 0.0
  %675 = vmatprep.subr.mxu0 0.0
  %676 = vmatpush1.msra.mxu0 0.0
  %677 = vmatprep.subr.mxu0 0.0
  %678 = vmatpush1.msra.mxu0 0.0
  %679 = vmatprep.subr.mxu0 0.0
  %680 = vmatpush1.msra.mxu0 0.0
  %681 = vmatprep.subr.mxu0 0.0
  %682 = vmatpush1.msra.mxu0 0.0
  %683 = vmatprep.subr.mxu0 0.0
  %684 = vmatpush1.msra.mxu0 0.0
  %685 = vmatprep.subr.mxu0 0.0
  %686 = vmatpush1.msra.mxu0 0.0
  %687 = vmatprep.subr.mxu0 0.0
  %688 = vmatpush1.msra.mxu0 0.0
  %689 = vmatprep.subr.mxu0 0.0
  %690 = vmatpush1.msra.mxu0 0.0
  %691 = vmatprep.subr.mxu0 0.0
  %692 = vmatpush1.msra.mxu0 0.0
  %693 = vmatprep.subr.mxu0 0.0
  %694 = vmatpush1.msra.mxu0 0.0
  %695 = vmatprep.subr.mxu0 0.0
  %696 = vmatpush1.msra.mxu0 0.0
  %697 = vmatprep.subr.mxu0 0.0
  %698 = vmatpush1.msra.mxu0 0.0
  %699 = vmatprep.subr.mxu0 0.0
  %700 = vmatpush1.msra.mxu0 0.0
  %701 = vmatprep.subr.mxu0 0.0
  %702 = vmatpush1.msra.mxu0 0.0
  %703 = vmatprep.subr.mxu0 0.0
  %704 = vmatpush1.msra.mxu0 0.0
  %705 = vmatprep.subr.mxu0 0.0
  %706 = vmatpush1.msra.mxu0 0.0
  %707 = vmatprep.mubr.f32.mxu0 0.0
  %708 = vmatmul.mubr.f32.gmra.mrb[0].mxu0 %v43
  %v709 = vpop.f32.mrb[0].mxu0
  %v710 = vadd.f32 %v29, %v709
  %v711 = vpop.f32.mrb[0].mxu0
  %v712 = vadd.f32 %v29, %v711
  %713 = vmatprep.mubr.f32.mxu0 0.0
  %714 = vmatmul.mubr.f32.gmra.mrb[0].mxu0 %v46
  %v715 = vpop.f32.mrb[0].mxu0
  %v716 = vadd.f32 %v34, %v715
  %v717 = vpop.f32.mrb[0].mxu0
  %v718 = vadd.f32 %v34, %v717
  %719 = vmatprep.mubr.f32.mxu0 0.0
  %720 = vmatmul.mubr.f32.gmra.mrb[0].mxu0 %v49
  %v721 = vpop.f32.mrb[0].mxu0
  %v722 = vadd.f32 %v39, %v721
  %v723 = vpop.f32.mrb[0].mxu0
  %v724 = vadd.f32 %v39, %v723
  %725 = vdwg.mxu0
  %726 = vmatprep.subr.mxu0 0.0
  %727 = vmatpush1.msra.mxu0 %v630
  %728 = vmatprep.subr.mxu0 0.0
  %729 = vmatpush1.msra.mxu0 %v641
  %730 = vmatprep.subr.mxu0 0.0
  %731 = vmatpush1.msra.mxu0 0.0
  %732 = vmatprep.subr.mxu0 0.0
  %733 = vmatpush1.msra.mxu0 0.0
  %734 = vmatprep.subr.mxu0 0.0
  %735 = vmatpush1.msra.mxu0 0.0
  %736 = vmatprep.subr.mxu0 0.0
  %737 = vmatpush1.msra.mxu0 0.0
  %738 = vmatprep.subr.mxu0 0.0
  %739 = vmatpush1.msra.mxu0 0.0
  %740 = vmatprep.subr.mxu0 0.0
  %741 = vmatpush1.msra.mxu0 0.0
  %742 = vmatprep.subr.mxu0 0.0
  %743 = vmatpush1.msra.mxu0 0.0
  %744 = vmatprep.subr.mxu0 0.0
  %745 = vmatpush1.msra.mxu0 0.0
  %746 = vmatprep.subr.mxu0 0.0
  %747 = vmatpush1.msra.mxu0 0.0
  %748 = vmatprep.subr.mxu0 0.0
  %749 = vmatpush1.msra.mxu0 0.0
  %750 = vmatprep.subr.mxu0 0.0
  %751 = vmatpush1.msra.mxu0 0.0
  %752 = vmatprep.subr.mxu0 0.0
  %753 = vmatpush1.msra.mxu0 0.0
  %754 = vmatprep.subr.mxu0 0.0
  %755 = vmatpush1.msra.mxu0 0.0
  %756 = vmatprep.subr.mxu0 0.0
  %757 = vmatpush1.msra.mxu0 0.0
  %758 = vmatprep.subr.mxu0 0.0
  %759 = vmatpush1.msra.mxu0 0.0
  %760 = vmatprep.subr.mxu0 0.0
  %761 = vmatpush1.msra.mxu0 0.0
  %762 = vmatprep.subr.mxu0 0.0
  %763 = vmatpush1.msra.mxu0 0.0
  %764 = vmatprep.subr.mxu0 0.0
  %765 = vmatpush1.msra.mxu0 0.0
  %766 = vmatprep.subr.mxu0 0.0
  %767 = vmatpush1.msra.mxu0 0.0
  %768 = vmatprep.subr.mxu0 0.0
  %769 = vmatpush1.msra.mxu0 0.0
  %770 = vmatprep.subr.mxu0 0.0
  %771 = vmatpush1.msra.mxu0 0.0
  %772 = vmatprep.subr.mxu0 0.0
  %773 = vmatpush1.msra.mxu0 0.0
  %774 = vmatprep.subr.mxu0 0.0
  %775 = vmatpush1.msra.mxu0 0.0
  %776 = vmatprep.subr.mxu0 0.0
  %777 = vmatpush1.msra.mxu0 0.0
  %778 = vmatprep.subr.mxu0 0.0
  %779 = vmatpush1.msra.mxu0 0.0
  %780 = vmatprep.subr.mxu0 0.0
  %781 = vmatpush1.msra.mxu0 0.0
  %782 = vmatprep.subr.mxu0 0.0
  %783 = vmatpush1.msra.mxu0 0.0
  %784 = vmatprep.subr.mxu0 0.0
  %785 = vmatpush1.msra.mxu0 0.0
  %786 = vmatprep.subr.mxu0 0.0
  %787 = vmatpush1.msra.mxu0 0.0
  %788 = vmatprep.subr.mxu0 0.0
  %789 = vmatpush1.msra.mxu0 0.0
  %790 = vmatprep.mubr.f32.mxu0 0.0
  %791 = vmatmul.mubr.f32.gmra.mrb[0].mxu0 %v43
  %v792 = vpop.f32.mrb[0].mxu0
  %v793 = vadd.f32 %v29, %v792
  %v794 = vpop.f32.mrb[0].mxu0
  %795 = vmatprep.mubr.f32.mxu0 0.0
  %796 = vmatmul.mubr.f32.gmra.mrb[0].mxu0 %v46
  %v797 = vpop.f32.mrb[0].mxu0
  %v798 = vadd.f32 %v34, %v797
  %v799 = vpop.f32.mrb[0].mxu0
  %800 = vmatprep.mubr.f32.mxu0 0.0
  %801 = vmatmul.mubr.f32.gmra.mrb[0].mxu0 %v49
  %v802 = vpop.f32.mrb[0].mxu0
  %v803 = vadd.f32 %v39, %v802
  %v804 = vpop.f32.mrb[0].mxu0
  %805 = vdwg.mxu0
  %v806 = vmax.f32 %v710, 0.0
  %v807 = vmax.f32 %v712, 0.0
  %v808 = vmax.f32 %v793, 0.0
  %v809 = vmax.f32 %v716, 0.0
  %v810 = vmax.f32 %v718, 0.0
  %v811 = vmax.f32 %v798, 0.0
  %v812 = vmax.f32 %v722, 0.0
  %v813 = vmax.f32 %v724, 0.0
  %v814 = vmax.f32 %v803, 0.0
  %v815 = vmax.f32 %v618, %v806
  %v816 = vmax.f32 %v619, %v807
  %v817 = vmax.f32 %v620, %v808
  %v818 = vmax.f32 %v621, %v809
  %v819 = vmax.f32 %v622, %v810
  %v820 = vmax.f32 %v623, %v811
  %v821 = vmax.f32 %v624, %v812
  %v822 = vmax.f32 %v625, %v813
  %v823 = vmax.f32 %v626, %v814
  %824 = vst [vmem:[%s3] sm:$0xff] %v815
  %825 = vst [vmem:[%s3 + $0x8] sm:$0xff] %v816
  %vm826 = vcmask 670720
  %827 = vst.msk [vmem:[%s3 + $0x10] sm:$0xff] %vm826, %v817
  %828 = vst [vmem:[%s3 + $0x18] sm:$0xff] %v818
  %829 = vst [vmem:[%s3 + $0x20] sm:$0xff] %v819
  %830 = vst.msk [vmem:[%s3 + $0x28] sm:$0xff] %vm826, %v820
  %831 = vst [vmem:[%s3 + $0x30] sm:$0xf] %v821
  %832 = vst [vmem:[%s3 + $0x38] sm:$0xf] %v822
  %vm833 = vcmask 666624
  %834 = vst.msk [vmem:[%s3 + $0x40] sm:$0xf] %vm833, %v823
  // Predicated region
  $region14: #{my_cnn_forward.2} parent=0 // pred_check
    _
  $region15: #{my_cnn_forward.2} parent=0 // pred_check_branch
    %836 = sbr.rel (0) target = $region17
  $region16: #{my_cnn_forward.2} parent=0 // pred_region
    _
  $region17: #{my_cnn_forward.2} parent=0 // pred_fallthru
    _
  // Predicated region
  $region18: #{my_cnn_forward.2} parent=0 // pred_check
    _
  $region19: #{my_cnn_forward.2} parent=0 // pred_check_branch
    %838 = sbr.rel (0) target = $region21
  $region20: #{my_cnn_forward.2} parent=0 // pred_region
    _
  $region21: #{my_cnn_forward.2} parent=0 // pred_fallthru
    _

// kernel: my_cnn_forward.3
$region0: #{my_cnn_forward.3}
  #allocation0 [shape = 'u32[]', space=smem, size = 0x4, offset = 0x4, fixed_abs, tag = 'smem constant byte address 0x4 - core index']
  #allocation1 [shape = 'u32[144,128]{1,0:T(1,128)}', space=vmem, size = 0x12000, scoped, tag = 'internal scratch']
  %s0 = inlined_call_operand.vmem [shape: f32[20,2,169], index: 0, kind: input, shape index: {}]
  %s1 = inlined_call_operand.vmem [shape: f32[20,169,32], index: 1, kind: input, shape index: {}]
  %s2 = inlined_call_operand.vmem [shape: f32[1,32], index: 2, kind: input, shape index: {}]
  %s3 = inlined_call_operand.vmem [shape: f32[32,10], index: 3, kind: input, shape index: {}]
  %s4 = inlined_call_operand.vmem [shape: f32[1,10], index: 4, kind: input, shape index: {}]
  %s5 = inlined_call_operand.hbm [shape: f32[2,10], index: 5, kind: output, shape index: {}]
  %s6 = sld [smem:[#allocation0]]
  $region30: #{my_cnn_forward.3} parent=0
    _
  %s8 = ssub.s32 1, %s6
  %s9 = scalar_select 0, %s8, %s6
  $region1: #{my_cnn_forward.3} parent=0
    #allocation2 [shape = 'u8[1024]{0}', space=vmem, size = 0x400, scoped, tag = 'output window, operand 0, single buffered']
    #allocation3 [shape = 's32[1]{0}', space=sflag, size = 0x4, scoped, tag = 'scoped memory for my_cnn_forward.3']
    %10 = vsyncpa [#allocation3], 0
    // Predicated region
    $region2: #{my_cnn_forward.3} parent=1 // pred_check
      _
    $region3: #{my_cnn_forward.3} parent=1 // pred_check_branch
      %12 = sbr.rel (0) target = $region5
    $region4: #{my_cnn_forward.3} parent=1 // pred_region
      _
    $region5: #{my_cnn_forward.3} parent=1 // pred_fallthru
      _
    // Predicated region
    $region6: #{my_cnn_forward.3} parent=1 // pred_check
      _
    $region7: #{my_cnn_forward.3} parent=1 // pred_check_branch
      %14 = sbr.rel (0) target = $region9
    $region8: #{my_cnn_forward.3} parent=1 // pred_region
      _
    $region9: #{my_cnn_forward.3} parent=1 // pred_fallthru
      _
    // Predicated region
    $region10: #{my_cnn_forward.3} parent=1 // pred_check
      _
    $region11: #{my_cnn_forward.3} parent=1 // pred_check_branch
      %16 = sbr.rel (0) target = $region13
    $region12: #{my_cnn_forward.3} parent=1 // pred_region
      _
    $region13: #{my_cnn_forward.3} parent=1 // pred_fallthru
      _
    // Predicated region
    $region14: #{my_cnn_forward.3} parent=1 // pred_check
      _
    $region15: #{my_cnn_forward.3} parent=1 // pred_check_branch
      %18 = sbr.rel (0) target = $region17
    $region16: #{my_cnn_forward.3} parent=1 // pred_region
      _
    $region17: #{my_cnn_forward.3} parent=1 // pred_fallthru
      _
    // Predicated region
    $region18: #{my_cnn_forward.3} parent=1 // pred_check
      _
    $region19: #{my_cnn_forward.3} parent=1 // pred_check_branch
      %20 = sbr.rel (0) target = $region21
    $region20: #{my_cnn_forward.3} parent=1 // pred_region
      _
    $region21: #{my_cnn_forward.3} parent=1 // pred_fallthru
      _
    %v21 = vld [vmem:[%s0] sm:$0xf]
    %v22 = vld [vmem:[%s1] sm:$0xff]
    %v23 = vld [vmem:[%s1 + $0x8] sm:$0xff]
    %v24 = vld [vmem:[%s1 + $0x10] sm:$0xff]
    %v25 = vld [vmem:[%s1 + $0x18] sm:$0xff]
    %v26 = vld [vmem:[%s1 + $0x20] sm:$0xff]
    %v27 = vld [vmem:[%s1 + $0x28] sm:$0xff]
    %v28 = vld [vmem:[%s1 + $0x30] sm:$0xff]
    %v29 = vld [vmem:[%s1 + $0x38] sm:$0xff]
    %v30 = vld [vmem:[%s1 + $0x40] sm:$0xff]
    %v31 = vld [vmem:[%s1 + $0x48] sm:$0xff]
    %v32 = vld [vmem:[%s1 + $0x50] sm:$0xff]
    %v33 = vld [vmem:[%s1 + $0x58] sm:$0xff]
    %v34 = vld [vmem:[%s1 + $0x60] sm:$0xff]
    %v35 = vld [vmem:[%s1 + $0x68] sm:$0xff]
    %v36 = vld [vmem:[%s1 + $0x70] sm:$0xff]
    %v37 = vld [vmem:[%s1 + $0x78] sm:$0xff]
    %v38 = vld [vmem:[%s1 + $0x80] sm:$0xff]
    %v39 = vld [vmem:[%s1 + $0x88] sm:$0xff]
    %v40 = vld [vmem:[%s1 + $0x90] sm:$0xff]
    %v41 = vld [vmem:[%s1 + $0x98] sm:$0xff]
    %v42 = vld [vmem:[%s1 + $0xa0] sm:$0xff]
    %v43 = vld [vmem:[%s1 + $0xa8] sm:$0x1]
    %s44 = scalar_lea.vmem %s0, 4
    %v45 = vld [vmem:[%s44] sm:$0xf]
    %s46 = scalar_lea.vmem %s1, 176
    %v47 = vld [vmem:[%s46] sm:$0xff]
    %v48 = vld [vmem:[%s46 + $0x8] sm:$0xff]
    %v49 = vld [vmem:[%s46 + $0x10] sm:$0xff]
    %v50 = vld [vmem:[%s46 + $0x18] sm:$0xff]
    %v51 = vld [vmem:[%s46 + $0x20] sm:$0xff]
    %v52 = vld [vmem:[%s46 + $0x28] sm:$0xff]
    %v53 = vld [vmem:[%s46 + $0x30] sm:$0xff]
    %v54 = vld [vmem:[%s46 + $0x38] sm:$0xff]
    %v55 = vld [vmem:[%s46 + $0x40] sm:$0xff]
    %v56 = vld [vmem:[%s46 + $0x48] sm:$0xff]
    %v57 = vld [vmem:[%s46 + $0x50] sm:$0xff]
    %v58 = vld [vmem:[%s46 + $0x58] sm:$0xff]
    %v59 = vld [vmem:[%s46 + $0x60] sm:$0xff]
    %v60 = vld [vmem:[%s46 + $0x68] sm:$0xff]
    %v61 = vld [vmem:[%s46 + $0x70] sm:$0xff]
    %v62 = vld [vmem:[%s46 + $0x78] sm:$0xff]
    %v63 = vld [vmem:[%s46 + $0x80] sm:$0xff]
    %v64 = vld [vmem:[%s46 + $0x88] sm:$0xff]
    %v65 = vld [vmem:[%s46 + $0x90] sm:$0xff]
    %v66 = vld [vmem:[%s46 + $0x98] sm:$0xff]
    %v67 = vld [vmem:[%s46 + $0xa0] sm:$0xff]
    %v68 = vld [vmem:[%s46 + $0xa8] sm:$0x1]
    %v71 = vunpack.c.l.s4 1983009808
    %v72 = vunpack.c.0.s8 %v71
    %v73 = vlaneseq
    %v74 = vshrl.u32 %v73, 7
    %v75 = vsub.s32 %v72, %v74
    %v76 = vrot.slane %v45, %v75
    %v77 = vcombine.high %v76, %v76
    %vm79 = vcmask 334848
    %v80 = vsel %vm79, %v77, 0
    %vm82 = vcmask 1040384
    %v84 = vsel %vm82, %v68, 0
    %86 = vmatprep.subr.mxu0 0.0
    %87 = vmatpush1.msra.mxu0 %v47
    %88 = vmatprep.subr.mxu0 0.0
    %89 = vmatpush1.msra.mxu0 %v48
    %90 = vmatprep.subr.mxu0 0.0
    %91 = vmatpush1.msra.mxu0 %v49
    %92 = vmatprep.subr.mxu0 0.0
    %93 = vmatpush1.msra.mxu0 %v50
    %94 = vmatprep.subr.mxu0 0.0
    %95 = vmatpush1.msra.mxu0 %v51
    %96 = vmatprep.subr.mxu0 0.0
    %97 = vmatpush1.msra.mxu0 %v52
    %98 = vmatprep.subr.mxu0 0.0
    %99 = vmatpush1.msra.mxu0 %v53
    %100 = vmatprep.subr.mxu0 0.0
    %101 = vmatpush1.msra.mxu0 %v54
    %102 = vmatprep.subr.mxu0 0.0
    %103 = vmatpush1.msra.mxu0 %v55
    %104 = vmatprep.subr.mxu0 0.0
    %105 = vmatpush1.msra.mxu0 %v56
    %106 = vmatprep.subr.mxu0 0.0
    %107 = vmatpush1.msra.mxu0 %v57
    %108 = vmatprep.subr.mxu0 0.0
    %109 = vmatpush1.msra.mxu0 %v58
    %110 = vmatprep.subr.mxu0 0.0
    %111 = vmatpush1.msra.mxu0 %v59
    %112 = vmatprep.subr.mxu0 0.0
    %113 = vmatpush1.msra.mxu0 %v60
    %114 = vmatprep.subr.mxu0 0.0
    %115 = vmatpush1.msra.mxu0 %v61
    %116 = vmatprep.subr.mxu0 0.0
    %117 = vmatpush1.msra.mxu0 %v62
    %118 = vmatprep.subr.mxu0 0.0
    %119 = vmatpush1.msra.mxu0 %v63
    %120 = vmatprep.subr.mxu0 0.0
    %121 = vmatpush1.msra.mxu0 %v64
    %122 = vmatprep.subr.mxu0 0.0
    %123 = vmatpush1.msra.mxu0 %v65
    %124 = vmatprep.subr.mxu0 0.0
    %125 = vmatpush1.msra.mxu0 %v66
    %126 = vmatprep.subr.mxu0 0.0
    %127 = vmatpush1.msra.mxu0 %v67
    %128 = vmatprep.subr.mxu0 0.0
    %129 = vmatpush1.msra.mxu0 %v84
    %130 = vmatprep.subr.mxu0 0.0
    %131 = vmatpush1.msra.mxu0 0.0
    %132 = vmatprep.subr.mxu0 0.0
    %133 = vmatpush1.msra.mxu0 0.0
    %134 = vmatprep.subr.mxu0 0.0
    %135 = vmatpush1.msra.mxu0 0.0
    %136 = vmatprep.subr.mxu0 0.0
    %137 = vmatpush1.msra.mxu0 0.0
    %138 = vmatprep.subr.mxu0 0.0
    %139 = vmatpush1.msra.mxu0 0.0
    %140 = vmatprep.subr.mxu0 0.0
    %141 = vmatpush1.msra.mxu0 0.0
    %142 = vmatprep.subr.mxu0 0.0
    %143 = vmatpush1.msra.mxu0 0.0
    %144 = vmatprep.subr.mxu0 0.0
    %145 = vmatpush1.msra.mxu0 0.0
    %146 = vmatprep.subr.mxu0 0.0
    %147 = vmatpush1.msra.mxu0 0.0
    %148 = vmatprep.subr.mxu0 0.0
    %149 = vmatpush1.msra.mxu0 0.0
    %150 = vmatprep.mubr.f32.mxu0 %v80
    %151 = vmatmul.mubr.f32.gmra.mrb[0].mxu0 %v76
    %v152 = vpop.f32.mrb[0].mxu0
    %v153 = vadd.f32 0.0, %v152
    %v154 = vpop.f32.mrb[0].mxu0
    %155 = vdwg.mxu0
    %v158 = vunpack.c.l.s4 1983009808
    %v159 = vunpack.c.0.s8 %v158
    %v160 = vlaneseq
    %v161 = vshrl.u32 %v160, 7
    %v162 = vsub.s32 %v159, %v161
    %v163 = vrot.slane %v21, %v162
    %v164 = vcombine.high %v163, %v163
    %v166 = vsel %vm79, %v164, 0
    %v169 = vsel %vm82, %v43, 0
    %171 = vmatprep.subr.mxu0 0.0
    %172 = vmatpush1.msra.mxu0 %v22
    %173 = vmatprep.subr.mxu0 0.0
    %174 = vmatpush1.msra.mxu0 %v23
    %175 = vmatprep.subr.mxu0 0.0
    %176 = vmatpush1.msra.mxu0 %v24
    %177 = vmatprep.subr.mxu0 0.0
    %178 = vmatpush1.msra.mxu0 %v25
    %179 = vmatprep.subr.mxu0 0.0
    %180 = vmatpush1.msra.mxu0 %v26
    %181 = vmatprep.subr.mxu0 0.0
    %182 = vmatpush1.msra.mxu0 %v27
    %183 = vmatprep.subr.mxu0 0.0
    %184 = vmatpush1.msra.mxu0 %v28
    %185 = vmatprep.subr.mxu0 0.0
    %186 = vmatpush1.msra.mxu0 %v29
    %187 = vmatprep.subr.mxu0 0.0
    %188 = vmatpush1.msra.mxu0 %v30
    %189 = vmatprep.subr.mxu0 0.0
    %190 = vmatpush1.msra.mxu0 %v31
    %191 = vmatprep.subr.mxu0 0.0
    %192 = vmatpush1.msra.mxu0 %v32
    %193 = vmatprep.subr.mxu0 0.0
    %194 = vmatpush1.msra.mxu0 %v33
    %195 = vmatprep.subr.mxu0 0.0
    %196 = vmatpush1.msra.mxu0 %v34
    %197 = vmatprep.subr.mxu0 0.0
    %198 = vmatpush1.msra.mxu0 %v35
    %199 = vmatprep.subr.mxu0 0.0
    %200 = vmatpush1.msra.mxu0 %v36
    %201 = vmatprep.subr.mxu0 0.0
    %202 = vmatpush1.msra.mxu0 %v37
    %203 = vmatprep.subr.mxu0 0.0
    %204 = vmatpush1.msra.mxu0 %v38
    %205 = vmatprep.subr.mxu0 0.0
    %206 = vmatpush1.msra.mxu0 %v39
    %207 = vmatprep.subr.mxu0 0.0
    %208 = vmatpush1.msra.mxu0 %v40
    %209 = vmatprep.subr.mxu0 0.0
    %210 = vmatpush1.msra.mxu0 %v41
    %211 = vmatprep.subr.mxu0 0.0
    %212 = vmatpush1.msra.mxu0 %v42
    %213 = vmatprep.subr.mxu0 0.0
    %214 = vmatpush1.msra.mxu0 %v169
    %215 = vmatprep.subr.mxu0 0.0
    %216 = vmatpush1.msra.mxu0 0.0
    %217 = vmatprep.subr.mxu0 0.0
    %218 = vmatpush1.msra.mxu0 0.0
    %219 = vmatprep.subr.mxu0 0.0
    %220 = vmatpush1.msra.mxu0 0.0
    %221 = vmatprep.subr.mxu0 0.0
    %222 = vmatpush1.msra.mxu0 0.0
    %223 = vmatprep.subr.mxu0 0.0
    %224 = vmatpush1.msra.mxu0 0.0
    %225 = vmatprep.subr.mxu0 0.0
    %226 = vmatpush1.msra.mxu0 0.0
    %227 = vmatprep.subr.mxu0 0.0
    %228 = vmatpush1.msra.mxu0 0.0
    %229 = vmatprep.subr.mxu0 0.0
    %230 = vmatpush1.msra.mxu0 0.0
    %231 = vmatprep.subr.mxu0 0.0
    %232 = vmatpush1.msra.mxu0 0.0
    %233 = vmatprep.subr.mxu0 0.0
    %234 = vmatpush1.msra.mxu0 0.0
    %235 = vmatprep.mubr.f32.mxu0 %v166
    %236 = vmatmul.mubr.f32.gmra.mrb[0].mxu0 %v163
    %v237 = vpop.f32.mrb[0].mxu0
    %v238 = vadd.f32 %v153, %v237
    %v239 = vpop.f32.mrb[0].mxu0
    %240 = vdwg.mxu0
    %s241 = scalar_lea.vmem %s0, 8
    %v242 = vld [vmem:[%s241] sm:$0xf]
    %s243 = scalar_lea.vmem %s1, 352
    %v244 = vld [vmem:[%s243] sm:$0xff]
    %v245 = vld [vmem:[%s243 + $0x8] sm:$0xff]
    %v246 = vld [vmem:[%s243 + $0x10] sm:$0xff]
    %v247 = vld [vmem:[%s243 + $0x18] sm:$0xff]
    %v248 = vld [vmem:[%s243 + $0x20] sm:$0xff]
    %v249 = vld [vmem:[%s243 + $0x28] sm:$0xff]
    %v250 = vld [vmem:[%s243 + $0x30] sm:$0xff]
    %v251 = vld [vmem:[%s243 + $0x38] sm:$0xff]
    %v252 = vld [vmem:[%s243 + $0x40] sm:$0xff]
    %v253 = vld [vmem:[%s243 + $0x48] sm:$0xff]
    %v254 = vld [vmem:[%s243 + $0x50] sm:$0xff]
    %v255 = vld [vmem:[%s243 + $0x58] sm:$0xff]
    %v256 = vld [vmem:[%s243 + $0x60] sm:$0xff]
    %v257 = vld [vmem:[%s243 + $0x68] sm:$0xff]
    %v258 = vld [vmem:[%s243 + $0x70] sm:$0xff]
    %v259 = vld [vmem:[%s243 + $0x78] sm:$0xff]
    %v260 = vld [vmem:[%s243 + $0x80] sm:$0xff]
    %v261 = vld [vmem:[%s243 + $0x88] sm:$0xff]
    %v262 = vld [vmem:[%s243 + $0x90] sm:$0xff]
    %v263 = vld [vmem:[%s243 + $0x98] sm:$0xff]
    %v264 = vld [vmem:[%s243 + $0xa0] sm:$0xff]
    %v265 = vld [vmem:[%s243 + $0xa8] sm:$0x1]
    %v268 = vunpack.c.l.s4 1983009808
    %v269 = vunpack.c.0.s8 %v268
    %v270 = vlaneseq
    %v271 = vshrl.u32 %v270, 7
    %v272 = vsub.s32 %v269, %v271
    %v273 = vrot.slane %v242, %v272
    %v274 = vcombine.high %v273, %v273
    %v276 = vsel %vm79, %v274, 0
    %v279 = vsel %vm82, %v265, 0
    %281 = vmatprep.subr.mxu0 0.0
    %282 = vmatpush1.msra.mxu0 %v244
    %283 = vmatprep.subr.mxu0 0.0
    %284 = vmatpush1.msra.mxu0 %v245
    %285 = vmatprep.subr.mxu0 0.0
    %286 = vmatpush1.msra.mxu0 %v246
    %287 = vmatprep.subr.mxu0 0.0
    %288 = vmatpush1.msra.mxu0 %v247
    %289 = vmatprep.subr.mxu0 0.0
    %290 = vmatpush1.msra.mxu0 %v248
    %291 = vmatprep.subr.mxu0 0.0
    %292 = vmatpush1.msra.mxu0 %v249
    %293 = vmatprep.subr.mxu0 0.0
    %294 = vmatpush1.msra.mxu0 %v250
    %295 = vmatprep.subr.mxu0 0.0
    %296 = vmatpush1.msra.mxu0 %v251
    %297 = vmatprep.subr.mxu0 0.0
    %298 = vmatpush1.msra.mxu0 %v252
    %299 = vmatprep.subr.mxu0 0.0
    %300 = vmatpush1.msra.mxu0 %v253
    %301 = vmatprep.subr.mxu0 0.0
    %302 = vmatpush1.msra.mxu0 %v254
    %303 = vmatprep.subr.mxu0 0.0
    %304 = vmatpush1.msra.mxu0 %v255
    %305 = vmatprep.subr.mxu0 0.0
    %306 = vmatpush1.msra.mxu0 %v256
    %307 = vmatprep.subr.mxu0 0.0
    %308 = vmatpush1.msra.mxu0 %v257
    %309 = vmatprep.subr.mxu0 0.0
    %310 = vmatpush1.msra.mxu0 %v258
    %311 = vmatprep.subr.mxu0 0.0
    %312 = vmatpush1.msra.mxu0 %v259
    %313 = vmatprep.subr.mxu0 0.0
    %314 = vmatpush1.msra.mxu0 %v260
    %315 = vmatprep.subr.mxu0 0.0
    %316 = vmatpush1.msra.mxu0 %v261
    %317 = vmatprep.subr.mxu0 0.0
    %318 = vmatpush1.msra.mxu0 %v262
    %319 = vmatprep.subr.mxu0 0.0
    %320 = vmatpush1.msra.mxu0 %v263
    %321 = vmatprep.subr.mxu0 0.0
    %322 = vmatpush1.msra.mxu0 %v264
    %323 = vmatprep.subr.mxu0 0.0
    %324 = vmatpush1.msra.mxu0 %v279
    %325 = vmatprep.subr.mxu0 0.0
    %326 = vmatpush1.msra.mxu0 0.0
    %327 = vmatprep.subr.mxu0 0.0
    %328 = vmatpush1.msra.mxu0 0.0
    %329 = vmatprep.subr.mxu0 0.0
    %330 = vmatpush1.msra.mxu0 0.0
    %331 = vmatprep.subr.mxu0 0.0
    %332 = vmatpush1.msra.mxu0 0.0
    %333 = vmatprep.subr.mxu0 0.0
    %334 = vmatpush1.msra.mxu0 0.0
    %335 = vmatprep.subr.mxu0 0.0
    %336 = vmatpush1.msra.mxu0 0.0
    %337 = vmatprep.subr.mxu0 0.0
    %338 = vmatpush1.msra.mxu0 0.0
    %339 = vmatprep.subr.mxu0 0.0
    %340 = vmatpush1.msra.mxu0 0.0
    %341 = vmatprep.subr.mxu0 0.0
    %342 = vmatpush1.msra.mxu0 0.0
    %343 = vmatprep.subr.mxu0 0.0
    %344 = vmatpush1.msra.mxu0 0.0
    %345 = vmatprep.mubr.f32.mxu0 %v276
    %346 = vmatmul.mubr.f32.gmra.mrb[0].mxu0 %v273
    %v347 = vpop.f32.mrb[0].mxu0
    %v348 = vadd.f32 0.0, %v347
    %v349 = vpop.f32.mrb[0].mxu0
    %350 = vdwg.mxu0
    %v351 = vadd.f32 %v238, %v348
    %s352 = scalar_lea.vmem %s0, 12
    %v353 = vld [vmem:[%s352] sm:$0xf]
    %s354 = scalar_lea.vmem %s1, 528
    %v355 = vld [vmem:[%s354] sm:$0xff]
    %v356 = vld [vmem:[%s354 + $0x8] sm:$0xff]
    %v357 = vld [vmem:[%s354 + $0x10] sm:$0xff]
    %v358 = vld [vmem:[%s354 + $0x18] sm:$0xff]
    %v359 = vld [vmem:[%s354 + $0x20] sm:$0xff]
    %v360 = vld [vmem:[%s354 + $0x28] sm:$0xff]
    %v361 = vld [vmem:[%s354 + $0x30] sm:$0xff]
    %v362 = vld [vmem:[%s354 + $0x38] sm:$0xff]
    %v363 = vld [vmem:[%s354 + $0x40] sm:$0xff]
    %v364 = vld [vmem:[%s354 + $0x48] sm:$0xff]
    %v365 = vld [vmem:[%s354 + $0x50] sm:$0xff]
    %v366 = vld [vmem:[%s354 + $0x58] sm:$0xff]
    %v367 = vld [vmem:[%s354 + $0x60] sm:$0xff]
    %v368 = vld [vmem:[%s354 + $0x68] sm:$0xff]
    %v369 = vld [vmem:[%s354 + $0x70] sm:$0xff]
    %v370 = vld [vmem:[%s354 + $0x78] sm:$0xff]
    %v371 = vld [vmem:[%s354 + $0x80] sm:$0xff]
    %v372 = vld [vmem:[%s354 + $0x88] sm:$0xff]
    %v373 = vld [vmem:[%s354 + $0x90] sm:$0xff]
    %v374 = vld [vmem:[%s354 + $0x98] sm:$0xff]
    %v375 = vld [vmem:[%s354 + $0xa0] sm:$0xff]
    %v376 = vld [vmem:[%s354 + $0xa8] sm:$0x1]
    %v379 = vunpack.c.l.s4 1983009808
    %v380 = vunpack.c.0.s8 %v379
    %v381 = vlaneseq
    %v382 = vshrl.u32 %v381, 7
    %v383 = vsub.s32 %v380, %v382
    %v384 = vrot.slane %v353, %v383
    %v385 = vcombine.high %v384, %v384
    %v387 = vsel %vm79, %v385, 0
    %v390 = vsel %vm82, %v376, 0
    %392 = vmatprep.subr.mxu0 0.0
    %393 = vmatpush1.msra.mxu0 %v355
    %394 = vmatprep.subr.mxu0 0.0
    %395 = vmatpush1.msra.mxu0 %v356
    %396 = vmatprep.subr.mxu0 0.0
    %397 = vmatpush1.msra.mxu0 %v357
    %398 = vmatprep.subr.mxu0 0.0
    %399 = vmatpush1.msra.mxu0 %v358
    %400 = vmatprep.subr.mxu0 0.0
    %401 = vmatpush1.msra.mxu0 %v359
    %402 = vmatprep.subr.mxu0 0.0
    %403 = vmatpush1.msra.mxu0 %v360
    %404 = vmatprep.subr.mxu0 0.0
    %405 = vmatpush1.msra.mxu0 %v361
    %406 = vmatprep.subr.mxu0 0.0
    %407 = vmatpush1.msra.mxu0 %v362
    %408 = vmatprep.subr.mxu0 0.0
    %409 = vmatpush1.msra.mxu0 %v363
    %410 = vmatprep.subr.mxu0 0.0
    %411 = vmatpush1.msra.mxu0 %v364
    %412 = vmatprep.subr.mxu0 0.0
    %413 = vmatpush1.msra.mxu0 %v365
    %414 = vmatprep.subr.mxu0 0.0
    %415 = vmatpush1.msra.mxu0 %v366
    %416 = vmatprep.subr.mxu0 0.0
    %417 = vmatpush1.msra.mxu0 %v367
    %418 = vmatprep.subr.mxu0 0.0
    %419 = vmatpush1.msra.mxu0 %v368
    %420 = vmatprep.subr.mxu0 0.0
    %421 = vmatpush1.msra.mxu0 %v369
    %422 = vmatprep.subr.mxu0 0.0
    %423 = vmatpush1.msra.mxu0 %v370
    %424 = vmatprep.subr.mxu0 0.0
    %425 = vmatpush1.msra.mxu0 %v371
    %426 = vmatprep.subr.mxu0 0.0
    %427 = vmatpush1.msra.mxu0 %v372
    %428 = vmatprep.subr.mxu0 0.0
    %429 = vmatpush1.msra.mxu0 %v373
    %430 = vmatprep.subr.mxu0 0.0
    %431 = vmatpush1.msra.mxu0 %v374
    %432 = vmatprep.subr.mxu0 0.0
    %433 = vmatpush1.msra.mxu0 %v375
    %434 = vmatprep.subr.mxu0 0.0
    %435 = vmatpush1.msra.mxu0 %v390
    %436 = vmatprep.subr.mxu0 0.0
    %437 = vmatpush1.msra.mxu0 0.0
    %438 = vmatprep.subr.mxu0 0.0
    %439 = vmatpush1.msra.mxu0 0.0
    %440 = vmatprep.subr.mxu0 0.0
    %441 = vmatpush1.msra.mxu0 0.0
    %442 = vmatprep.subr.mxu0 0.0
    %443 = vmatpush1.msra.mxu0 0.0
    %444 = vmatprep.subr.mxu0 0.0
    %445 = vmatpush1.msra.mxu0 0.0
    %446 = vmatprep.subr.mxu0 0.0
    %447 = vmatpush1.msra.mxu0 0.0
    %448 = vmatprep.subr.mxu0 0.0
    %449 = vmatpush1.msra.mxu0 0.0
    %450 = vmatprep.subr.mxu0 0.0
    %451 = vmatpush1.msra.mxu0 0.0
    %452 = vmatprep.subr.mxu0 0.0
    %453 = vmatpush1.msra.mxu0 0.0
    %454 = vmatprep.subr.mxu0 0.0
    %455 = vmatpush1.msra.mxu0 0.0
    %456 = vmatprep.mubr.f32.mxu0 %v387
    %457 = vmatmul.mubr.f32.gmra.mrb[0].mxu0 %v384
    %v458 = vpop.f32.mrb[0].mxu0
    %v459 = vadd.f32 0.0, %v458
    %v460 = vpop.f32.mrb[0].mxu0
    %461 = vdwg.mxu0
    %v462 = vadd.f32 %v351, %v459
    %s463 = scalar_lea.vmem %s0, 16
    %v464 = vld [vmem:[%s463] sm:$0xf]
    %s465 = scalar_lea.vmem %s1, 704
    %v466 = vld [vmem:[%s465] sm:$0xff]
    %v467 = vld [vmem:[%s465 + $0x8] sm:$0xff]
    %v468 = vld [vmem:[%s465 + $0x10] sm:$0xff]
    %v469 = vld [vmem:[%s465 + $0x18] sm:$0xff]
    %v470 = vld [vmem:[%s465 + $0x20] sm:$0xff]
    %v471 = vld [vmem:[%s465 + $0x28] sm:$0xff]
    %v472 = vld [vmem:[%s465 + $0x30] sm:$0xff]
    %v473 = vld [vmem:[%s465 + $0x38] sm:$0xff]
    %v474 = vld [vmem:[%s465 + $0x40] sm:$0xff]
    %v475 = vld [vmem:[%s465 + $0x48] sm:$0xff]
    %v476 = vld [vmem:[%s465 + $0x50] sm:$0xff]
    %v477 = vld [vmem:[%s465 + $0x58] sm:$0xff]
    %v478 = vld [vmem:[%s465 + $0x60] sm:$0xff]
    %v479 = vld [vmem:[%s465 + $0x68] sm:$0xff]
    %v480 = vld [vmem:[%s465 + $0x70] sm:$0xff]
    %v481 = vld [vmem:[%s465 + $0x78] sm:$0xff]
    %v482 = vld [vmem:[%s465 + $0x80] sm:$0xff]
    %v483 = vld [vmem:[%s465 + $0x88] sm:$0xff]
    %v484 = vld [vmem:[%s465 + $0x90] sm:$0xff]
    %v485 = vld [vmem:[%s465 + $0x98] sm:$0xff]
    %v486 = vld [vmem:[%s465 + $0xa0] sm:$0xff]
    %v487 = vld [vmem:[%s465 + $0xa8] sm:$0x1]
    %v490 = vunpack.c.l.s4 1983009808
    %v491 = vunpack.c.0.s8 %v490
    %v492 = vlaneseq
    %v493 = vshrl.u32 %v492, 7
    %v494 = vsub.s32 %v491, %v493
    %v495 = vrot.slane %v464, %v494
    %v496 = vcombine.high %v495, %v495
    %v498 = vsel %vm79, %v496, 0
    %v501 = vsel %vm82, %v487, 0
    %503 = vmatprep.subr.mxu0 0.0
    %504 = vmatpush1.msra.mxu0 %v466
    %505 = vmatprep.subr.mxu0 0.0
    %506 = vmatpush1.msra.mxu0 %v467
    %507 = vmatprep.subr.mxu0 0.0
    %508 = vmatpush1.msra.mxu0 %v468
    %509 = vmatprep.subr.mxu0 0.0
    %510 = vmatpush1.msra.mxu0 %v469
    %511 = vmatprep.subr.mxu0 0.0
    %512 = vmatpush1.msra.mxu0 %v470
    %513 = vmatprep.subr.mxu0 0.0
    %514 = vmatpush1.msra.mxu0 %v471
    %515 = vmatprep.subr.mxu0 0.0
    %516 = vmatpush1.msra.mxu0 %v472
    %517 = vmatprep.subr.mxu0 0.0
    %518 = vmatpush1.msra.mxu0 %v473
    %519 = vmatprep.subr.mxu0 0.0
    %520 = vmatpush1.msra.mxu0 %v474
    %521 = vmatprep.subr.mxu0 0.0
    %522 = vmatpush1.msra.mxu0 %v475
    %523 = vmatprep.subr.mxu0 0.0
    %524 = vmatpush1.msra.mxu0 %v476
    %525 = vmatprep.subr.mxu0 0.0
    %526 = vmatpush1.msra.mxu0 %v477
    %527 = vmatprep.subr.mxu0 0.0
    %528 = vmatpush1.msra.mxu0 %v478
    %529 = vmatprep.subr.mxu0 0.0
    %530 = vmatpush1.msra.mxu0 %v479
    %531 = vmatprep.subr.mxu0 0.0
    %532 = vmatpush1.msra.mxu0 %v480
    %533 = vmatprep.subr.mxu0 0.0
    %534 = vmatpush1.msra.mxu0 %v481
    %535 = vmatprep.subr.mxu0 0.0
    %536 = vmatpush1.msra.mxu0 %v482
    %537 = vmatprep.subr.mxu0 0.0
    %538 = vmatpush1.msra.mxu0 %v483
    %539 = vmatprep.subr.mxu0 0.0
    %540 = vmatpush1.msra.mxu0 %v484
    %541 = vmatprep.subr.mxu0 0.0
    %542 = vmatpush1.msra.mxu0 %v485
    %543 = vmatprep.subr.mxu0 0.0
    %544 = vmatpush1.msra.mxu0 %v486
    %545 = vmatprep.subr.mxu0 0.0
    %546 = vmatpush1.msra.mxu0 %v501
    %547 = vmatprep.subr.mxu0 0.0
    %548 = vmatpush1.msra.mxu0 0.0
    %549 = vmatprep.subr.mxu0 0.0
    %550 = vmatpush1.msra.mxu0 0.0
    %551 = vmatprep.subr.mxu0 0.0
    %552 = vmatpush1.msra.mxu0 0.0
    %553 = vmatprep.subr.mxu0 0.0
    %554 = vmatpush1.msra.mxu0 0.0
    %555 = vmatprep.subr.mxu0 0.0
    %556 = vmatpush1.msra.mxu0 0.0
    %557 = vmatprep.subr.mxu0 0.0
    %558 = vmatpush1.msra.mxu0 0.0
    %559 = vmatprep.subr.mxu0 0.0
    %560 = vmatpush1.msra.mxu0 0.0
    %561 = vmatprep.subr.mxu0 0.0
    %562 = vmatpush1.msra.mxu0 0.0
    %563 = vmatprep.subr.mxu0 0.0
    %564 = vmatpush1.msra.mxu0 0.0
    %565 = vmatprep.subr.mxu0 0.0
    %566 = vmatpush1.msra.mxu0 0.0
    %567 = vmatprep.mubr.f32.mxu0 %v498
    %568 = vmatmul.mubr.f32.gmra.mrb[0].mxu0 %v495
    %v569 = vpop.f32.mrb[0].mxu0
    %v570 = vadd.f32 0.0, %v569
    %v571 = vpop.f32.mrb[0].mxu0
    %572 = vdwg.mxu0
    %v573 = vadd.f32 %v462, %v570
    %s574 = scalar_lea.vmem %s0, 20
    %v575 = vld [vmem:[%s574] sm:$0xf]
    %s576 = scalar_lea.vmem %s1, 880
    %v577 = vld [vmem:[%s576] sm:$0xff]
    %v578 = vld [vmem:[%s576 + $0x8] sm:$0xff]
    %v579 = vld [vmem:[%s576 + $0x10] sm:$0xff]
    %v580 = vld [vmem:[%s576 + $0x18] sm:$0xff]
    %v581 = vld [vmem:[%s576 + $0x20] sm:$0xff]
    %v582 = vld [vmem:[%s576 + $0x28] sm:$0xff]
    %v583 = vld [vmem:[%s576 + $0x30] sm:$0xff]
    %v584 = vld [vmem:[%s576 + $0x38] sm:$0xff]
    %v585 = vld [vmem:[%s576 + $0x40] sm:$0xff]
    %v586 = vld [vmem:[%s576 + $0x48] sm:$0xff]
    %v587 = vld [vmem:[%s576 + $0x50] sm:$0xff]
    %v588 = vld [vmem:[%s576 + $0x58] sm:$0xff]
    %v589 = vld [vmem:[%s576 + $0x60] sm:$0xff]
    %v590 = vld [vmem:[%s576 + $0x68] sm:$0xff]
    %v591 = vld [vmem:[%s576 + $0x70] sm:$0xff]
    %v592 = vld [vmem:[%s576 + $0x78] sm:$0xff]
    %v593 = vld [vmem:[%s576 + $0x80] sm:$0xff]
    %v594 = vld [vmem:[%s576 + $0x88] sm:$0xff]
    %v595 = vld [vmem:[%s576 + $0x90] sm:$0xff]
    %v596 = vld [vmem:[%s576 + $0x98] sm:$0xff]
    %v597 = vld [vmem:[%s576 + $0xa0] sm:$0xff]
    %v598 = vld [vmem:[%s576 + $0xa8] sm:$0x1]
    %v601 = vunpack.c.l.s4 1983009808
    %v602 = vunpack.c.0.s8 %v601
    %v603 = vlaneseq
    %v604 = vshrl.u32 %v603, 7
    %v605 = vsub.s32 %v602, %v604
    %v606 = vrot.slane %v575, %v605
    %v607 = vcombine.high %v606, %v606
    %v609 = vsel %vm79, %v607, 0
    %v612 = vsel %vm82, %v598, 0
    %614 = vmatprep.subr.mxu0 0.0
    %615 = vmatpush1.msra.mxu0 %v577
    %616 = vmatprep.subr.mxu0 0.0
    %617 = vmatpush1.msra.mxu0 %v578
    %618 = vmatprep.subr.mxu0 0.0
    %619 = vmatpush1.msra.mxu0 %v579
    %620 = vmatprep.subr.mxu0 0.0
    %621 = vmatpush1.msra.mxu0 %v580
    %622 = vmatprep.subr.mxu0 0.0
    %623 = vmatpush1.msra.mxu0 %v581
    %624 = vmatprep.subr.mxu0 0.0
    %625 = vmatpush1.msra.mxu0 %v582
    %626 = vmatprep.subr.mxu0 0.0
    %627 = vmatpush1.msra.mxu0 %v583
    %628 = vmatprep.subr.mxu0 0.0
    %629 = vmatpush1.msra.mxu0 %v584
    %630 = vmatprep.subr.mxu0 0.0
    %631 = vmatpush1.msra.mxu0 %v585
    %632 = vmatprep.subr.mxu0 0.0
    %633 = vmatpush1.msra.mxu0 %v586
    %634 = vmatprep.subr.mxu0 0.0
    %635 = vmatpush1.msra.mxu0 %v587
    %636 = vmatprep.subr.mxu0 0.0
    %637 = vmatpush1.msra.mxu0 %v588
    %638 = vmatprep.subr.mxu0 0.0
    %639 = vmatpush1.msra.mxu0 %v589
    %640 = vmatprep.subr.mxu0 0.0
    %641 = vmatpush1.msra.mxu0 %v590
    %642 = vmatprep.subr.mxu0 0.0
    %643 = vmatpush1.msra.mxu0 %v591
    %644 = vmatprep.subr.mxu0 0.0
    %645 = vmatpush1.msra.mxu0 %v592
    %646 = vmatprep.subr.mxu0 0.0
    %647 = vmatpush1.msra.mxu0 %v593
    %648 = vmatprep.subr.mxu0 0.0
    %649 = vmatpush1.msra.mxu0 %v594
    %650 = vmatprep.subr.mxu0 0.0
    %651 = vmatpush1.msra.mxu0 %v595
    %652 = vmatprep.subr.mxu0 0.0
    %653 = vmatpush1.msra.mxu0 %v596
    %654 = vmatprep.subr.mxu0 0.0
    %655 = vmatpush1.msra.mxu0 %v597
    %656 = vmatprep.subr.mxu0 0.0
    %657 = vmatpush1.msra.mxu0 %v612
    %658 = vmatprep.subr.mxu0 0.0
    %659 = vmatpush1.msra.mxu0 0.0
    %660 = vmatprep.subr.mxu0 0.0
    %661 = vmatpush1.msra.mxu0 0.0
    %662 = vmatprep.subr.mxu0 0.0
    %663 = vmatpush1.msra.mxu0 0.0
    %664 = vmatprep.subr.mxu0 0.0
    %665 = vmatpush1.msra.mxu0 0.0
    %666 = vmatprep.subr.mxu0 0.0
    %667 = vmatpush1.msra.mxu0 0.0
    %668 = vmatprep.subr.mxu0 0.0
    %669 = vmatpush1.msra.mxu0 0.0
    %670 = vmatprep.subr.mxu0 0.0
    %671 = vmatpush1.msra.mxu0 0.0
    %672 = vmatprep.subr.mxu0 0.0
    %673 = vmatpush1.msra.mxu0 0.0
    %674 = vmatprep.subr.mxu0 0.0
    %675 = vmatpush1.msra.mxu0 0.0
    %676 = vmatprep.subr.mxu0 0.0
    %677 = vmatpush1.msra.mxu0 0.0
    %678 = vmatprep.mubr.f32.mxu0 %v609
    %679 = vmatmul.mubr.f32.gmra.mrb[0].mxu0 %v606
    %v680 = vpop.f32.mrb[0].mxu0
    %v681 = vadd.f32 0.0, %v680
    %v682 = vpop.f32.mrb[0].mxu0
    %683 = vdwg.mxu0
    %v684 = vadd.f32 %v573, %v681
    %s685 = scalar_lea.vmem %s0, 24
    %v686 = vld [vmem:[%s685] sm:$0xf]
    %s687 = scalar_lea.vmem %s1, 1056
    %v688 = vld [vmem:[%s687] sm:$0xff]
    %v689 = vld [vmem:[%s687 + $0x8] sm:$0xff]
    %v690 = vld [vmem:[%s687 + $0x10] sm:$0xff]
    %v691 = vld [vmem:[%s687 + $0x18] sm:$0xff]
    %v692 = vld [vmem:[%s687 + $0x20] sm:$0xff]
    %v693 = vld [vmem:[%s687 + $0x28] sm:$0xff]
    %v694 = vld [vmem:[%s687 + $0x30] sm:$0xff]
    %v695 = vld [vmem:[%s687 + $0x38] sm:$0xff]
    %v696 = vld [vmem:[%s687 + $0x40] sm:$0xff]
    %v697 = vld [vmem:[%s687 + $0x48] sm:$0xff]
    %v698 = vld [vmem:[%s687 + $0x50] sm:$0xff]
    %v699 = vld [vmem:[%s687 + $0x58] sm:$0xff]
    %v700 = vld [vmem:[%s687 + $0x60] sm:$0xff]
    %v701 = vld [vmem:[%s687 + $0x68] sm:$0xff]
    %v702 = vld [vmem:[%s687 + $0x70] sm:$0xff]
    %v703 = vld [vmem:[%s687 + $0x78] sm:$0xff]
    %v704 = vld [vmem:[%s687 + $0x80] sm:$0xff]
    %v705 = vld [vmem:[%s687 + $0x88] sm:$0xff]
    %v706 = vld [vmem:[%s687 + $0x90] sm:$0xff]
    %v707 = vld [vmem:[%s687 + $0x98] sm:$0xff]
    %v708 = vld [vmem:[%s687 + $0xa0] sm:$0xff]
    %v709 = vld [vmem:[%s687 + $0xa8] sm:$0x1]
    %v712 = vunpack.c.l.s4 1983009808
    %v713 = vunpack.c.0.s8 %v712
    %v714 = vlaneseq
    %v715 = vshrl.u32 %v714, 7
    %v716 = vsub.s32 %v713, %v715
    %v717 = vrot.slane %v686, %v716
    %v718 = vcombine.high %v717, %v717
    %v720 = vsel %vm79, %v718, 0
    %v723 = vsel %vm82, %v709, 0
    %725 = vmatprep.subr.mxu0 0.0
    %726 = vmatpush1.msra.mxu0 %v688
    %727 = vmatprep.subr.mxu0 0.0
    %728 = vmatpush1.msra.mxu0 %v689
    %729 = vmatprep.subr.mxu0 0.0
    %730 = vmatpush1.msra.mxu0 %v690
    %731 = vmatprep.subr.mxu0 0.0
    %732 = vmatpush1.msra.mxu0 %v691
    %733 = vmatprep.subr.mxu0 0.0
    %734 = vmatpush1.msra.mxu0 %v692
    %735 = vmatprep.subr.mxu0 0.0
    %736 = vmatpush1.msra.mxu0 %v693
    %737 = vmatprep.subr.mxu0 0.0
    %738 = vmatpush1.msra.mxu0 %v694
    %739 = vmatprep.subr.mxu0 0.0
    %740 = vmatpush1.msra.mxu0 %v695
    %741 = vmatprep.subr.mxu0 0.0
    %742 = vmatpush1.msra.mxu0 %v696
    %743 = vmatprep.subr.mxu0 0.0
    %744 = vmatpush1.msra.mxu0 %v697
    %745 = vmatprep.subr.mxu0 0.0
    %746 = vmatpush1.msra.mxu0 %v698
    %747 = vmatprep.subr.mxu0 0.0
    %748 = vmatpush1.msra.mxu0 %v699
    %749 = vmatprep.subr.mxu0 0.0
    %750 = vmatpush1.msra.mxu0 %v700
    %751 = vmatprep.subr.mxu0 0.0
    %752 = vmatpush1.msra.mxu0 %v701
    %753 = vmatprep.subr.mxu0 0.0
    %754 = vmatpush1.msra.mxu0 %v702
    %755 = vmatprep.subr.mxu0 0.0
    %756 = vmatpush1.msra.mxu0 %v703
    %757 = vmatprep.subr.mxu0 0.0
    %758 = vmatpush1.msra.mxu0 %v704
    %759 = vmatprep.subr.mxu0 0.0
    %760 = vmatpush1.msra.mxu0 %v705
    %761 = vmatprep.subr.mxu0 0.0
    %762 = vmatpush1.msra.mxu0 %v706
    %763 = vmatprep.subr.mxu0 0.0
    %764 = vmatpush1.msra.mxu0 %v707
    %765 = vmatprep.subr.mxu0 0.0
    %766 = vmatpush1.msra.mxu0 %v708
    %767 = vmatprep.subr.mxu0 0.0
    %768 = vmatpush1.msra.mxu0 %v723
    %769 = vmatprep.subr.mxu0 0.0
    %770 = vmatpush1.msra.mxu0 0.0
    %771 = vmatprep.subr.mxu0 0.0
    %772 = vmatpush1.msra.mxu0 0.0
    %773 = vmatprep.subr.mxu0 0.0
    %774 = vmatpush1.msra.mxu0 0.0
    %775 = vmatprep.subr.mxu0 0.0
    %776 = vmatpush1.msra.mxu0 0.0
    %777 = vmatprep.subr.mxu0 0.0
    %778 = vmatpush1.msra.mxu0 0.0
    %779 = vmatprep.subr.mxu0 0.0
    %780 = vmatpush1.msra.mxu0 0.0
    %781 = vmatprep.subr.mxu0 0.0
    %782 = vmatpush1.msra.mxu0 0.0
    %783 = vmatprep.subr.mxu0 0.0
    %784 = vmatpush1.msra.mxu0 0.0
    %785 = vmatprep.subr.mxu0 0.0
    %786 = vmatpush1.msra.mxu0 0.0
    %787 = vmatprep.subr.mxu0 0.0
    %788 = vmatpush1.msra.mxu0 0.0
    %789 = vmatprep.mubr.f32.mxu0 %v720
    %790 = vmatmul.mubr.f32.gmra.mrb[0].mxu0 %v717
    %v791 = vpop.f32.mrb[0].mxu0
    %v792 = vadd.f32 0.0, %v791
    %v793 = vpop.f32.mrb[0].mxu0
    %794 = vdwg.mxu0
    %v795 = vadd.f32 %v684, %v792
    %s796 = scalar_lea.vmem %s0, 28
    %v797 = vld [vmem:[%s796] sm:$0xf]
    %s798 = scalar_lea.vmem %s1, 1232
    %v799 = vld [vmem:[%s798] sm:$0xff]
    %v800 = vld [vmem:[%s798 + $0x8] sm:$0xff]
    %v801 = vld [vmem:[%s798 + $0x10] sm:$0xff]
    %v802 = vld [vmem:[%s798 + $0x18] sm:$0xff]
    %v803 = vld [vmem:[%s798 + $0x20] sm:$0xff]
    %v804 = vld [vmem:[%s798 + $0x28] sm:$0xff]
    %v805 = vld [vmem:[%s798 + $0x30] sm:$0xff]
    %v806 = vld [vmem:[%s798 + $0x38] sm:$0xff]
    %v807 = vld [vmem:[%s798 + $0x40] sm:$0xff]
    %v808 = vld [vmem:[%s798 + $0x48] sm:$0xff]
    %v809 = vld [vmem:[%s798 + $0x50] sm:$0xff]
    %v810 = vld [vmem:[%s798 + $0x58] sm:$0xff]
    %v811 = vld [vmem:[%s798 + $0x60] sm:$0xff]
    %v812 = vld [vmem:[%s798 + $0x68] sm:$0xff]
    %v813 = vld [vmem:[%s798 + $0x70] sm:$0xff]
    %v814 = vld [vmem:[%s798 + $0x78] sm:$0xff]
    %v815 = vld [vmem:[%s798 + $0x80] sm:$0xff]
    %v816 = vld [vmem:[%s798 + $0x88] sm:$0xff]
    %v817 = vld [vmem:[%s798 + $0x90] sm:$0xff]
    %v818 = vld [vmem:[%s798 + $0x98] sm:$0xff]
    %v819 = vld [vmem:[%s798 + $0xa0] sm:$0xff]
    %v820 = vld [vmem:[%s798 + $0xa8] sm:$0x1]
    %v823 = vunpack.c.l.s4 1983009808
    %v824 = vunpack.c.0.s8 %v823
    %v825 = vlaneseq
    %v826 = vshrl.u32 %v825, 7
    %v827 = vsub.s32 %v824, %v826
    %v828 = vrot.slane %v797, %v827
    %v829 = vcombine.high %v828, %v828
    %v831 = vsel %vm79, %v829, 0
    %v834 = vsel %vm82, %v820, 0
    %836 = vmatprep.subr.mxu0 0.0
    %837 = vmatpush1.msra.mxu0 %v799
    %838 = vmatprep.subr.mxu0 0.0
    %839 = vmatpush1.msra.mxu0 %v800
    %840 = vmatprep.subr.mxu0 0.0
    %841 = vmatpush1.msra.mxu0 %v801
    %842 = vmatprep.subr.mxu0 0.0
    %843 = vmatpush1.msra.mxu0 %v802
    %844 = vmatprep.subr.mxu0 0.0
    %845 = vmatpush1.msra.mxu0 %v803
    %846 = vmatprep.subr.mxu0 0.0
    %847 = vmatpush1.msra.mxu0 %v804
    %848 = vmatprep.subr.mxu0 0.0
    %849 = vmatpush1.msra.mxu0 %v805
    %850 = vmatprep.subr.mxu0 0.0
    %851 = vmatpush1.msra.mxu0 %v806
    %852 = vmatprep.subr.mxu0 0.0
    %853 = vmatpush1.msra.mxu0 %v807
    %854 = vmatprep.subr.mxu0 0.0
    %855 = vmatpush1.msra.mxu0 %v808
    %856 = vmatprep.subr.mxu0 0.0
    %857 = vmatpush1.msra.mxu0 %v809
    %858 = vmatprep.subr.mxu0 0.0
    %859 = vmatpush1.msra.mxu0 %v810
    %860 = vmatprep.subr.mxu0 0.0
    %861 = vmatpush1.msra.mxu0 %v811
    %862 = vmatprep.subr.mxu0 0.0
    %863 = vmatpush1.msra.mxu0 %v812
    %864 = vmatprep.subr.mxu0 0.0
    %865 = vmatpush1.msra.mxu0 %v813
    %866 = vmatprep.subr.mxu0 0.0
    %867 = vmatpush1.msra.mxu0 %v814
    %868 = vmatprep.subr.mxu0 0.0
    %869 = vmatpush1.msra.mxu0 %v815
    %870 = vmatprep.subr.mxu0 0.0
    %871 = vmatpush1.msra.mxu0 %v816
    %872 = vmatprep.subr.mxu0 0.0
    %873 = vmatpush1.msra.mxu0 %v817
    %874 = vmatprep.subr.mxu0 0.0
    %875 = vmatpush1.msra.mxu0 %v818
    %876 = vmatprep.subr.mxu0 0.0
    %877 = vmatpush1.msra.mxu0 %v819
    %878 = vmatprep.subr.mxu0 0.0
    %879 = vmatpush1.msra.mxu0 %v834
    %880 = vmatprep.subr.mxu0 0.0
    %881 = vmatpush1.msra.mxu0 0.0
    %882 = vmatprep.subr.mxu0 0.0
    %883 = vmatpush1.msra.mxu0 0.0
    %884 = vmatprep.subr.mxu0 0.0
    %885 = vmatpush1.msra.mxu0 0.0
    %886 = vmatprep.subr.mxu0 0.0
    %887 = vmatpush1.msra.mxu0 0.0
    %888 = vmatprep.subr.mxu0 0.0
    %889 = vmatpush1.msra.mxu0 0.0
    %890 = vmatprep.subr.mxu0 0.0
    %891 = vmatpush1.msra.mxu0 0.0
    %892 = vmatprep.subr.mxu0 0.0
    %893 = vmatpush1.msra.mxu0 0.0
    %894 = vmatprep.subr.mxu0 0.0
    %895 = vmatpush1.msra.mxu0 0.0
    %896 = vmatprep.subr.mxu0 0.0
    %897 = vmatpush1.msra.mxu0 0.0
    %898 = vmatprep.subr.mxu0 0.0
    %899 = vmatpush1.msra.mxu0 0.0
    %900 = vmatprep.mubr.f32.mxu0 %v831
    %901 = vmatmul.mubr.f32.gmra.mrb[0].mxu0 %v828
    %v902 = vpop.f32.mrb[0].mxu0
    %v903 = vadd.f32 0.0, %v902
    %v904 = vpop.f32.mrb[0].mxu0
    %905 = vdwg.mxu0
    %v906 = vadd.f32 %v795, %v903
    %s907 = scalar_lea.vmem %s0, 32
    %v908 = vld [vmem:[%s907] sm:$0xf]
    %s909 = scalar_lea.vmem %s1, 1408
    %v910 = vld [vmem:[%s909] sm:$0xff]
    %v911 = vld [vmem:[%s909 + $0x8] sm:$0xff]
    %v912 = vld [vmem:[%s909 + $0x10] sm:$0xff]
    %v913 = vld [vmem:[%s909 + $0x18] sm:$0xff]
    %v914 = vld [vmem:[%s909 + $0x20] sm:$0xff]
    %v915 = vld [vmem:[%s909 + $0x28] sm:$0xff]
    %v916 = vld [vmem:[%s909 + $0x30] sm:$0xff]
    %v917 = vld [vmem:[%s909 + $0x38] sm:$0xff]
    %v918 = vld [vmem:[%s909 + $0x40] sm:$0xff]
    %v919 = vld [vmem:[%s909 + $0x48] sm:$0xff]
    %v920 = vld [vmem:[%s909 + $0x50] sm:$0xff]
    %v921 = vld [vmem:[%s909 + $0x58] sm:$0xff]
    %v922 = vld [vmem:[%s909 + $0x60] sm:$0xff]
    %v923 = vld [vmem:[%s909 + $0x68] sm:$0xff]
    %v924 = vld [vmem:[%s909 + $0x70] sm:$0xff]
    %v925 = vld [vmem:[%s909 + $0x78] sm:$0xff]
    %v926 = vld [vmem:[%s909 + $0x80] sm:$0xff]
    %v927 = vld [vmem:[%s909 + $0x88] sm:$0xff]
    %v928 = vld [vmem:[%s909 + $0x90] sm:$0xff]
    %v929 = vld [vmem:[%s909 + $0x98] sm:$0xff]
    %v930 = vld [vmem:[%s909 + $0xa0] sm:$0xff]
    %v931 = vld [vmem:[%s909 + $0xa8] sm:$0x1]
    %v934 = vunpack.c.l.s4 1983009808
    %v935 = vunpack.c.0.s8 %v934
    %v936 = vlaneseq
    %v937 = vshrl.u32 %v936, 7
    %v938 = vsub.s32 %v935, %v937
    %v939 = vrot.slane %v908, %v938
    %v940 = vcombine.high %v939, %v939
    %v942 = vsel %vm79, %v940, 0
    %v945 = vsel %vm82, %v931, 0
    %947 = vmatprep.subr.mxu0 0.0
    %948 = vmatpush1.msra.mxu0 %v910
    %949 = vmatprep.subr.mxu0 0.0
    %950 = vmatpush1.msra.mxu0 %v911
    %951 = vmatprep.subr.mxu0 0.0
    %952 = vmatpush1.msra.mxu0 %v912
    %953 = vmatprep.subr.mxu0 0.0
    %954 = vmatpush1.msra.mxu0 %v913
    %955 = vmatprep.subr.mxu0 0.0
    %956 = vmatpush1.msra.mxu0 %v914
    %957 = vmatprep.subr.mxu0 0.0
    %958 = vmatpush1.msra.mxu0 %v915
    %959 = vmatprep.subr.mxu0 0.0
    %960 = vmatpush1.msra.mxu0 %v916
    %961 = vmatprep.subr.mxu0 0.0
    %962 = vmatpush1.msra.mxu0 %v917
    %963 = vmatprep.subr.mxu0 0.0
    %964 = vmatpush1.msra.mxu0 %v918
    %965 = vmatprep.subr.mxu0 0.0
    %966 = vmatpush1.msra.mxu0 %v919
    %967 = vmatprep.subr.mxu0 0.0
    %968 = vmatpush1.msra.mxu0 %v920
    %969 = vmatprep.subr.mxu0 0.0
    %970 = vmatpush1.msra.mxu0 %v921
    %971 = vmatprep.subr.mxu0 0.0
    %972 = vmatpush1.msra.mxu0 %v922
    %973 = vmatprep.subr.mxu0 0.0
    %974 = vmatpush1.msra.mxu0 %v923
    %975 = vmatprep.subr.mxu0 0.0
    %976 = vmatpush1.msra.mxu0 %v924
    %977 = vmatprep.subr.mxu0 0.0
    %978 = vmatpush1.msra.mxu0 %v925
    %979 = vmatprep.subr.mxu0 0.0
    %980 = vmatpush1.msra.mxu0 %v926
    %981 = vmatprep.subr.mxu0 0.0
    %982 = vmatpush1.msra.mxu0 %v927
    %983 = vmatprep.subr.mxu0 0.0
    %984 = vmatpush1.msra.mxu0 %v928
    %985 = vmatprep.subr.mxu0 0.0
    %986 = vmatpush1.msra.mxu0 %v929
    %987 = vmatprep.subr.mxu0 0.0
    %988 = vmatpush1.msra.mxu0 %v930
    %989 = vmatprep.subr.mxu0 0.0
    %990 = vmatpush1.msra.mxu0 %v945
    %991 = vmatprep.subr.mxu0 0.0
    %992 = vmatpush1.msra.mxu0 0.0
    %993 = vmatprep.subr.mxu0 0.0
    %994 = vmatpush1.msra.mxu0 0.0
    %995 = vmatprep.subr.mxu0 0.0
    %996 = vmatpush1.msra.mxu0 0.0
    %997 = vmatprep.subr.mxu0 0.0
    %998 = vmatpush1.msra.mxu0 0.0
    %999 = vmatprep.subr.mxu0 0.0
    %1000 = vmatpush1.msra.mxu0 0.0
    %1001 = vmatprep.subr.mxu0 0.0
    %1002 = vmatpush1.msra.mxu0 0.0
    %1003 = vmatprep.subr.mxu0 0.0
    %1004 = vmatpush1.msra.mxu0 0.0
    %1005 = vmatprep.subr.mxu0 0.0
    %1006 = vmatpush1.msra.mxu0 0.0
    %1007 = vmatprep.subr.mxu0 0.0
    %1008 = vmatpush1.msra.mxu0 0.0
    %1009 = vmatprep.subr.mxu0 0.0
    %1010 = vmatpush1.msra.mxu0 0.0
    %1011 = vmatprep.mubr.f32.mxu0 %v942
    %1012 = vmatmul.mubr.f32.gmra.mrb[0].mxu0 %v939
    %v1013 = vpop.f32.mrb[0].mxu0
    %v1014 = vadd.f32 0.0, %v1013
    %v1015 = vpop.f32.mrb[0].mxu0
    %1016 = vdwg.mxu0
    %v1017 = vadd.f32 %v906, %v1014
    %s1018 = scalar_lea.vmem %s0, 36
    %v1019 = vld [vmem:[%s1018] sm:$0xf]
    %s1020 = scalar_lea.vmem %s1, 1584
    %v1021 = vld [vmem:[%s1020] sm:$0xff]
    %v1022 = vld [vmem:[%s1020 + $0x8] sm:$0xff]
    %v1023 = vld [vmem:[%s1020 + $0x10] sm:$0xff]
    %v1024 = vld [vmem:[%s1020 + $0x18] sm:$0xff]
    %v1025 = vld [vmem:[%s1020 + $0x20] sm:$0xff]
    %v1026 = vld [vmem:[%s1020 + $0x28] sm:$0xff]
    %v1027 = vld [vmem:[%s1020 + $0x30] sm:$0xff]
    %v1028 = vld [vmem:[%s1020 + $0x38] sm:$0xff]
    %v1029 = vld [vmem:[%s1020 + $0x40] sm:$0xff]
    %v1030 = vld [vmem:[%s1020 + $0x48] sm:$0xff]
    %v1031 = vld [vmem:[%s1020 + $0x50] sm:$0xff]
    %v1032 = vld [vmem:[%s1020 + $0x58] sm:$0xff]
    %v1033 = vld [vmem:[%s1020 + $0x60] sm:$0xff]
    %v1034 = vld [vmem:[%s1020 + $0x68] sm:$0xff]
    %v1035 = vld [vmem:[%s1020 + $0x70] sm:$0xff]
    %v1036 = vld [vmem:[%s1020 + $0x78] sm:$0xff]
    %v1037 = vld [vmem:[%s1020 + $0x80] sm:$0xff]
    %v1038 = vld [vmem:[%s1020 + $0x88] sm:$0xff]
    %v1039 = vld [vmem:[%s1020 + $0x90] sm:$0xff]
    %v1040 = vld [vmem:[%s1020 + $0x98] sm:$0xff]
    %v1041 = vld [vmem:[%s1020 + $0xa0] sm:$0xff]
    %v1042 = vld [vmem:[%s1020 + $0xa8] sm:$0x1]
    %v1045 = vunpack.c.l.s4 1983009808
    %v1046 = vunpack.c.0.s8 %v1045
    %v1047 = vlaneseq
    %v1048 = vshrl.u32 %v1047, 7
    %v1049 = vsub.s32 %v1046, %v1048
    %v1050 = vrot.slane %v1019, %v1049
    %v1051 = vcombine.high %v1050, %v1050
    %v1053 = vsel %vm79, %v1051, 0
    %v1056 = vsel %vm82, %v1042, 0
    %1058 = vmatprep.subr.mxu0 0.0
    %1059 = vmatpush1.msra.mxu0 %v1021
    %1060 = vmatprep.subr.mxu0 0.0
    %1061 = vmatpush1.msra.mxu0 %v1022
    %1062 = vmatprep.subr.mxu0 0.0
    %1063 = vmatpush1.msra.mxu0 %v1023
    %1064 = vmatprep.subr.mxu0 0.0
    %1065 = vmatpush1.msra.mxu0 %v1024
    %1066 = vmatprep.subr.mxu0 0.0
    %1067 = vmatpush1.msra.mxu0 %v1025
    %1068 = vmatprep.subr.mxu0 0.0
    %1069 = vmatpush1.msra.mxu0 %v1026
    %1070 = vmatprep.subr.mxu0 0.0
    %1071 = vmatpush1.msra.mxu0 %v1027
    %1072 = vmatprep.subr.mxu0 0.0
    %1073 = vmatpush1.msra.mxu0 %v1028
    %1074 = vmatprep.subr.mxu0 0.0
    %1075 = vmatpush1.msra.mxu0 %v1029
    %1076 = vmatprep.subr.mxu0 0.0
    %1077 = vmatpush1.msra.mxu0 %v1030
    %1078 = vmatprep.subr.mxu0 0.0
    %1079 = vmatpush1.msra.mxu0 %v1031
    %1080 = vmatprep.subr.mxu0 0.0
    %1081 = vmatpush1.msra.mxu0 %v1032
    %1082 = vmatprep.subr.mxu0 0.0
    %1083 = vmatpush1.msra.mxu0 %v1033
    %1084 = vmatprep.subr.mxu0 0.0
    %1085 = vmatpush1.msra.mxu0 %v1034
    %1086 = vmatprep.subr.mxu0 0.0
    %1087 = vmatpush1.msra.mxu0 %v1035
    %1088 = vmatprep.subr.mxu0 0.0
    %1089 = vmatpush1.msra.mxu0 %v1036
    %1090 = vmatprep.subr.mxu0 0.0
    %1091 = vmatpush1.msra.mxu0 %v1037
    %1092 = vmatprep.subr.mxu0 0.0
    %1093 = vmatpush1.msra.mxu0 %v1038
    %1094 = vmatprep.subr.mxu0 0.0
    %1095 = vmatpush1.msra.mxu0 %v1039
    %1096 = vmatprep.subr.mxu0 0.0
    %1097 = vmatpush1.msra.mxu0 %v1040
    %1098 = vmatprep.subr.mxu0 0.0
    %1099 = vmatpush1.msra.mxu0 %v1041
    %1100 = vmatprep.subr.mxu0 0.0
    %1101 = vmatpush1.msra.mxu0 %v1056
    %1102 = vmatprep.subr.mxu0 0.0
    %1103 = vmatpush1.msra.mxu0 0.0
    %1104 = vmatprep.subr.mxu0 0.0
    %1105 = vmatpush1.msra.mxu0 0.0
    %1106 = vmatprep.subr.mxu0 0.0
    %1107 = vmatpush1.msra.mxu0 0.0
    %1108 = vmatprep.subr.mxu0 0.0
    %1109 = vmatpush1.msra.mxu0 0.0
    %1110 = vmatprep.subr.mxu0 0.0
    %1111 = vmatpush1.msra.mxu0 0.0
    %1112 = vmatprep.subr.mxu0 0.0
    %1113 = vmatpush1.msra.mxu0 0.0
    %1114 = vmatprep.subr.mxu0 0.0
    %1115 = vmatpush1.msra.mxu0 0.0
    %1116 = vmatprep.subr.mxu0 0.0
    %1117 = vmatpush1.msra.mxu0 0.0
    %1118 = vmatprep.subr.mxu0 0.0
    %1119 = vmatpush1.msra.mxu0 0.0
    %1120 = vmatprep.subr.mxu0 0.0
    %1121 = vmatpush1.msra.mxu0 0.0
    %1122 = vmatprep.mubr.f32.mxu0 %v1053
    %1123 = vmatmul.mubr.f32.gmra.mrb[0].mxu0 %v1050
    %v1124 = vpop.f32.mrb[0].mxu0
    %v1125 = vadd.f32 0.0, %v1124
    %v1126 = vpop.f32.mrb[0].mxu0
    %1127 = vdwg.mxu0
    %v1128 = vadd.f32 %v1017, %v1125
    %s1129 = scalar_lea.vmem %s0, 40
    %v1130 = vld [vmem:[%s1129] sm:$0xf]
    %s1131 = scalar_lea.vmem %s1, 1760
    %v1132 = vld [vmem:[%s1131] sm:$0xff]
    %v1133 = vld [vmem:[%s1131 + $0x8] sm:$0xff]
    %v1134 = vld [vmem:[%s1131 + $0x10] sm:$0xff]
    %v1135 = vld [vmem:[%s1131 + $0x18] sm:$0xff]
    %v1136 = vld [vmem:[%s1131 + $0x20] sm:$0xff]
    %v1137 = vld [vmem:[%s1131 + $0x28] sm:$0xff]
    %v1138 = vld [vmem:[%s1131 + $0x30] sm:$0xff]
    %v1139 = vld [vmem:[%s1131 + $0x38] sm:$0xff]
    %v1140 = vld [vmem:[%s1131 + $0x40] sm:$0xff]
    %v1141 = vld [vmem:[%s1131 + $0x48] sm:$0xff]
    %v1142 = vld [vmem:[%s1131 + $0x50] sm:$0xff]
    %v1143 = vld [vmem:[%s1131 + $0x58] sm:$0xff]
    %v1144 = vld [vmem:[%s1131 + $0x60] sm:$0xff]
    %v1145 = vld [vmem:[%s1131 + $0x68] sm:$0xff]
    %v1146 = vld [vmem:[%s1131 + $0x70] sm:$0xff]
    %v1147 = vld [vmem:[%s1131 + $0x78] sm:$0xff]
    %v1148 = vld [vmem:[%s1131 + $0x80] sm:$0xff]
    %v1149 = vld [vmem:[%s1131 + $0x88] sm:$0xff]
    %v1150 = vld [vmem:[%s1131 + $0x90] sm:$0xff]
    %v1151 = vld [vmem:[%s1131 + $0x98] sm:$0xff]
    %v1152 = vld [vmem:[%s1131 + $0xa0] sm:$0xff]
    %v1153 = vld [vmem:[%s1131 + $0xa8] sm:$0x1]
    %v1156 = vunpack.c.l.s4 1983009808
    %v1157 = vunpack.c.0.s8 %v1156
    %v1158 = vlaneseq
    %v1159 = vshrl.u32 %v1158, 7
    %v1160 = vsub.s32 %v1157, %v1159
    %v1161 = vrot.slane %v1130, %v1160
    %v1162 = vcombine.high %v1161, %v1161
    %v1164 = vsel %vm79, %v1162, 0
    %v1167 = vsel %vm82, %v1153, 0
    %1169 = vmatprep.subr.mxu0 0.0
    %1170 = vmatpush1.msra.mxu0 %v1132
    %1171 = vmatprep.subr.mxu0 0.0
    %1172 = vmatpush1.msra.mxu0 %v1133
    %1173 = vmatprep.subr.mxu0 0.0
    %1174 = vmatpush1.msra.mxu0 %v1134
    %1175 = vmatprep.subr.mxu0 0.0
    %1176 = vmatpush1.msra.mxu0 %v1135
    %1177 = vmatprep.subr.mxu0 0.0
    %1178 = vmatpush1.msra.mxu0 %v1136
    %1179 = vmatprep.subr.mxu0 0.0
    %1180 = vmatpush1.msra.mxu0 %v1137
    %1181 = vmatprep.subr.mxu0 0.0
    %1182 = vmatpush1.msra.mxu0 %v1138
    %1183 = vmatprep.subr.mxu0 0.0
    %1184 = vmatpush1.msra.mxu0 %v1139
    %1185 = vmatprep.subr.mxu0 0.0
    %1186 = vmatpush1.msra.mxu0 %v1140
    %1187 = vmatprep.subr.mxu0 0.0
    %1188 = vmatpush1.msra.mxu0 %v1141
    %1189 = vmatprep.subr.mxu0 0.0
    %1190 = vmatpush1.msra.mxu0 %v1142
    %1191 = vmatprep.subr.mxu0 0.0
    %1192 = vmatpush1.msra.mxu0 %v1143
    %1193 = vmatprep.subr.mxu0 0.0
    %1194 = vmatpush1.msra.mxu0 %v1144
    %1195 = vmatprep.subr.mxu0 0.0
    %1196 = vmatpush1.msra.mxu0 %v1145
    %1197 = vmatprep.subr.mxu0 0.0
    %1198 = vmatpush1.msra.mxu0 %v1146
    %1199 = vmatprep.subr.mxu0 0.0
    %1200 = vmatpush1.msra.mxu0 %v1147
    %1201 = vmatprep.subr.mxu0 0.0
    %1202 = vmatpush1.msra.mxu0 %v1148
    %1203 = vmatprep.subr.mxu0 0.0
    %1204 = vmatpush1.msra.mxu0 %v1149
    %1205 = vmatprep.subr.mxu0 0.0
    %1206 = vmatpush1.msra.mxu0 %v1150
    %1207 = vmatprep.subr.mxu0 0.0
    %1208 = vmatpush1.msra.mxu0 %v1151
    %1209 = vmatprep.subr.mxu0 0.0
    %1210 = vmatpush1.msra.mxu0 %v1152
    %1211 = vmatprep.subr.mxu0 0.0
    %1212 = vmatpush1.msra.mxu0 %v1167
    %1213 = vmatprep.subr.mxu0 0.0
    %1214 = vmatpush1.msra.mxu0 0.0
    %1215 = vmatprep.subr.mxu0 0.0
    %1216 = vmatpush1.msra.mxu0 0.0
    %1217 = vmatprep.subr.mxu0 0.0
    %1218 = vmatpush1.msra.mxu0 0.0
    %1219 = vmatprep.subr.mxu0 0.0
    %1220 = vmatpush1.msra.mxu0 0.0
    %1221 = vmatprep.subr.mxu0 0.0
    %1222 = vmatpush1.msra.mxu0 0.0
    %1223 = vmatprep.subr.mxu0 0.0
    %1224 = vmatpush1.msra.mxu0 0.0
    %1225 = vmatprep.subr.mxu0 0.0
    %1226 = vmatpush1.msra.mxu0 0.0
    %1227 = vmatprep.subr.mxu0 0.0
    %1228 = vmatpush1.msra.mxu0 0.0
    %1229 = vmatprep.subr.mxu0 0.0
    %1230 = vmatpush1.msra.mxu0 0.0
    %1231 = vmatprep.subr.mxu0 0.0
    %1232 = vmatpush1.msra.mxu0 0.0
    %1233 = vmatprep.mubr.f32.mxu0 %v1164
    %1234 = vmatmul.mubr.f32.gmra.mrb[0].mxu0 %v1161
    %v1235 = vpop.f32.mrb[0].mxu0
    %v1236 = vadd.f32 0.0, %v1235
    %v1237 = vpop.f32.mrb[0].mxu0
    %1238 = vdwg.mxu0
    %v1239 = vadd.f32 %v1128, %v1236
    %s1240 = scalar_lea.vmem %s0, 44
    %v1241 = vld [vmem:[%s1240] sm:$0xf]
    %s1242 = scalar_lea.vmem %s1, 1936
    %v1243 = vld [vmem:[%s1242] sm:$0xff]
    %v1244 = vld [vmem:[%s1242 + $0x8] sm:$0xff]
    %v1245 = vld [vmem:[%s1242 + $0x10] sm:$0xff]
    %v1246 = vld [vmem:[%s1242 + $0x18] sm:$0xff]
    %v1247 = vld [vmem:[%s1242 + $0x20] sm:$0xff]
    %v1248 = vld [vmem:[%s1242 + $0x28] sm:$0xff]
    %v1249 = vld [vmem:[%s1242 + $0x30] sm:$0xff]
    %v1250 = vld [vmem:[%s1242 + $0x38] sm:$0xff]
    %v1251 = vld [vmem:[%s1242 + $0x40] sm:$0xff]
    %v1252 = vld [vmem:[%s1242 + $0x48] sm:$0xff]
    %v1253 = vld [vmem:[%s1242 + $0x50] sm:$0xff]
    %v1254 = vld [vmem:[%s1242 + $0x58] sm:$0xff]
    %v1255 = vld [vmem:[%s1242 + $0x60] sm:$0xff]
    %v1256 = vld [vmem:[%s1242 + $0x68] sm:$0xff]
    %v1257 = vld [vmem:[%s1242 + $0x70] sm:$0xff]
    %v1258 = vld [vmem:[%s1242 + $0x78] sm:$0xff]
    %v1259 = vld [vmem:[%s1242 + $0x80] sm:$0xff]
    %v1260 = vld [vmem:[%s1242 + $0x88] sm:$0xff]
    %v1261 = vld [vmem:[%s1242 + $0x90] sm:$0xff]
    %v1262 = vld [vmem:[%s1242 + $0x98] sm:$0xff]
    %v1263 = vld [vmem:[%s1242 + $0xa0] sm:$0xff]
    %v1264 = vld [vmem:[%s1242 + $0xa8] sm:$0x1]
    %v1267 = vunpack.c.l.s4 1983009808
    %v1268 = vunpack.c.0.s8 %v1267
    %v1269 = vlaneseq
    %v1270 = vshrl.u32 %v1269, 7
    %v1271 = vsub.s32 %v1268, %v1270
    %v1272 = vrot.slane %v1241, %v1271
    %v1273 = vcombine.high %v1272, %v1272
    %v1275 = vsel %vm79, %v1273, 0
    %v1278 = vsel %vm82, %v1264, 0
    %1280 = vmatprep.subr.mxu0 0.0
    %1281 = vmatpush1.msra.mxu0 %v1243
    %1282 = vmatprep.subr.mxu0 0.0
    %1283 = vmatpush1.msra.mxu0 %v1244
    %1284 = vmatprep.subr.mxu0 0.0
    %1285 = vmatpush1.msra.mxu0 %v1245
    %1286 = vmatprep.subr.mxu0 0.0
    %1287 = vmatpush1.msra.mxu0 %v1246
    %1288 = vmatprep.subr.mxu0 0.0
    %1289 = vmatpush1.msra.mxu0 %v1247
    %1290 = vmatprep.subr.mxu0 0.0
    %1291 = vmatpush1.msra.mxu0 %v1248
    %1292 = vmatprep.subr.mxu0 0.0
    %1293 = vmatpush1.msra.mxu0 %v1249
    %1294 = vmatprep.subr.mxu0 0.0
    %1295 = vmatpush1.msra.mxu0 %v1250
    %1296 = vmatprep.subr.mxu0 0.0
    %1297 = vmatpush1.msra.mxu0 %v1251
    %1298 = vmatprep.subr.mxu0 0.0
    %1299 = vmatpush1.msra.mxu0 %v1252
    %1300 = vmatprep.subr.mxu0 0.0
    %1301 = vmatpush1.msra.mxu0 %v1253
    %1302 = vmatprep.subr.mxu0 0.0
    %1303 = vmatpush1.msra.mxu0 %v1254
    %1304 = vmatprep.subr.mxu0 0.0
    %1305 = vmatpush1.msra.mxu0 %v1255
    %1306 = vmatprep.subr.mxu0 0.0
    %1307 = vmatpush1.msra.mxu0 %v1256
    %1308 = vmatprep.subr.mxu0 0.0
    %1309 = vmatpush1.msra.mxu0 %v1257
    %1310 = vmatprep.subr.mxu0 0.0
    %1311 = vmatpush1.msra.mxu0 %v1258
    %1312 = vmatprep.subr.mxu0 0.0
    %1313 = vmatpush1.msra.mxu0 %v1259
    %1314 = vmatprep.subr.mxu0 0.0
    %1315 = vmatpush1.msra.mxu0 %v1260
    %1316 = vmatprep.subr.mxu0 0.0
    %1317 = vmatpush1.msra.mxu0 %v1261
    %1318 = vmatprep.subr.mxu0 0.0
    %1319 = vmatpush1.msra.mxu0 %v1262
    %1320 = vmatprep.subr.mxu0 0.0
    %1321 = vmatpush1.msra.mxu0 %v1263
    %1322 = vmatprep.subr.mxu0 0.0
    %1323 = vmatpush1.msra.mxu0 %v1278
    %1324 = vmatprep.subr.mxu0 0.0
    %1325 = vmatpush1.msra.mxu0 0.0
    %1326 = vmatprep.subr.mxu0 0.0
    %1327 = vmatpush1.msra.mxu0 0.0
    %1328 = vmatprep.subr.mxu0 0.0
    %1329 = vmatpush1.msra.mxu0 0.0
    %1330 = vmatprep.subr.mxu0 0.0
    %1331 = vmatpush1.msra.mxu0 0.0
    %1332 = vmatprep.subr.mxu0 0.0
    %1333 = vmatpush1.msra.mxu0 0.0
    %1334 = vmatprep.subr.mxu0 0.0
    %1335 = vmatpush1.msra.mxu0 0.0
    %1336 = vmatprep.subr.mxu0 0.0
    %1337 = vmatpush1.msra.mxu0 0.0
    %1338 = vmatprep.subr.mxu0 0.0
    %1339 = vmatpush1.msra.mxu0 0.0
    %1340 = vmatprep.subr.mxu0 0.0
    %1341 = vmatpush1.msra.mxu0 0.0
    %1342 = vmatprep.subr.mxu0 0.0
    %1343 = vmatpush1.msra.mxu0 0.0
    %1344 = vmatprep.mubr.f32.mxu0 %v1275
    %1345 = vmatmul.mubr.f32.gmra.mrb[0].mxu0 %v1272
    %v1346 = vpop.f32.mrb[0].mxu0
    %v1347 = vadd.f32 0.0, %v1346
    %v1348 = vpop.f32.mrb[0].mxu0
    %1349 = vdwg.mxu0
    %v1350 = vadd.f32 %v1239, %v1347
    %s1351 = scalar_lea.vmem %s0, 48
    %v1352 = vld [vmem:[%s1351] sm:$0xf]
    %s1353 = scalar_lea.vmem %s1, 2112
    %v1354 = vld [vmem:[%s1353] sm:$0xff]
    %v1355 = vld [vmem:[%s1353 + $0x8] sm:$0xff]
    %v1356 = vld [vmem:[%s1353 + $0x10] sm:$0xff]
    %v1357 = vld [vmem:[%s1353 + $0x18] sm:$0xff]
    %v1358 = vld [vmem:[%s1353 + $0x20] sm:$0xff]
    %v1359 = vld [vmem:[%s1353 + $0x28] sm:$0xff]
    %v1360 = vld [vmem:[%s1353 + $0x30] sm:$0xff]
    %v1361 = vld [vmem:[%s1353 + $0x38] sm:$0xff]
    %v1362 = vld [vmem:[%s1353 + $0x40] sm:$0xff]
    %v1363 = vld [vmem:[%s1353 + $0x48] sm:$0xff]
    %v1364 = vld [vmem:[%s1353 + $0x50] sm:$0xff]
    %v1365 = vld [vmem:[%s1353 + $0x58] sm:$0xff]
    %v1366 = vld [vmem:[%s1353 + $0x60] sm:$0xff]
    %v1367 = vld [vmem:[%s1353 + $0x68] sm:$0xff]
    %v1368 = vld [vmem:[%s1353 + $0x70] sm:$0xff]
    %v1369 = vld [vmem:[%s1353 + $0x78] sm:$0xff]
    %v1370 = vld [vmem:[%s1353 + $0x80] sm:$0xff]
    %v1371 = vld [vmem:[%s1353 + $0x88] sm:$0xff]
    %v1372 = vld [vmem:[%s1353 + $0x90] sm:$0xff]
    %v1373 = vld [vmem:[%s1353 + $0x98] sm:$0xff]
    %v1374 = vld [vmem:[%s1353 + $0xa0] sm:$0xff]
    %v1375 = vld [vmem:[%s1353 + $0xa8] sm:$0x1]
    %v1378 = vunpack.c.l.s4 1983009808
    %v1379 = vunpack.c.0.s8 %v1378
    %v1380 = vlaneseq
    %v1381 = vshrl.u32 %v1380, 7
    %v1382 = vsub.s32 %v1379, %v1381
    %v1383 = vrot.slane %v1352, %v1382
    %v1384 = vcombine.high %v1383, %v1383
    %v1386 = vsel %vm79, %v1384, 0
    %v1389 = vsel %vm82, %v1375, 0
    %1391 = vmatprep.subr.mxu0 0.0
    %1392 = vmatpush1.msra.mxu0 %v1354
    %1393 = vmatprep.subr.mxu0 0.0
    %1394 = vmatpush1.msra.mxu0 %v1355
    %1395 = vmatprep.subr.mxu0 0.0
    %1396 = vmatpush1.msra.mxu0 %v1356
    %1397 = vmatprep.subr.mxu0 0.0
    %1398 = vmatpush1.msra.mxu0 %v1357
    %1399 = vmatprep.subr.mxu0 0.0
    %1400 = vmatpush1.msra.mxu0 %v1358
    %1401 = vmatprep.subr.mxu0 0.0
    %1402 = vmatpush1.msra.mxu0 %v1359
    %1403 = vmatprep.subr.mxu0 0.0
    %1404 = vmatpush1.msra.mxu0 %v1360
    %1405 = vmatprep.subr.mxu0 0.0
    %1406 = vmatpush1.msra.mxu0 %v1361
    %1407 = vmatprep.subr.mxu0 0.0
    %1408 = vmatpush1.msra.mxu0 %v1362
    %1409 = vmatprep.subr.mxu0 0.0
    %1410 = vmatpush1.msra.mxu0 %v1363
    %1411 = vmatprep.subr.mxu0 0.0
    %1412 = vmatpush1.msra.mxu0 %v1364
    %1413 = vmatprep.subr.mxu0 0.0
    %1414 = vmatpush1.msra.mxu0 %v1365
    %1415 = vmatprep.subr.mxu0 0.0
    %1416 = vmatpush1.msra.mxu0 %v1366
    %1417 = vmatprep.subr.mxu0 0.0
    %1418 = vmatpush1.msra.mxu0 %v1367
    %1419 = vmatprep.subr.mxu0 0.0
    %1420 = vmatpush1.msra.mxu0 %v1368
    %1421 = vmatprep.subr.mxu0 0.0
    %1422 = vmatpush1.msra.mxu0 %v1369
    %1423 = vmatprep.subr.mxu0 0.0
    %1424 = vmatpush1.msra.mxu0 %v1370
    %1425 = vmatprep.subr.mxu0 0.0
    %1426 = vmatpush1.msra.mxu0 %v1371
    %1427 = vmatprep.subr.mxu0 0.0
    %1428 = vmatpush1.msra.mxu0 %v1372
    %1429 = vmatprep.subr.mxu0 0.0
    %1430 = vmatpush1.msra.mxu0 %v1373
    %1431 = vmatprep.subr.mxu0 0.0
    %1432 = vmatpush1.msra.mxu0 %v1374
    %1433 = vmatprep.subr.mxu0 0.0
    %1434 = vmatpush1.msra.mxu0 %v1389
    %1435 = vmatprep.subr.mxu0 0.0
    %1436 = vmatpush1.msra.mxu0 0.0
    %1437 = vmatprep.subr.mxu0 0.0
    %1438 = vmatpush1.msra.mxu0 0.0
    %1439 = vmatprep.subr.mxu0 0.0
    %1440 = vmatpush1.msra.mxu0 0.0
    %1441 = vmatprep.subr.mxu0 0.0
    %1442 = vmatpush1.msra.mxu0 0.0
    %1443 = vmatprep.subr.mxu0 0.0
    %1444 = vmatpush1.msra.mxu0 0.0
    %1445 = vmatprep.subr.mxu0 0.0
    %1446 = vmatpush1.msra.mxu0 0.0
    %1447 = vmatprep.subr.mxu0 0.0
    %1448 = vmatpush1.msra.mxu0 0.0
    %1449 = vmatprep.subr.mxu0 0.0
    %1450 = vmatpush1.msra.mxu0 0.0
    %1451 = vmatprep.subr.mxu0 0.0
    %1452 = vmatpush1.msra.mxu0 0.0
    %1453 = vmatprep.subr.mxu0 0.0
    %1454 = vmatpush1.msra.mxu0 0.0
    %1455 = vmatprep.mubr.f32.mxu0 %v1386
    %1456 = vmatmul.mubr.f32.gmra.mrb[0].mxu0 %v1383
    %v1457 = vpop.f32.mrb[0].mxu0
    %v1458 = vadd.f32 0.0, %v1457
    %v1459 = vpop.f32.mrb[0].mxu0
    %1460 = vdwg.mxu0
    %v1461 = vadd.f32 %v1350, %v1458
    %s1462 = scalar_lea.vmem %s0, 52
    %v1463 = vld [vmem:[%s1462] sm:$0xf]
    %s1464 = scalar_lea.vmem %s1, 2288
    %v1465 = vld [vmem:[%s1464] sm:$0xff]
    %v1466 = vld [vmem:[%s1464 + $0x8] sm:$0xff]
    %v1467 = vld [vmem:[%s1464 + $0x10] sm:$0xff]
    %v1468 = vld [vmem:[%s1464 + $0x18] sm:$0xff]
    %v1469 = vld [vmem:[%s1464 + $0x20] sm:$0xff]
    %v1470 = vld [vmem:[%s1464 + $0x28] sm:$0xff]
    %v1471 = vld [vmem:[%s1464 + $0x30] sm:$0xff]
    %v1472 = vld [vmem:[%s1464 + $0x38] sm:$0xff]
    %v1473 = vld [vmem:[%s1464 + $0x40] sm:$0xff]
    %v1474 = vld [vmem:[%s1464 + $0x48] sm:$0xff]
    %v1475 = vld [vmem:[%s1464 + $0x50] sm:$0xff]
    %v1476 = vld [vmem:[%s1464 + $0x58] sm:$0xff]
    %v1477 = vld [vmem:[%s1464 + $0x60] sm:$0xff]
    %v1478 = vld [vmem:[%s1464 + $0x68] sm:$0xff]
    %v1479 = vld [vmem:[%s1464 + $0x70] sm:$0xff]
    %v1480 = vld [vmem:[%s1464 + $0x78] sm:$0xff]
    %v1481 = vld [vmem:[%s1464 + $0x80] sm:$0xff]
    %v1482 = vld [vmem:[%s1464 + $0x88] sm:$0xff]
    %v1483 = vld [vmem:[%s1464 + $0x90] sm:$0xff]
    %v1484 = vld [vmem:[%s1464 + $0x98] sm:$0xff]
    %v1485 = vld [vmem:[%s1464 + $0xa0] sm:$0xff]
    %v1486 = vld [vmem:[%s1464 + $0xa8] sm:$0x1]
    %v1489 = vunpack.c.l.s4 1983009808
    %v1490 = vunpack.c.0.s8 %v1489
    %v1491 = vlaneseq
    %v1492 = vshrl.u32 %v1491, 7
    %v1493 = vsub.s32 %v1490, %v1492
    %v1494 = vrot.slane %v1463, %v1493
    %v1495 = vcombine.high %v1494, %v1494
    %v1497 = vsel %vm79, %v1495, 0
    %v1500 = vsel %vm82, %v1486, 0
    %1502 = vmatprep.subr.mxu0 0.0
    %1503 = vmatpush1.msra.mxu0 %v1465
    %1504 = vmatprep.subr.mxu0 0.0
    %1505 = vmatpush1.msra.mxu0 %v1466
    %1506 = vmatprep.subr.mxu0 0.0
    %1507 = vmatpush1.msra.mxu0 %v1467
    %1508 = vmatprep.subr.mxu0 0.0
    %1509 = vmatpush1.msra.mxu0 %v1468
    %1510 = vmatprep.subr.mxu0 0.0
    %1511 = vmatpush1.msra.mxu0 %v1469
    %1512 = vmatprep.subr.mxu0 0.0
    %1513 = vmatpush1.msra.mxu0 %v1470
    %1514 = vmatprep.subr.mxu0 0.0
    %1515 = vmatpush1.msra.mxu0 %v1471
    %1516 = vmatprep.subr.mxu0 0.0
    %1517 = vmatpush1.msra.mxu0 %v1472
    %1518 = vmatprep.subr.mxu0 0.0
    %1519 = vmatpush1.msra.mxu0 %v1473
    %1520 = vmatprep.subr.mxu0 0.0
    %1521 = vmatpush1.msra.mxu0 %v1474
    %1522 = vmatprep.subr.mxu0 0.0
    %1523 = vmatpush1.msra.mxu0 %v1475
    %1524 = vmatprep.subr.mxu0 0.0
    %1525 = vmatpush1.msra.mxu0 %v1476
    %1526 = vmatprep.subr.mxu0 0.0
    %1527 = vmatpush1.msra.mxu0 %v1477
    %1528 = vmatprep.subr.mxu0 0.0
    %1529 = vmatpush1.msra.mxu0 %v1478
    %1530 = vmatprep.subr.mxu0 0.0
    %1531 = vmatpush1.msra.mxu0 %v1479
    %1532 = vmatprep.subr.mxu0 0.0
    %1533 = vmatpush1.msra.mxu0 %v1480
    %1534 = vmatprep.subr.mxu0 0.0
    %1535 = vmatpush1.msra.mxu0 %v1481
    %1536 = vmatprep.subr.mxu0 0.0
    %1537 = vmatpush1.msra.mxu0 %v1482
    %1538 = vmatprep.subr.mxu0 0.0
    %1539 = vmatpush1.msra.mxu0 %v1483
    %1540 = vmatprep.subr.mxu0 0.0
    %1541 = vmatpush1.msra.mxu0 %v1484
    %1542 = vmatprep.subr.mxu0 0.0
    %1543 = vmatpush1.msra.mxu0 %v1485
    %1544 = vmatprep.subr.mxu0 0.0
    %1545 = vmatpush1.msra.mxu0 %v1500
    %1546 = vmatprep.subr.mxu0 0.0
    %1547 = vmatpush1.msra.mxu0 0.0
    %1548 = vmatprep.subr.mxu0 0.0
    %1549 = vmatpush1.msra.mxu0 0.0
    %1550 = vmatprep.subr.mxu0 0.0
    %1551 = vmatpush1.msra.mxu0 0.0
    %1552 = vmatprep.subr.mxu0 0.0
    %1553 = vmatpush1.msra.mxu0 0.0
    %1554 = vmatprep.subr.mxu0 0.0
    %1555 = vmatpush1.msra.mxu0 0.0
    %1556 = vmatprep.subr.mxu0 0.0
    %1557 = vmatpush1.msra.mxu0 0.0
    %1558 = vmatprep.subr.mxu0 0.0
    %1559 = vmatpush1.msra.mxu0 0.0
    %1560 = vmatprep.subr.mxu0 0.0
    %1561 = vmatpush1.msra.mxu0 0.0
    %1562 = vmatprep.subr.mxu0 0.0
    %1563 = vmatpush1.msra.mxu0 0.0
    %1564 = vmatprep.subr.mxu0 0.0
    %1565 = vmatpush1.msra.mxu0 0.0
    %1566 = vmatprep.mubr.f32.mxu0 %v1497
    %1567 = vmatmul.mubr.f32.gmra.mrb[0].mxu0 %v1494
    %v1568 = vpop.f32.mrb[0].mxu0
    %v1569 = vadd.f32 0.0, %v1568
    %v1570 = vpop.f32.mrb[0].mxu0
    %1571 = vdwg.mxu0
    %v1572 = vadd.f32 %v1461, %v1569
    %s1573 = scalar_lea.vmem %s0, 56
    %v1574 = vld [vmem:[%s1573] sm:$0xf]
    %s1575 = scalar_lea.vmem %s1, 2464
    %v1576 = vld [vmem:[%s1575] sm:$0xff]
    %v1577 = vld [vmem:[%s1575 + $0x8] sm:$0xff]
    %v1578 = vld [vmem:[%s1575 + $0x10] sm:$0xff]
    %v1579 = vld [vmem:[%s1575 + $0x18] sm:$0xff]
    %v1580 = vld [vmem:[%s1575 + $0x20] sm:$0xff]
    %v1581 = vld [vmem:[%s1575 + $0x28] sm:$0xff]
    %v1582 = vld [vmem:[%s1575 + $0x30] sm:$0xff]
    %v1583 = vld [vmem:[%s1575 + $0x38] sm:$0xff]
    %v1584 = vld [vmem:[%s1575 + $0x40] sm:$0xff]
    %v1585 = vld [vmem:[%s1575 + $0x48] sm:$0xff]
    %v1586 = vld [vmem:[%s1575 + $0x50] sm:$0xff]
    %v1587 = vld [vmem:[%s1575 + $0x58] sm:$0xff]
    %v1588 = vld [vmem:[%s1575 + $0x60] sm:$0xff]
    %v1589 = vld [vmem:[%s1575 + $0x68] sm:$0xff]
    %v1590 = vld [vmem:[%s1575 + $0x70] sm:$0xff]
    %v1591 = vld [vmem:[%s1575 + $0x78] sm:$0xff]
    %v1592 = vld [vmem:[%s1575 + $0x80] sm:$0xff]
    %v1593 = vld [vmem:[%s1575 + $0x88] sm:$0xff]
    %v1594 = vld [vmem:[%s1575 + $0x90] sm:$0xff]
    %v1595 = vld [vmem:[%s1575 + $0x98] sm:$0xff]
    %v1596 = vld [vmem:[%s1575 + $0xa0] sm:$0xff]
    %v1597 = vld [vmem:[%s1575 + $0xa8] sm:$0x1]
    %v1600 = vunpack.c.l.s4 1983009808
    %v1601 = vunpack.c.0.s8 %v1600
    %v1602 = vlaneseq
    %v1603 = vshrl.u32 %v1602, 7
    %v1604 = vsub.s32 %v1601, %v1603
    %v1605 = vrot.slane %v1574, %v1604
    %v1606 = vcombine.high %v1605, %v1605
    %v1608 = vsel %vm79, %v1606, 0
    %v1611 = vsel %vm82, %v1597, 0
    %1613 = vmatprep.subr.mxu0 0.0
    %1614 = vmatpush1.msra.mxu0 %v1576
    %1615 = vmatprep.subr.mxu0 0.0
    %1616 = vmatpush1.msra.mxu0 %v1577
    %1617 = vmatprep.subr.mxu0 0.0
    %1618 = vmatpush1.msra.mxu0 %v1578
    %1619 = vmatprep.subr.mxu0 0.0
    %1620 = vmatpush1.msra.mxu0 %v1579
    %1621 = vmatprep.subr.mxu0 0.0
    %1622 = vmatpush1.msra.mxu0 %v1580
    %1623 = vmatprep.subr.mxu0 0.0
    %1624 = vmatpush1.msra.mxu0 %v1581
    %1625 = vmatprep.subr.mxu0 0.0
    %1626 = vmatpush1.msra.mxu0 %v1582
    %1627 = vmatprep.subr.mxu0 0.0
    %1628 = vmatpush1.msra.mxu0 %v1583
    %1629 = vmatprep.subr.mxu0 0.0
    %1630 = vmatpush1.msra.mxu0 %v1584
    %1631 = vmatprep.subr.mxu0 0.0
    %1632 = vmatpush1.msra.mxu0 %v1585
    %1633 = vmatprep.subr.mxu0 0.0
    %1634 = vmatpush1.msra.mxu0 %v1586
    %1635 = vmatprep.subr.mxu0 0.0
    %1636 = vmatpush1.msra.mxu0 %v1587
    %1637 = vmatprep.subr.mxu0 0.0
    %1638 = vmatpush1.msra.mxu0 %v1588
    %1639 = vmatprep.subr.mxu0 0.0
    %1640 = vmatpush1.msra.mxu0 %v1589
    %1641 = vmatprep.subr.mxu0 0.0
    %1642 = vmatpush1.msra.mxu0 %v1590
    %1643 = vmatprep.subr.mxu0 0.0
    %1644 = vmatpush1.msra.mxu0 %v1591
    %1645 = vmatprep.subr.mxu0 0.0
    %1646 = vmatpush1.msra.mxu0 %v1592
    %1647 = vmatprep.subr.mxu0 0.0
    %1648 = vmatpush1.msra.mxu0 %v1593
    %1649 = vmatprep.subr.mxu0 0.0
    %1650 = vmatpush1.msra.mxu0 %v1594
    %1651 = vmatprep.subr.mxu0 0.0
    %1652 = vmatpush1.msra.mxu0 %v1595
    %1653 = vmatprep.subr.mxu0 0.0
    %1654 = vmatpush1.msra.mxu0 %v1596
    %1655 = vmatprep.subr.mxu0 0.0
    %1656 = vmatpush1.msra.mxu0 %v1611
    %1657 = vmatprep.subr.mxu0 0.0
    %1658 = vmatpush1.msra.mxu0 0.0
    %1659 = vmatprep.subr.mxu0 0.0
    %1660 = vmatpush1.msra.mxu0 0.0
    %1661 = vmatprep.subr.mxu0 0.0
    %1662 = vmatpush1.msra.mxu0 0.0
    %1663 = vmatprep.subr.mxu0 0.0
    %1664 = vmatpush1.msra.mxu0 0.0
    %1665 = vmatprep.subr.mxu0 0.0
    %1666 = vmatpush1.msra.mxu0 0.0
    %1667 = vmatprep.subr.mxu0 0.0
    %1668 = vmatpush1.msra.mxu0 0.0
    %1669 = vmatprep.subr.mxu0 0.0
    %1670 = vmatpush1.msra.mxu0 0.0
    %1671 = vmatprep.subr.mxu0 0.0
    %1672 = vmatpush1.msra.mxu0 0.0
    %1673 = vmatprep.subr.mxu0 0.0
    %1674 = vmatpush1.msra.mxu0 0.0
    %1675 = vmatprep.subr.mxu0 0.0
    %1676 = vmatpush1.msra.mxu0 0.0
    %1677 = vmatprep.mubr.f32.mxu0 %v1608
    %1678 = vmatmul.mubr.f32.gmra.mrb[0].mxu0 %v1605
    %v1679 = vpop.f32.mrb[0].mxu0
    %v1680 = vadd.f32 0.0, %v1679
    %v1681 = vpop.f32.mrb[0].mxu0
    %1682 = vdwg.mxu0
    %v1683 = vadd.f32 %v1572, %v1680
    %s1684 = scalar_lea.vmem %s0, 60
    %v1685 = vld [vmem:[%s1684] sm:$0xf]
    %s1686 = scalar_lea.vmem %s1, 2640
    %v1687 = vld [vmem:[%s1686] sm:$0xff]
    %v1688 = vld [vmem:[%s1686 + $0x8] sm:$0xff]
    %v1689 = vld [vmem:[%s1686 + $0x10] sm:$0xff]
    %v1690 = vld [vmem:[%s1686 + $0x18] sm:$0xff]
    %v1691 = vld [vmem:[%s1686 + $0x20] sm:$0xff]
    %v1692 = vld [vmem:[%s1686 + $0x28] sm:$0xff]
    %v1693 = vld [vmem:[%s1686 + $0x30] sm:$0xff]
    %v1694 = vld [vmem:[%s1686 + $0x38] sm:$0xff]
    %v1695 = vld [vmem:[%s1686 + $0x40] sm:$0xff]
    %v1696 = vld [vmem:[%s1686 + $0x48] sm:$0xff]
    %v1697 = vld [vmem:[%s1686 + $0x50] sm:$0xff]
    %v1698 = vld [vmem:[%s1686 + $0x58] sm:$0xff]
    %v1699 = vld [vmem:[%s1686 + $0x60] sm:$0xff]
    %v1700 = vld [vmem:[%s1686 + $0x68] sm:$0xff]
    %v1701 = vld [vmem:[%s1686 + $0x70] sm:$0xff]
    %v1702 = vld [vmem:[%s1686 + $0x78] sm:$0xff]
    %v1703 = vld [vmem:[%s1686 + $0x80] sm:$0xff]
    %v1704 = vld [vmem:[%s1686 + $0x88] sm:$0xff]
    %v1705 = vld [vmem:[%s1686 + $0x90] sm:$0xff]
    %v1706 = vld [vmem:[%s1686 + $0x98] sm:$0xff]
    %v1707 = vld [vmem:[%s1686 + $0xa0] sm:$0xff]
    %v1708 = vld [vmem:[%s1686 + $0xa8] sm:$0x1]
    %v1711 = vunpack.c.l.s4 1983009808
    %v1712 = vunpack.c.0.s8 %v1711
    %v1713 = vlaneseq
    %v1714 = vshrl.u32 %v1713, 7
    %v1715 = vsub.s32 %v1712, %v1714
    %v1716 = vrot.slane %v1685, %v1715
    %v1717 = vcombine.high %v1716, %v1716
    %v1719 = vsel %vm79, %v1717, 0
    %v1722 = vsel %vm82, %v1708, 0
    %1724 = vmatprep.subr.mxu0 0.0
    %1725 = vmatpush1.msra.mxu0 %v1687
    %1726 = vmatprep.subr.mxu0 0.0
    %1727 = vmatpush1.msra.mxu0 %v1688
    %1728 = vmatprep.subr.mxu0 0.0
    %1729 = vmatpush1.msra.mxu0 %v1689
    %1730 = vmatprep.subr.mxu0 0.0
    %1731 = vmatpush1.msra.mxu0 %v1690
    %1732 = vmatprep.subr.mxu0 0.0
    %1733 = vmatpush1.msra.mxu0 %v1691
    %1734 = vmatprep.subr.mxu0 0.0
    %1735 = vmatpush1.msra.mxu0 %v1692
    %1736 = vmatprep.subr.mxu0 0.0
    %1737 = vmatpush1.msra.mxu0 %v1693
    %1738 = vmatprep.subr.mxu0 0.0
    %1739 = vmatpush1.msra.mxu0 %v1694
    %1740 = vmatprep.subr.mxu0 0.0
    %1741 = vmatpush1.msra.mxu0 %v1695
    %1742 = vmatprep.subr.mxu0 0.0
    %1743 = vmatpush1.msra.mxu0 %v1696
    %1744 = vmatprep.subr.mxu0 0.0
    %1745 = vmatpush1.msra.mxu0 %v1697
    %1746 = vmatprep.subr.mxu0 0.0
    %1747 = vmatpush1.msra.mxu0 %v1698
    %1748 = vmatprep.subr.mxu0 0.0
    %1749 = vmatpush1.msra.mxu0 %v1699
    %1750 = vmatprep.subr.mxu0 0.0
    %1751 = vmatpush1.msra.mxu0 %v1700
    %1752 = vmatprep.subr.mxu0 0.0
    %1753 = vmatpush1.msra.mxu0 %v1701
    %1754 = vmatprep.subr.mxu0 0.0
    %1755 = vmatpush1.msra.mxu0 %v1702
    %1756 = vmatprep.subr.mxu0 0.0
    %1757 = vmatpush1.msra.mxu0 %v1703
    %1758 = vmatprep.subr.mxu0 0.0
    %1759 = vmatpush1.msra.mxu0 %v1704
    %1760 = vmatprep.subr.mxu0 0.0
    %1761 = vmatpush1.msra.mxu0 %v1705
    %1762 = vmatprep.subr.mxu0 0.0
    %1763 = vmatpush1.msra.mxu0 %v1706
    %1764 = vmatprep.subr.mxu0 0.0
    %1765 = vmatpush1.msra.mxu0 %v1707
    %1766 = vmatprep.subr.mxu0 0.0
    %1767 = vmatpush1.msra.mxu0 %v1722
    %1768 = vmatprep.subr.mxu0 0.0
    %1769 = vmatpush1.msra.mxu0 0.0
    %1770 = vmatprep.subr.mxu0 0.0
    %1771 = vmatpush1.msra.mxu0 0.0
    %1772 = vmatprep.subr.mxu0 0.0
    %1773 = vmatpush1.msra.mxu0 0.0
    %1774 = vmatprep.subr.mxu0 0.0
    %1775 = vmatpush1.msra.mxu0 0.0
    %1776 = vmatprep.subr.mxu0 0.0
    %1777 = vmatpush1.msra.mxu0 0.0
    %1778 = vmatprep.subr.mxu0 0.0
    %1779 = vmatpush1.msra.mxu0 0.0
    %1780 = vmatprep.subr.mxu0 0.0
    %1781 = vmatpush1.msra.mxu0 0.0
    %1782 = vmatprep.subr.mxu0 0.0
    %1783 = vmatpush1.msra.mxu0 0.0
    %1784 = vmatprep.subr.mxu0 0.0
    %1785 = vmatpush1.msra.mxu0 0.0
    %1786 = vmatprep.subr.mxu0 0.0
    %1787 = vmatpush1.msra.mxu0 0.0
    %1788 = vmatprep.mubr.f32.mxu0 %v1719
    %1789 = vmatmul.mubr.f32.gmra.mrb[0].mxu0 %v1716
    %v1790 = vpop.f32.mrb[0].mxu0
    %v1791 = vadd.f32 0.0, %v1790
    %v1792 = vpop.f32.mrb[0].mxu0
    %1793 = vdwg.mxu0
    %v1794 = vadd.f32 %v1683, %v1791
    %s1795 = scalar_lea.vmem %s0, 64
    %v1796 = vld [vmem:[%s1795] sm:$0xf]
    %s1797 = scalar_lea.vmem %s1, 2816
    %v1798 = vld [vmem:[%s1797] sm:$0xff]
    %v1799 = vld [vmem:[%s1797 + $0x8] sm:$0xff]
    %v1800 = vld [vmem:[%s1797 + $0x10] sm:$0xff]
    %v1801 = vld [vmem:[%s1797 + $0x18] sm:$0xff]
    %v1802 = vld [vmem:[%s1797 + $0x20] sm:$0xff]
    %v1803 = vld [vmem:[%s1797 + $0x28] sm:$0xff]
    %v1804 = vld [vmem:[%s1797 + $0x30] sm:$0xff]
    %v1805 = vld [vmem:[%s1797 + $0x38] sm:$0xff]
    %v1806 = vld [vmem:[%s1797 + $0x40] sm:$0xff]
    %v1807 = vld [vmem:[%s1797 + $0x48] sm:$0xff]
    %v1808 = vld [vmem:[%s1797 + $0x50] sm:$0xff]
    %v1809 = vld [vmem:[%s1797 + $0x58] sm:$0xff]
    %v1810 = vld [vmem:[%s1797 + $0x60] sm:$0xff]
    %v1811 = vld [vmem:[%s1797 + $0x68] sm:$0xff]
    %v1812 = vld [vmem:[%s1797 + $0x70] sm:$0xff]
    %v1813 = vld [vmem:[%s1797 + $0x78] sm:$0xff]
    %v1814 = vld [vmem:[%s1797 + $0x80] sm:$0xff]
    %v1815 = vld [vmem:[%s1797 + $0x88] sm:$0xff]
    %v1816 = vld [vmem:[%s1797 + $0x90] sm:$0xff]
    %v1817 = vld [vmem:[%s1797 + $0x98] sm:$0xff]
    %v1818 = vld [vmem:[%s1797 + $0xa0] sm:$0xff]
    %v1819 = vld [vmem:[%s1797 + $0xa8] sm:$0x1]
    %v1822 = vunpack.c.l.s4 1983009808
    %v1823 = vunpack.c.0.s8 %v1822
    %v1824 = vlaneseq
    %v1825 = vshrl.u32 %v1824, 7
    %v1826 = vsub.s32 %v1823, %v1825
    %v1827 = vrot.slane %v1796, %v1826
    %v1828 = vcombine.high %v1827, %v1827
    %v1830 = vsel %vm79, %v1828, 0
    %v1833 = vsel %vm82, %v1819, 0
    %1835 = vmatprep.subr.mxu0 0.0
    %1836 = vmatpush1.msra.mxu0 %v1798
    %1837 = vmatprep.subr.mxu0 0.0
    %1838 = vmatpush1.msra.mxu0 %v1799
    %1839 = vmatprep.subr.mxu0 0.0
    %1840 = vmatpush1.msra.mxu0 %v1800
    %1841 = vmatprep.subr.mxu0 0.0
    %1842 = vmatpush1.msra.mxu0 %v1801
    %1843 = vmatprep.subr.mxu0 0.0
    %1844 = vmatpush1.msra.mxu0 %v1802
    %1845 = vmatprep.subr.mxu0 0.0
    %1846 = vmatpush1.msra.mxu0 %v1803
    %1847 = vmatprep.subr.mxu0 0.0
    %1848 = vmatpush1.msra.mxu0 %v1804
    %1849 = vmatprep.subr.mxu0 0.0
    %1850 = vmatpush1.msra.mxu0 %v1805
    %1851 = vmatprep.subr.mxu0 0.0
    %1852 = vmatpush1.msra.mxu0 %v1806
    %1853 = vmatprep.subr.mxu0 0.0
    %1854 = vmatpush1.msra.mxu0 %v1807
    %1855 = vmatprep.subr.mxu0 0.0
    %1856 = vmatpush1.msra.mxu0 %v1808
    %1857 = vmatprep.subr.mxu0 0.0
    %1858 = vmatpush1.msra.mxu0 %v1809
    %1859 = vmatprep.subr.mxu0 0.0
    %1860 = vmatpush1.msra.mxu0 %v1810
    %1861 = vmatprep.subr.mxu0 0.0
    %1862 = vmatpush1.msra.mxu0 %v1811
    %1863 = vmatprep.subr.mxu0 0.0
    %1864 = vmatpush1.msra.mxu0 %v1812
    %1865 = vmatprep.subr.mxu0 0.0
    %1866 = vmatpush1.msra.mxu0 %v1813
    %1867 = vmatprep.subr.mxu0 0.0
    %1868 = vmatpush1.msra.mxu0 %v1814
    %1869 = vmatprep.subr.mxu0 0.0
    %1870 = vmatpush1.msra.mxu0 %v1815
    %1871 = vmatprep.subr.mxu0 0.0
    %1872 = vmatpush1.msra.mxu0 %v1816
    %1873 = vmatprep.subr.mxu0 0.0
    %1874 = vmatpush1.msra.mxu0 %v1817
    %1875 = vmatprep.subr.mxu0 0.0
    %1876 = vmatpush1.msra.mxu0 %v1818
    %1877 = vmatprep.subr.mxu0 0.0
    %1878 = vmatpush1.msra.mxu0 %v1833
    %1879 = vmatprep.subr.mxu0 0.0
    %1880 = vmatpush1.msra.mxu0 0.0
    %1881 = vmatprep.subr.mxu0 0.0
    %1882 = vmatpush1.msra.mxu0 0.0
    %1883 = vmatprep.subr.mxu0 0.0
    %1884 = vmatpush1.msra.mxu0 0.0
    %1885 = vmatprep.subr.mxu0 0.0
    %1886 = vmatpush1.msra.mxu0 0.0
    %1887 = vmatprep.subr.mxu0 0.0
    %1888 = vmatpush1.msra.mxu0 0.0
    %1889 = vmatprep.subr.mxu0 0.0
    %1890 = vmatpush1.msra.mxu0 0.0
    %1891 = vmatprep.subr.mxu0 0.0
    %1892 = vmatpush1.msra.mxu0 0.0
    %1893 = vmatprep.subr.mxu0 0.0
    %1894 = vmatpush1.msra.mxu0 0.0
    %1895 = vmatprep.subr.mxu0 0.0
    %1896 = vmatpush1.msra.mxu0 0.0
    %1897 = vmatprep.subr.mxu0 0.0
    %1898 = vmatpush1.msra.mxu0 0.0
    %1899 = vmatprep.mubr.f32.mxu0 %v1830
    %1900 = vmatmul.mubr.f32.gmra.mrb[0].mxu0 %v1827
    %v1901 = vpop.f32.mrb[0].mxu0
    %v1902 = vadd.f32 0.0, %v1901
    %v1903 = vpop.f32.mrb[0].mxu0
    %1904 = vdwg.mxu0
    %v1905 = vadd.f32 %v1794, %v1902
    %s1906 = scalar_lea.vmem %s0, 68
    %v1907 = vld [vmem:[%s1906] sm:$0xf]
    %s1908 = scalar_lea.vmem %s1, 2992
    %v1909 = vld [vmem:[%s1908] sm:$0xff]
    %v1910 = vld [vmem:[%s1908 + $0x8] sm:$0xff]
    %v1911 = vld [vmem:[%s1908 + $0x10] sm:$0xff]
    %v1912 = vld [vmem:[%s1908 + $0x18] sm:$0xff]
    %v1913 = vld [vmem:[%s1908 + $0x20] sm:$0xff]
    %v1914 = vld [vmem:[%s1908 + $0x28] sm:$0xff]
    %v1915 = vld [vmem:[%s1908 + $0x30] sm:$0xff]
    %v1916 = vld [vmem:[%s1908 + $0x38] sm:$0xff]
    %v1917 = vld [vmem:[%s1908 + $0x40] sm:$0xff]
    %v1918 = vld [vmem:[%s1908 + $0x48] sm:$0xff]
    %v1919 = vld [vmem:[%s1908 + $0x50] sm:$0xff]
    %v1920 = vld [vmem:[%s1908 + $0x58] sm:$0xff]
    %v1921 = vld [vmem:[%s1908 + $0x60] sm:$0xff]
    %v1922 = vld [vmem:[%s1908 + $0x68] sm:$0xff]
    %v1923 = vld [vmem:[%s1908 + $0x70] sm:$0xff]
    %v1924 = vld [vmem:[%s1908 + $0x78] sm:$0xff]
    %v1925 = vld [vmem:[%s1908 + $0x80] sm:$0xff]
    %v1926 = vld [vmem:[%s1908 + $0x88] sm:$0xff]
    %v1927 = vld [vmem:[%s1908 + $0x90] sm:$0xff]
    %v1928 = vld [vmem:[%s1908 + $0x98] sm:$0xff]
    %v1929 = vld [vmem:[%s1908 + $0xa0] sm:$0xff]
    %v1930 = vld [vmem:[%s1908 + $0xa8] sm:$0x1]
    %v1933 = vunpack.c.l.s4 1983009808
    %v1934 = vunpack.c.0.s8 %v1933
    %v1935 = vlaneseq
    %v1936 = vshrl.u32 %v1935, 7
    %v1937 = vsub.s32 %v1934, %v1936
    %v1938 = vrot.slane %v1907, %v1937
    %v1939 = vcombine.high %v1938, %v1938
    %v1941 = vsel %vm79, %v1939, 0
    %v1944 = vsel %vm82, %v1930, 0
    %1946 = vmatprep.subr.mxu0 0.0
    %1947 = vmatpush1.msra.mxu0 %v1909
    %1948 = vmatprep.subr.mxu0 0.0
    %1949 = vmatpush1.msra.mxu0 %v1910
    %1950 = vmatprep.subr.mxu0 0.0
    %1951 = vmatpush1.msra.mxu0 %v1911
    %1952 = vmatprep.subr.mxu0 0.0
    %1953 = vmatpush1.msra.mxu0 %v1912
    %1954 = vmatprep.subr.mxu0 0.0
    %1955 = vmatpush1.msra.mxu0 %v1913
    %1956 = vmatprep.subr.mxu0 0.0
    %1957 = vmatpush1.msra.mxu0 %v1914
    %1958 = vmatprep.subr.mxu0 0.0
    %1959 = vmatpush1.msra.mxu0 %v1915
    %1960 = vmatprep.subr.mxu0 0.0
    %1961 = vmatpush1.msra.mxu0 %v1916
    %1962 = vmatprep.subr.mxu0 0.0
    %1963 = vmatpush1.msra.mxu0 %v1917
    %1964 = vmatprep.subr.mxu0 0.0
    %1965 = vmatpush1.msra.mxu0 %v1918
    %1966 = vmatprep.subr.mxu0 0.0
    %1967 = vmatpush1.msra.mxu0 %v1919
    %1968 = vmatprep.subr.mxu0 0.0
    %1969 = vmatpush1.msra.mxu0 %v1920
    %1970 = vmatprep.subr.mxu0 0.0
    %1971 = vmatpush1.msra.mxu0 %v1921
    %1972 = vmatprep.subr.mxu0 0.0
    %1973 = vmatpush1.msra.mxu0 %v1922
    %1974 = vmatprep.subr.mxu0 0.0
    %1975 = vmatpush1.msra.mxu0 %v1923
    %1976 = vmatprep.subr.mxu0 0.0
    %1977 = vmatpush1.msra.mxu0 %v1924
    %1978 = vmatprep.subr.mxu0 0.0
    %1979 = vmatpush1.msra.mxu0 %v1925
    %1980 = vmatprep.subr.mxu0 0.0
    %1981 = vmatpush1.msra.mxu0 %v1926
    %1982 = vmatprep.subr.mxu0 0.0
    %1983 = vmatpush1.msra.mxu0 %v1927
    %1984 = vmatprep.subr.mxu0 0.0
    %1985 = vmatpush1.msra.mxu0 %v1928
    %1986 = vmatprep.subr.mxu0 0.0
    %1987 = vmatpush1.msra.mxu0 %v1929
    %1988 = vmatprep.subr.mxu0 0.0
    %1989 = vmatpush1.msra.mxu0 %v1944
    %1990 = vmatprep.subr.mxu0 0.0
    %1991 = vmatpush1.msra.mxu0 0.0
    %1992 = vmatprep.subr.mxu0 0.0
    %1993 = vmatpush1.msra.mxu0 0.0
    %1994 = vmatprep.subr.mxu0 0.0
    %1995 = vmatpush1.msra.mxu0 0.0
    %1996 = vmatprep.subr.mxu0 0.0
    %1997 = vmatpush1.msra.mxu0 0.0
    %1998 = vmatprep.subr.mxu0 0.0
    %1999 = vmatpush1.msra.mxu0 0.0
    %2000 = vmatprep.subr.mxu0 0.0
    %2001 = vmatpush1.msra.mxu0 0.0
    %2002 = vmatprep.subr.mxu0 0.0
    %2003 = vmatpush1.msra.mxu0 0.0
    %2004 = vmatprep.subr.mxu0 0.0
    %2005 = vmatpush1.msra.mxu0 0.0
    %2006 = vmatprep.subr.mxu0 0.0
    %2007 = vmatpush1.msra.mxu0 0.0
    %2008 = vmatprep.subr.mxu0 0.0
    %2009 = vmatpush1.msra.mxu0 0.0
    %2010 = vmatprep.mubr.f32.mxu0 %v1941
    %2011 = vmatmul.mubr.f32.gmra.mrb[0].mxu0 %v1938
    %v2012 = vpop.f32.mrb[0].mxu0
    %v2013 = vadd.f32 0.0, %v2012
    %v2014 = vpop.f32.mrb[0].mxu0
    %2015 = vdwg.mxu0
    %v2016 = vadd.f32 %v1905, %v2013
    %s2017 = scalar_lea.vmem %s0, 72
    %v2018 = vld [vmem:[%s2017] sm:$0xf]
    %s2019 = scalar_lea.vmem %s1, 3168
    %v2020 = vld [vmem:[%s2019] sm:$0xff]
    %v2021 = vld [vmem:[%s2019 + $0x8] sm:$0xff]
    %v2022 = vld [vmem:[%s2019 + $0x10] sm:$0xff]
    %v2023 = vld [vmem:[%s2019 + $0x18] sm:$0xff]
    %v2024 = vld [vmem:[%s2019 + $0x20] sm:$0xff]
    %v2025 = vld [vmem:[%s2019 + $0x28] sm:$0xff]
    %v2026 = vld [vmem:[%s2019 + $0x30] sm:$0xff]
    %v2027 = vld [vmem:[%s2019 + $0x38] sm:$0xff]
    %v2028 = vld [vmem:[%s2019 + $0x40] sm:$0xff]
    %v2029 = vld [vmem:[%s2019 + $0x48] sm:$0xff]
    %v2030 = vld [vmem:[%s2019 + $0x50] sm:$0xff]
    %v2031 = vld [vmem:[%s2019 + $0x58] sm:$0xff]
    %v2032 = vld [vmem:[%s2019 + $0x60] sm:$0xff]
    %v2033 = vld [vmem:[%s2019 + $0x68] sm:$0xff]
    %v2034 = vld [vmem:[%s2019 + $0x70] sm:$0xff]
    %v2035 = vld [vmem:[%s2019 + $0x78] sm:$0xff]
    %v2036 = vld [vmem:[%s2019 + $0x80] sm:$0xff]
    %v2037 = vld [vmem:[%s2019 + $0x88] sm:$0xff]
    %v2038 = vld [vmem:[%s2019 + $0x90] sm:$0xff]
    %v2039 = vld [vmem:[%s2019 + $0x98] sm:$0xff]
    %v2040 = vld [vmem:[%s2019 + $0xa0] sm:$0xff]
    %v2041 = vld [vmem:[%s2019 + $0xa8] sm:$0x1]
    %v2044 = vunpack.c.l.s4 1983009808
    %v2045 = vunpack.c.0.s8 %v2044
    %v2046 = vlaneseq
    %v2047 = vshrl.u32 %v2046, 7
    %v2048 = vsub.s32 %v2045, %v2047
    %v2049 = vrot.slane %v2018, %v2048
    %v2050 = vcombine.high %v2049, %v2049
    %v2052 = vsel %vm79, %v2050, 0
    %v2055 = vsel %vm82, %v2041, 0
    %2057 = vmatprep.subr.mxu0 0.0
    %2058 = vmatpush1.msra.mxu0 %v2020
    %2059 = vmatprep.subr.mxu0 0.0
    %2060 = vmatpush1.msra.mxu0 %v2021
    %2061 = vmatprep.subr.mxu0 0.0
    %2062 = vmatpush1.msra.mxu0 %v2022
    %2063 = vmatprep.subr.mxu0 0.0
    %2064 = vmatpush1.msra.mxu0 %v2023
    %2065 = vmatprep.subr.mxu0 0.0
    %2066 = vmatpush1.msra.mxu0 %v2024
    %2067 = vmatprep.subr.mxu0 0.0
    %2068 = vmatpush1.msra.mxu0 %v2025
    %2069 = vmatprep.subr.mxu0 0.0
    %2070 = vmatpush1.msra.mxu0 %v2026
    %2071 = vmatprep.subr.mxu0 0.0
    %2072 = vmatpush1.msra.mxu0 %v2027
    %2073 = vmatprep.subr.mxu0 0.0
    %2074 = vmatpush1.msra.mxu0 %v2028
    %2075 = vmatprep.subr.mxu0 0.0
    %2076 = vmatpush1.msra.mxu0 %v2029
    %2077 = vmatprep.subr.mxu0 0.0
    %2078 = vmatpush1.msra.mxu0 %v2030
    %2079 = vmatprep.subr.mxu0 0.0
    %2080 = vmatpush1.msra.mxu0 %v2031
    %2081 = vmatprep.subr.mxu0 0.0
    %2082 = vmatpush1.msra.mxu0 %v2032
    %2083 = vmatprep.subr.mxu0 0.0
    %2084 = vmatpush1.msra.mxu0 %v2033
    %2085 = vmatprep.subr.mxu0 0.0
    %2086 = vmatpush1.msra.mxu0 %v2034
    %2087 = vmatprep.subr.mxu0 0.0
    %2088 = vmatpush1.msra.mxu0 %v2035
    %2089 = vmatprep.subr.mxu0 0.0
    %2090 = vmatpush1.msra.mxu0 %v2036
    %2091 = vmatprep.subr.mxu0 0.0
    %2092 = vmatpush1.msra.mxu0 %v2037
    %2093 = vmatprep.subr.mxu0 0.0
    %2094 = vmatpush1.msra.mxu0 %v2038
    %2095 = vmatprep.subr.mxu0 0.0
    %2096 = vmatpush1.msra.mxu0 %v2039
    %2097 = vmatprep.subr.mxu0 0.0
    %2098 = vmatpush1.msra.mxu0 %v2040
    %2099 = vmatprep.subr.mxu0 0.0
    %2100 = vmatpush1.msra.mxu0 %v2055
    %2101 = vmatprep.subr.mxu0 0.0
    %2102 = vmatpush1.msra.mxu0 0.0
    %2103 = vmatprep.subr.mxu0 0.0
    %2104 = vmatpush1.msra.mxu0 0.0
    %2105 = vmatprep.subr.mxu0 0.0
    %2106 = vmatpush1.msra.mxu0 0.0
    %2107 = vmatprep.subr.mxu0 0.0
    %2108 = vmatpush1.msra.mxu0 0.0
    %2109 = vmatprep.subr.mxu0 0.0
    %2110 = vmatpush1.msra.mxu0 0.0
    %2111 = vmatprep.subr.mxu0 0.0
    %2112 = vmatpush1.msra.mxu0 0.0
    %2113 = vmatprep.subr.mxu0 0.0
    %2114 = vmatpush1.msra.mxu0 0.0
    %2115 = vmatprep.subr.mxu0 0.0
    %2116 = vmatpush1.msra.mxu0 0.0
    %2117 = vmatprep.subr.mxu0 0.0
    %2118 = vmatpush1.msra.mxu0 0.0
    %2119 = vmatprep.subr.mxu0 0.0
    %2120 = vmatpush1.msra.mxu0 0.0
    %2121 = vmatprep.mubr.f32.mxu0 %v2052
    %2122 = vmatmul.mubr.f32.gmra.mrb[0].mxu0 %v2049
    %v2123 = vpop.f32.mrb[0].mxu0
    %v2124 = vadd.f32 0.0, %v2123
    %v2125 = vpop.f32.mrb[0].mxu0
    %2126 = vdwg.mxu0
    %v2127 = vadd.f32 %v2016, %v2124
    %s2128 = scalar_lea.vmem %s0, 76
    %v2129 = vld [vmem:[%s2128] sm:$0xf]
    %s2130 = scalar_lea.vmem %s1, 3344
    %v2131 = vld [vmem:[%s2130] sm:$0xff]
    %v2132 = vld [vmem:[%s2130 + $0x8] sm:$0xff]
    %v2133 = vld [vmem:[%s2130 + $0x10] sm:$0xff]
    %v2134 = vld [vmem:[%s2130 + $0x18] sm:$0xff]
    %v2135 = vld [vmem:[%s2130 + $0x20] sm:$0xff]
    %v2136 = vld [vmem:[%s2130 + $0x28] sm:$0xff]
    %v2137 = vld [vmem:[%s2130 + $0x30] sm:$0xff]
    %v2138 = vld [vmem:[%s2130 + $0x38] sm:$0xff]
    %v2139 = vld [vmem:[%s2130 + $0x40] sm:$0xff]
    %v2140 = vld [vmem:[%s2130 + $0x48] sm:$0xff]
    %v2141 = vld [vmem:[%s2130 + $0x50] sm:$0xff]
    %v2142 = vld [vmem:[%s2130 + $0x58] sm:$0xff]
    %v2143 = vld [vmem:[%s2130 + $0x60] sm:$0xff]
    %v2144 = vld [vmem:[%s2130 + $0x68] sm:$0xff]
    %v2145 = vld [vmem:[%s2130 + $0x70] sm:$0xff]
    %v2146 = vld [vmem:[%s2130 + $0x78] sm:$0xff]
    %v2147 = vld [vmem:[%s2130 + $0x80] sm:$0xff]
    %v2148 = vld [vmem:[%s2130 + $0x88] sm:$0xff]
    %v2149 = vld [vmem:[%s2130 + $0x90] sm:$0xff]
    %v2150 = vld [vmem:[%s2130 + $0x98] sm:$0xff]
    %v2151 = vld [vmem:[%s2130 + $0xa0] sm:$0xff]
    %v2152 = vld [vmem:[%s2130 + $0xa8] sm:$0x1]
    %v2155 = vunpack.c.l.s4 1983009808
    %v2156 = vunpack.c.0.s8 %v2155
    %v2157 = vlaneseq
    %v2158 = vshrl.u32 %v2157, 7
    %v2159 = vsub.s32 %v2156, %v2158
    %v2160 = vrot.slane %v2129, %v2159
    %v2161 = vcombine.high %v2160, %v2160
    %v2163 = vsel %vm79, %v2161, 0
    %v2166 = vsel %vm82, %v2152, 0
    %2168 = vmatprep.subr.mxu0 0.0
    %2169 = vmatpush1.msra.mxu0 %v2131
    %2170 = vmatprep.subr.mxu0 0.0
    %2171 = vmatpush1.msra.mxu0 %v2132
    %2172 = vmatprep.subr.mxu0 0.0
    %2173 = vmatpush1.msra.mxu0 %v2133
    %2174 = vmatprep.subr.mxu0 0.0
    %2175 = vmatpush1.msra.mxu0 %v2134
    %2176 = vmatprep.subr.mxu0 0.0
    %2177 = vmatpush1.msra.mxu0 %v2135
    %2178 = vmatprep.subr.mxu0 0.0
    %2179 = vmatpush1.msra.mxu0 %v2136
    %2180 = vmatprep.subr.mxu0 0.0
    %2181 = vmatpush1.msra.mxu0 %v2137
    %2182 = vmatprep.subr.mxu0 0.0
    %2183 = vmatpush1.msra.mxu0 %v2138
    %2184 = vmatprep.subr.mxu0 0.0
    %2185 = vmatpush1.msra.mxu0 %v2139
    %2186 = vmatprep.subr.mxu0 0.0
    %2187 = vmatpush1.msra.mxu0 %v2140
    %2188 = vmatprep.subr.mxu0 0.0
    %2189 = vmatpush1.msra.mxu0 %v2141
    %2190 = vmatprep.subr.mxu0 0.0
    %2191 = vmatpush1.msra.mxu0 %v2142
    %2192 = vmatprep.subr.mxu0 0.0
    %2193 = vmatpush1.msra.mxu0 %v2143
    %2194 = vmatprep.subr.mxu0 0.0
    %2195 = vmatpush1.msra.mxu0 %v2144
    %2196 = vmatprep.subr.mxu0 0.0
    %2197 = vmatpush1.msra.mxu0 %v2145
    %2198 = vmatprep.subr.mxu0 0.0
    %2199 = vmatpush1.msra.mxu0 %v2146
    %2200 = vmatprep.subr.mxu0 0.0
    %2201 = vmatpush1.msra.mxu0 %v2147
    %2202 = vmatprep.subr.mxu0 0.0
    %2203 = vmatpush1.msra.mxu0 %v2148
    %2204 = vmatprep.subr.mxu0 0.0
    %2205 = vmatpush1.msra.mxu0 %v2149
    %2206 = vmatprep.subr.mxu0 0.0
    %2207 = vmatpush1.msra.mxu0 %v2150
    %2208 = vmatprep.subr.mxu0 0.0
    %2209 = vmatpush1.msra.mxu0 %v2151
    %2210 = vmatprep.subr.mxu0 0.0
    %2211 = vmatpush1.msra.mxu0 %v2166
    %2212 = vmatprep.subr.mxu0 0.0
    %2213 = vmatpush1.msra.mxu0 0.0
    %2214 = vmatprep.subr.mxu0 0.0
    %2215 = vmatpush1.msra.mxu0 0.0
    %2216 = vmatprep.subr.mxu0 0.0
    %2217 = vmatpush1.msra.mxu0 0.0
    %2218 = vmatprep.subr.mxu0 0.0
    %2219 = vmatpush1.msra.mxu0 0.0
    %2220 = vmatprep.subr.mxu0 0.0
    %2221 = vmatpush1.msra.mxu0 0.0
    %2222 = vmatprep.subr.mxu0 0.0
    %2223 = vmatpush1.msra.mxu0 0.0
    %2224 = vmatprep.subr.mxu0 0.0
    %2225 = vmatpush1.msra.mxu0 0.0
    %2226 = vmatprep.subr.mxu0 0.0
    %2227 = vmatpush1.msra.mxu0 0.0
    %2228 = vmatprep.subr.mxu0 0.0
    %2229 = vmatpush1.msra.mxu0 0.0
    %2230 = vmatprep.subr.mxu0 0.0
    %2231 = vmatpush1.msra.mxu0 0.0
    %2232 = vmatprep.mubr.f32.mxu0 %v2163
    %2233 = vmatmul.mubr.f32.gmra.mrb[0].mxu0 %v2160
    %v2234 = vpop.f32.mrb[0].mxu0
    %v2235 = vadd.f32 0.0, %v2234
    %v2236 = vpop.f32.mrb[0].mxu0
    %2237 = vdwg.mxu0
    %v2238 = vadd.f32 %v2127, %v2235
    %v2239 = vld [vmem:[%s2] sm:$0x1]
    %v2241 = vlaneseq
    %v2242 = vshrl.u32 %v2241, 7
    %v2243 = vsub.s32 0, %v2242
    %v2244 = vrot.slane %v2239, %v2243
    %v2246 = vadd.f32 %v2238, %v2244
    %v2247 = vmax.f32 %v2246, 0.0
    %v2248 = vld [vmem:[%s3] sm:$0xff]
    %v2249 = vld [vmem:[%s3 + $0x8] sm:$0xff]
    %v2250 = vld [vmem:[%s3 + $0x10] sm:$0xff]
    %v2251 = vld [vmem:[%s3 + $0x18] sm:$0xff]
    %v2252 = vld [vmem:[%s4] sm:$0x1]
    %v2254 = vlaneseq
    %v2255 = vshrl.u32 %v2254, 7
    %v2256 = vsub.s32 0, %v2255
    %v2257 = vrot.slane %v2252, %v2256
    %vm2259 = vcmask 261120
    %v2261 = vsel %vm2259, %v2247, 0
    %2263 = vmatprep.subr.mxu0 0.0
    %2264 = vmatpush1.msra.mxu0 %v2248
    %2265 = vmatprep.subr.mxu0 0.0
    %2266 = vmatpush1.msra.mxu0 %v2249
    %2267 = vmatprep.subr.mxu0 0.0
    %2268 = vmatpush1.msra.mxu0 %v2250
    %2269 = vmatprep.subr.mxu0 0.0
    %2270 = vmatpush1.msra.mxu0 %v2251
    %2271 = vmatprep.subr.mxu0 0.0
    %2272 = vmatpush1.msra.mxu0 0.0
    %2273 = vmatprep.subr.mxu0 0.0
    %2274 = vmatpush1.msra.mxu0 0.0
    %2275 = vmatprep.subr.mxu0 0.0
    %2276 = vmatpush1.msra.mxu0 0.0
    %2277 = vmatprep.subr.mxu0 0.0
    %2278 = vmatpush1.msra.mxu0 0.0
    %2279 = vmatprep.subr.mxu0 0.0
    %2280 = vmatpush1.msra.mxu0 0.0
    %2281 = vmatprep.subr.mxu0 0.0
    %2282 = vmatpush1.msra.mxu0 0.0
    %2283 = vmatprep.subr.mxu0 0.0
    %2284 = vmatpush1.msra.mxu0 0.0
    %2285 = vmatprep.subr.mxu0 0.0
    %2286 = vmatpush1.msra.mxu0 0.0
    %2287 = vmatprep.subr.mxu0 0.0
    %2288 = vmatpush1.msra.mxu0 0.0
    %2289 = vmatprep.subr.mxu0 0.0
    %2290 = vmatpush1.msra.mxu0 0.0
    %2291 = vmatprep.subr.mxu0 0.0
    %2292 = vmatpush1.msra.mxu0 0.0
    %2293 = vmatprep.subr.mxu0 0.0
    %2294 = vmatpush1.msra.mxu0 0.0
    %2295 = vmatprep.subr.mxu0 0.0
    %2296 = vmatpush1.msra.mxu0 0.0
    %2297 = vmatprep.subr.mxu0 0.0
    %2298 = vmatpush1.msra.mxu0 0.0
    %2299 = vmatprep.subr.mxu0 0.0
    %2300 = vmatpush1.msra.mxu0 0.0
    %2301 = vmatprep.subr.mxu0 0.0
    %2302 = vmatpush1.msra.mxu0 0.0
    %2303 = vmatprep.subr.mxu0 0.0
    %2304 = vmatpush1.msra.mxu0 0.0
    %2305 = vmatprep.subr.mxu0 0.0
    %2306 = vmatpush1.msra.mxu0 0.0
    %2307 = vmatprep.subr.mxu0 0.0
    %2308 = vmatpush1.msra.mxu0 0.0
    %2309 = vmatprep.subr.mxu0 0.0
    %2310 = vmatpush1.msra.mxu0 0.0
    %2311 = vmatprep.subr.mxu0 0.0
    %2312 = vmatpush1.msra.mxu0 0.0
    %2313 = vmatprep.subr.mxu0 0.0
    %2314 = vmatpush1.msra.mxu0 0.0
    %2315 = vmatprep.subr.mxu0 0.0
    %2316 = vmatpush1.msra.mxu0 0.0
    %2317 = vmatprep.subr.mxu0 0.0
    %2318 = vmatpush1.msra.mxu0 0.0
    %2319 = vmatprep.subr.mxu0 0.0
    %2320 = vmatpush1.msra.mxu0 0.0
    %2321 = vmatprep.subr.mxu0 0.0
    %2322 = vmatpush1.msra.mxu0 0.0
    %2323 = vmatprep.subr.mxu0 0.0
    %2324 = vmatpush1.msra.mxu0 0.0
    %2325 = vmatprep.subr.mxu0 0.0
    %2326 = vmatpush1.msra.mxu0 0.0
    %2327 = vmatprep.mubr.f32.mxu0 0.0
    %2328 = vmatmul.mubr.f32.gmra.mrb[0].mxu0 %v2261
    %v2329 = vpop.f32.mrb[0].mxu0
    %v2330 = vadd.f32 %v2257, %v2329
    %v2331 = vpop.f32.mrb[0].mxu0
    %2332 = vdwg.mxu0
    %vm2333 = vcmask 74752
    %v2334 = vsel %vm2333, %v2330, -inf
    %2335 = vmax.xlane.f32.xlu0 %v2334
    %v2336 = vpop.xlane.xlu0 %2335
    %v2337 = vsub.f32 %v2330, %v2336
    %v2338 = vmul.f32 %v2337, 1.442695
    %v2339 = vpow.pop %v2338
    %v2340 = vsel %vm2333, %v2339, 0.0
    %2341 = vadd.xlane.f32.xlu0 %v2340
    %v2342 = vpop.xlane.xlu0 %2341
    %v2343 = vrcp.pop %v2342
    %v2344 = vmul.f32 %v2339, %v2343
    %2345 = vst.msk [vmem:[#allocation2] sm:$0x3] %vm2333, %v2344
    // Predicated region
    $region22: #{my_cnn_forward.3} parent=1 // pred_check
      _
    $region23: #{my_cnn_forward.3} parent=1 // pred_check_branch
      %2347 = sbr.rel (0) target = $region25
    $region24: #{my_cnn_forward.3} parent=1 // pred_region
      %s2349 = ssub.s32 32, 32
      %2350 = vsyncadd [#allocation3], %s2349
      %s2352 = sshll.u32 [#allocation2], 4
      %s2353 = int_to_ptr.vmem [resolvable:$true] %s2352
      %2355 = dma.vmem_to_hbm [thread:$0]  %s2353, 32, %s5, [#allocation3]
    $region25: #{my_cnn_forward.3} parent=1 // pred_fallthru
      _
    // Predicated region
    $region26: #{my_cnn_forward.3} parent=1 // pred_check
      _
    $region27: #{my_cnn_forward.3} parent=1 // pred_check_branch
      %2357 = sbr.rel (0) target = $region29
    $region28: #{my_cnn_forward.3} parent=1 // pred_region
      %2358 = dma.done [#allocation3], 32
    $region29: #{my_cnn_forward.3} parent=1 // pred_fallthru
      _
    %2359 = vsyncpa [#allocation3], 1

</llo_original>
